<compile_context>
chip_gen: v7x
topology: tpu7x:2x2x1
jax: 0.10.0
libtpu: 0.0.40
codegen_flags: <defaults>
</compile_context>

<pallas_src>
import functools

import jax
import jax.numpy as jnp
from jax.experimental import pallas as pl
from jax.experimental.pallas import tpu as pltpu


# ------------------------------------------------------------------ small helpers

def _round_up(n, m):
    return ((n + m - 1) // m) * m


def _ln(x, g, b, eps=1e-5):
    mean = jnp.mean(x, axis=-1, keepdims=True)
    var = jnp.mean((x - mean) ** 2, axis=-1, keepdims=True)
    return (x - mean) * jax.lax.rsqrt(var + eps) * g + b


def _row_tiled_call(kernel, x, params, out_dim, *, tm_max=256):
    """Run `kernel` over row tiles of x:(M,K).  `params` are resident full blocks.
    Rows are padded to a sublane-aligned multiple of the tile so every block is full."""
    M, K = x.shape
    Mp = _round_up(M, 8)
    tm = min(Mp, tm_max)
    Mp = _round_up(Mp, tm)
    if Mp != M:
        x = jnp.pad(x, ((0, Mp - M), (0, 0)))
    in_specs = [pl.BlockSpec((tm, K), lambda i: (i, 0))]
    args = [x]
    for p in params:
        p2 = p.reshape(1, -1) if p.ndim == 1 else p
        nd = p2.ndim
        in_specs.append(pl.BlockSpec(p2.shape, lambda i, nd=nd: (0,) * nd))
        args.append(p2)
    out = pl.pallas_call(
        kernel,
        grid=(Mp // tm,),
        in_specs=in_specs,
        out_specs=pl.BlockSpec((tm, out_dim), lambda i: (i, 0)),
        out_shape=jax.ShapeDtypeStruct((Mp, out_dim), jnp.float32),
        compiler_params=pltpu.CompilerParams(dimension_semantics=("parallel",)),
    )(*args)
    return out[:M] if Mp != M else out


# ------------------------------------------------------------------ row-wise Pallas kernels

def _linear_kernel(x_ref, w_ref, b_ref, o_ref, *, act):
    y = jnp.dot(x_ref[...], w_ref[...], preferred_element_type=jnp.float32) + b_ref[...]
    if act == "relu":
        y = jnp.maximum(y, 0.0)
    o_ref[...] = y


def pallas_linear(x, w, b, act="none"):
    """y = act(x @ w + b), row-tiled over M."""
    return _row_tiled_call(functools.partial(_linear_kernel, act=act), x, [w, b], w.shape[1])


def _ctc_kernel(x_ref, w_ref, b_ref, o_ref):
    logits = jnp.dot(x_ref[...], w_ref[...], preferred_element_type=jnp.float32) + b_ref[...]
    z = logits - jnp.max(logits, axis=-1, keepdims=True)
    o_ref[...] = z - jnp.log(jnp.sum(jnp.exp(z), axis=-1, keepdims=True))   # exact log-softmax


def pallas_ctc(x, w, b):
    return _row_tiled_call(_ctc_kernel, x, [w, b], w.shape[1])


def _ffn_res_kernel(x_ref, g_ref, b_ref, w1_ref, b1_ref, w2_ref, b2_ref, o_ref):
    x = x_ref[...]
    h = _ln(x, g_ref[...], b_ref[...])
    h = jnp.dot(h, w1_ref[...], preferred_element_type=jnp.float32) + b1_ref[...]
    h = h * jax.nn.sigmoid(h)                                        # SiLU
    y = jnp.dot(h, w2_ref[...], preferred_element_type=jnp.float32) + b2_ref[...]
    o_ref[...] = x + 0.5 * y                                         # half-step residual fused


def _ffn_res_final_ln_kernel(x_ref, g_ref, b_ref, w1_ref, b1_ref, w2_ref, b2_ref,
                             fg_ref, fb_ref, o_ref):
    x = x_ref[...]
    h = _ln(x, g_ref[...], b_ref[...])
    h = jnp.dot(h, w1_ref[...], preferred_element_type=jnp.float32) + b1_ref[...]
    h = h * jax.nn.sigmoid(h)
    y = x + 0.5 * (jnp.dot(h, w2_ref[...], preferred_element_type=jnp.float32) + b2_ref[...])
    o_ref[...] = _ln(y, fg_ref[...], fb_ref[...])                    # final block LayerNorm fused


def pallas_ffn_res(x2, pf):
    return _row_tiled_call(_ffn_res_kernel, x2,
                           [pf["ln_g"], pf["ln_b"], pf["w1"], pf["b1"], pf["w2"], pf["b2"]],
                           x2.shape[1])


def pallas_ffn_res_final_ln(x2, pf, fg, fb):
    return _row_tiled_call(_ffn_res_final_ln_kernel, x2,
                           [pf["ln_g"], pf["ln_b"], pf["w1"], pf["b1"], pf["w2"], pf["b2"], fg, fb],
                           x2.shape[1])


# ------------------------------------------------------------------ fused MHSA kernel (per batch)

def _mhsa_res_kernel(x_ref, g_ref, b_ref, wqkv_ref, bqkv_ref, wo_ref, bo_ref, m_ref, o_ref,
                     *, num_heads, scale):
    x = x_ref[0]                                               # (T, D)
    D = x.shape[-1]
    dh = D // num_heads
    h = _ln(x, g_ref[...], b_ref[...])
    qkv = jnp.dot(h, wqkv_ref[...], preferred_element_type=jnp.float32) + bqkv_ref[...]  # (T, 3D)
    m = m_ref[0]                                               # (1, T) additive key-padding mask
    wo = wo_ref[...]                                           # (D, D)
    acc = jnp.zeros((x.shape[0], D), jnp.float32)
    for hh in range(num_heads):                                # static unroll over heads
        q = qkv[:, hh * dh:(hh + 1) * dh]
        k = qkv[:, D + hh * dh:D + (hh + 1) * dh]
        v = qkv[:, 2 * D + hh * dh:2 * D + (hh + 1) * dh]
        s = jnp.einsum("td,sd->ts", q, k, preferred_element_type=jnp.float32) * scale + m
        s = s - jnp.max(s, axis=-1, keepdims=True)
        e = jnp.exp(s)
        p = e * pl.reciprocal(jnp.sum(e, axis=-1, keepdims=True), approx=True)
        o_h = jnp.dot(p, v, preferred_element_type=jnp.float32)               # (T, dh)
        acc = acc + jnp.dot(o_h, wo[hh * dh:(hh + 1) * dh, :],
                            preferred_element_type=jnp.float32)               # out-proj per head
    o_ref[0] = x + acc + bo_ref[...]                           # residual fused


def pallas_mhsa_res(x, mask_add, pa, num_heads):
    B, T, D = x.shape
    scale = 1.0 / ((D // num_heads) ** 0.5)
    return pl.pallas_call(
        functools.partial(_mhsa_res_kernel, num_heads=num_heads, scale=scale),
        grid=(B,),
        in_specs=[
            pl.BlockSpec((1, T, D), lambda b: (b, 0, 0)),
            pl.BlockSpec((1, D), lambda b: (0, 0)),
            pl.BlockSpec((1, D), lambda b: (0, 0)),
            pl.BlockSpec((D, 3 * D), lambda b: (0, 0)),
            pl.BlockSpec((1, 3 * D), lambda b: (0, 0)),
            pl.BlockSpec((D, D), lambda b: (0, 0)),
            pl.BlockSpec((1, D), lambda b: (0, 0)),
            pl.BlockSpec((1, 1, T), lambda b: (b, 0, 0)),
        ],
        out_specs=pl.BlockSpec((1, T, D), lambda b: (b, 0, 0)),
        out_shape=jax.ShapeDtypeStruct((B, T, D), jnp.float32),
        compiler_params=pltpu.CompilerParams(dimension_semantics=("parallel",)),
    )(x, pa["ln_g"].reshape(1, D), pa["ln_b"].reshape(1, D),
      pa["wqkv"], pa["bqkv"].reshape(1, 3 * D),
      pa["wo"], pa["bo"].reshape(1, D), mask_add)


# ------------------------------------------------------------------ fused conv module kernel (per batch)

def _conv_module_res_kernel(x_ref, g_ref, b_ref, pw1_w_ref, pw1_b_ref, dw_w_ref, dw_b_ref,
                            bn_s_ref, bn_b_ref, pw2_w_ref, pw2_b_ref, o_ref, pad_ref, *, K):
    x = x_ref[0]                                               # (T, D)
    T = x.shape[0]
    h = _ln(x, g_ref[...], b_ref[...])
    g = jnp.dot(h, pw1_w_ref[...], preferred_element_type=jnp.float32) + pw1_b_ref[...]   # (T, 2Ch)
    Ch = g.shape[-1] // 2
    h = g[:, :Ch] * jax.nn.sigmoid(g[:, Ch:])                  # GLU
    pad_l = (K - 1) // 2
    pad_ref[...] = jnp.zeros_like(pad_ref)                     # zero-padded time buffer in VMEM
    pad_ref[pad_l:pad_l + T, :] = h
    w = dw_w_ref[...]                                          # (K, Ch)
    acc = jnp.zeros((T, Ch), jnp.float32)
    for k in range(K):                                         # static unroll over kernel taps
        acc = acc + pad_ref[k:k + T, :] * w[k:k + 1, :]
    y = acc + dw_b_ref[...]
    y = y * bn_s_ref[...] + bn_b_ref[...]                      # eval-mode BatchNorm (affine fold)
    y = y * jax.nn.sigmoid(y)                                  # SiLU
    y = jnp.dot(y, pw2_w_ref[...], preferred_element_type=jnp.float32) + pw2_b_ref[...]
    o_ref[0] = x + y                                           # residual fused


def pallas_conv_module_res(x, pc):
    B, T, D = x.shape
    Ch = pc["pw2_w"].shape[0]
    K = pc["dw_w"].shape[0]
    return pl.pallas_call(
        functools.partial(_conv_module_res_kernel, K=K),
        grid=(B,),
        in_specs=[
            pl.BlockSpec((1, T, D), lambda b: (b, 0, 0)),
            pl.BlockSpec((1, D), lambda b: (0, 0)),
            pl.BlockSpec((1, D), lambda b: (0, 0)),
            pl.BlockSpec((D, 2 * Ch), lambda b: (0, 0)),
            pl.BlockSpec((1, 2 * Ch), lambda b: (0, 0)),
            pl.BlockSpec((K, Ch), lambda b: (0, 0)),
            pl.BlockSpec((1, Ch), lambda b: (0, 0)),
            pl.BlockSpec((1, Ch), lambda b: (0, 0)),
            pl.BlockSpec((1, Ch), lambda b: (0, 0)),
            pl.BlockSpec((Ch, D), lambda b: (0, 0)),
            pl.BlockSpec((1, D), lambda b: (0, 0)),
        ],
        out_specs=pl.BlockSpec((1, T, D), lambda b: (b, 0, 0)),
        out_shape=jax.ShapeDtypeStruct((B, T, D), jnp.float32),
        scratch_shapes=[pltpu.VMEM((T + K - 1, Ch), jnp.float32)],
        compiler_params=pltpu.CompilerParams(dimension_semantics=("parallel",)),
    )(x, pc["ln_g"].reshape(1, D), pc["ln_b"].reshape(1, D),
      pc["pw1_w"], pc["pw1_b"].reshape(1, 2 * Ch),
      pc["dw_w"], pc["dw_b"].reshape(1, Ch),
      pc["bn_scale"].reshape(1, Ch), pc["bn_shift"].reshape(1, Ch),
      pc["pw2_w"], pc["pw2_b"].reshape(1, D))


# ------------------------------------------------------------------ fused RNN-T joint kernel (per batch)

def _joint_kernel(enc_ref, pred_ref, ew_ref, eb_ref, pw_ref, pb_ref, ow_ref, ob_ref, o_ref):
    enc = enc_ref[0]                                   # (T, D)
    pred = pred_ref[0]                                 # (U, P)
    e = jnp.dot(enc, ew_ref[...], preferred_element_type=jnp.float32) + eb_ref[...]    # (T, J)
    p = jnp.dot(pred, pw_ref[...], preferred_element_type=jnp.float32) + pb_ref[...]   # (U, J)
    h = jnp.tanh(e[:, None, :] + p[None, :, :])        # (T, U, J)
    T, U, J = h.shape
    y = jnp.dot(h.reshape(T * U, J), ow_ref[...], preferred_element_type=jnp.float32) + ob_ref[...]
    o_ref[0] = y.reshape(T, U, -1)


def pallas_joint(enc, pred, pj):
    """enc-proj + pred-proj + tanh combine + output matmul fused; grid over batch."""
    B, T, D = enc.shape
    U, P = pred.shape[1], pred.shape[2]
    J = pj["enc_w"].shape[1]
    V = pj["out_w"].shape[1]
    # TODO(synk): tile T (and U) for production sizes so the (T,U,J)/(T,U,V) blocks fit v7x VMEM.
    return pl.pallas_call(
        _joint_kernel,
        grid=(B,),
        in_specs=[
            pl.BlockSpec((1, T, D), lambda b: (b, 0, 0)),
            pl.BlockSpec((1, U, P), lambda b: (b, 0, 0)),
            pl.BlockSpec((D, J), lambda b: (0, 0)),
            pl.BlockSpec((1, J), lambda b: (0, 0)),
            pl.BlockSpec((P, J), lambda b: (0, 0)),
            pl.BlockSpec((1, J), lambda b: (0, 0)),
            pl.BlockSpec((J, V), lambda b: (0, 0)),
            pl.BlockSpec((1, V), lambda b: (0, 0)),
        ],
        out_specs=pl.BlockSpec((1, T, U, V), lambda b: (b, 0, 0, 0)),
        out_shape=jax.ShapeDtypeStruct((B, T, U, V), jnp.float32),
        compiler_params=pltpu.CompilerParams(dimension_semantics=("parallel",)),
    )(enc, pred, pj["enc_w"], pj["enc_b"].reshape(1, J),
      pj["pred_w"], pj["pred_b"].reshape(1, J),
      pj["out_w"], pj["out_b"].reshape(1, V))


# ------------------------------------------------------------------ glue (plain JAX)

def extract_patches(x, k, s):
    """im2col for a 2-D valid conv.  x: (B, H, W, C) -> (B, Ho, Wo, k*k*C)."""
    B, H, W, C = x.shape
    Ho = (H - k) // s + 1
    Wo = (W - k) // s + 1
    cols = []
    for di in range(k):
        for dj in range(k):
            cols.append(x[:, di:di + s * (Ho - 1) + 1:s, dj:dj + s * (Wo - 1) + 1:s, :])
    return jnp.concatenate(cols, axis=-1), Ho, Wo


def conformer_block(p, x, mask_add, cfg):
    B, T, D = x.shape
    x = pallas_ffn_res(x.reshape(B * T, D), p["ffn1"]).reshape(B, T, D)          # FFN1 + 0.5*res
    x = pallas_mhsa_res(x, mask_add, p["attn"], cfg["num_heads"])                # LN+QKV+attn+proj+res
    x = pallas_conv_module_res(x, p["conv"])                                     # LN+GLU+dwconv+BN+SiLU+pw+res
    x = pallas_ffn_res_final_ln(x.reshape(B * T, D), p["ffn2"],
                                p["final_ln_g"], p["final_ln_b"]).reshape(B, T, D)
    return x


def encoder_forward(p, x, lengths, cfg):
    B, T, F = x.shape
    # Conv2d subsampling (NCHW (B,1,T,F) in PyTorch -> NHWC + im2col + Pallas matmul here)
    x4 = x[..., None]
    pat1, T1, F1 = extract_patches(x4, cfg["sub_k1"], cfg["sub_s1"])
    h1 = pallas_linear(pat1.reshape(B * T1 * F1, -1), p["sub"]["conv1_w"], p["sub"]["conv1_b"],
                       act="relu").reshape(B, T1, F1, -1)
    pat2, T2, F2 = extract_patches(h1, cfg["sub_k2"], cfg["sub_s2"])
    h2 = pallas_linear(pat2.reshape(B * T2 * F2, -1), p["sub"]["conv2_w"], p["sub"]["conv2_b"],
                       act="relu").reshape(B, T2, F2, -1)
    # (B, T2, F2, C) -> (B, T2, C, F2) -> (B, T2, C*F2)   (matches PyTorch NCHW flatten order)
    h2 = jnp.transpose(h2, (0, 1, 3, 2)).reshape(B, T2, -1)
    enc = pallas_linear(h2.reshape(B * T2, -1), p["sub"]["proj_w"], p["sub"]["proj_b"]).reshape(B, T2, -1)

    # subsampled lengths
    l1 = (lengths - cfg["sub_k1"]) // cfg["sub_s1"] + 1
    l2 = (l1 - cfg["sub_k2"]) // cfg["sub_s2"] + 1

    # key-padding additive mask for self-attention
    mask_add = jnp.where(jnp.arange(T2)[None, :] < l2[:, None], 0.0, -1e9).astype(jnp.float32)
    mask_add = mask_add.reshape(B, 1, T2)

    for blk in p["blocks"]:
        enc = conformer_block(blk, enc, mask_add, cfg)
    return enc, l2


def lstm_layer(x, lp):
    B, T, E = x.shape
    P4 = lp["w_ih"].shape[1]
    P = P4 // 4
    # input projection for all timesteps at once (row-tiled Pallas matmul)
    gx = pallas_linear(x.reshape(B * T, E), lp["w_ih"], lp["b"]).reshape(B, T, P4)
    gx = jnp.transpose(gx, (1, 0, 2))                   # (T, B, 4P)
    w_hh = lp["w_hh"]

    # TODO(synk): the per-step recurrent matmul is inherently sequential; it stays in plain JAX scan.
    def step(carry, g):
        h, c = carry
        gates = g + h @ w_hh
        i, f, gg, o = jnp.split(gates, 4, axis=-1)
        i, f, o = jax.nn.sigmoid(i), jax.nn.sigmoid(f), jax.nn.sigmoid(o)
        gg = jnp.tanh(gg)
        c = f * c + i * gg
        h = o * jnp.tanh(c)
        return (h, c), h

    h0 = jnp.zeros((B, P), jnp.float32)
    c0 = jnp.zeros((B, P), jnp.float32)
    _, hs = jax.lax.scan(step, (h0, c0), gx)
    return jnp.transpose(hs, (1, 0, 2))                 # (B, T, P)


def predictor_forward(p, tokens, lengths, cfg):
    B, U = tokens.shape
    blank_col = jnp.full((B, 1), cfg["blank"], dtype=tokens.dtype)
    tok = jnp.concatenate([blank_col, tokens], axis=1)  # prepend blank -> (B, U+1)
    x = p["emb"][tok]                                   # embedding gather (glue)
    for layer in p["lstm"]:
        x = lstm_layer(x, layer)
    return x                                            # (B, U+1, pred_hidden)


def model_forward(params, enc_in, pred_in, enc_len, pred_len, cfg):
    enc_out, sub_len = encoder_forward(params["encoder"], enc_in, enc_len, cfg)
    pred_out = predictor_forward(params["predictor"], pred_in, pred_len, cfg)
    joint_out = pallas_joint(enc_out, pred_out, params["joint"])
    B, T, D = enc_out.shape
    ctc_logp = pallas_ctc(enc_out.reshape(B * T, D), params["ctc_w"], params["ctc_b"]).reshape(B, T, -1)
    return joint_out, ctc_logp, sub_len


# ------------------------------------------------------------------ parameter init

class KeyGen:
    def __init__(self, key):
        self.key = key

    def __call__(self):
        self.key, sub = jax.random.split(self.key)
        return sub


def init_params(key, cfg):
    kg = KeyGen(key)

    def w(shape, scale=0.1):
        return (scale * jax.random.normal(kg(), shape)).astype(jnp.float32)

    def b(shape):
        return (0.01 * jax.random.normal(kg(), shape)).astype(jnp.float32)

    D, F = cfg["d_model"], cfg["input_size"]
    ffh, Ch, K = cfg["ff_hidden"], cfg["conv_hidden"], cfg["conv_kernel"]
    k1, s1, k2, s2 = cfg["sub_k1"], cfg["sub_s1"], cfg["sub_k2"], cfg["sub_s2"]
    F1 = (F - k1) // s1 + 1
    F2 = (F1 - k2) // s2 + 1
    C = D                                               # subsampling conv channels

    sub = dict(
        conv1_w=w((k1 * k1 * 1, C)), conv1_b=b((C,)),
        conv2_w=w((k2 * k2 * C, C)), conv2_b=b((C,)),
        proj_w=w((C * F2, D)), proj_b=b((D,)),
    )

    def ffn_p():
        return dict(ln_g=jnp.ones((D,), jnp.float32), ln_b=jnp.zeros((D,), jnp.float32),
                    w1=w((D, ffh)), b1=b((ffh,)), w2=w((ffh, D)), b2=b((D,)))

    blocks = []
    for _ in range(cfg["num_blocks"]):
        attn = dict(ln_g=jnp.ones((D,), jnp.float32), ln_b=jnp.zeros((D,), jnp.float32),
                    wqkv=w((D, 3 * D)), bqkv=b((3 * D,)),     # fused Q,K,V projection
                    wo=w((D, D)), bo=b((D,)))
        conv = dict(ln_g=jnp.ones((D,), jnp.float32), ln_b=jnp.zeros((D,), jnp.float32),
                    pw1_w=w((D, 2 * Ch)), pw1_b=b((2 * Ch,)),
                    dw_w=w((K, Ch)), dw_b=b((Ch,)),
                    bn_scale=jnp.full((Ch,), 1.0 / jnp.sqrt(1.0 + 1e-5), jnp.float32),
                    bn_shift=jnp.zeros((Ch,), jnp.float32),
                    pw2_w=w((Ch, D)), pw2_b=b((D,)))
        blocks.append(dict(ffn1=ffn_p(), ffn2=ffn_p(), attn=attn, conv=conv,
                           final_ln_g=jnp.ones((D,), jnp.float32),
                           final_ln_b=jnp.zeros((D,), jnp.float32)))

    lstm = []
    in_dim = cfg["emb"]
    for _ in range(cfg["pred_layers"]):
        P = cfg["pred_hidden"]
        lstm.append(dict(w_ih=w((in_dim, 4 * P)), w_hh=w((P, 4 * P)), b=b((4 * P,))))
        in_dim = P

    params = dict(
        encoder=dict(sub=sub, blocks=blocks),
        predictor=dict(emb=w((cfg["vocab"], cfg["emb"])), lstm=lstm),
        joint=dict(enc_w=w((D, cfg["joint_hidden"])), enc_b=b((cfg["joint_hidden"],)),
                   pred_w=w((cfg["pred_hidden"], cfg["joint_hidden"])), pred_b=b((cfg["joint_hidden"],)),
                   out_w=w((cfg["joint_hidden"], cfg["vocab"])), out_b=b((cfg["vocab"],))),
        ctc_w=w((D, cfg["vocab"])), ctc_b=b((cfg["vocab"],)),
    )
    return params


# ------------------------------------------------------------------ main

if __name__ == "__main__":
    cfg = dict(
        input_size=16,            # encoder_input_size
        d_model=16,               # encoder_subsampled_input_size
        num_blocks=2,             # encoder_num_conformer_blocks
        ff_hidden=32,             # encoder_ff_hidden_size
        conv_hidden=16,           # encoder_conv_hidden_size
        conv_kernel=3,            # encoder_conv_kernel_size
        num_heads=4,              # encoder_mha_num_heads
        sub_k1=3, sub_s1=2,       # subsampling conv 1
        sub_k2=3, sub_s2=2,       # subsampling conv 2
        vocab=11,                 # vocab_size
        emb=8,                    # embedding_size
        pred_hidden=16,           # predictor_hidden_size
        pred_layers=1,            # predictor_num_layers
        joint_hidden=16,          # jointnet_hidden_size
        blank=0,                  # blank_idx
    )

    key = jax.random.PRNGKey(0)
    pkey, k_enc, k_tok = jax.random.split(key, 3)
    params = init_params(pkey, cfg)

    B, T, F = 2, 16, cfg["input_size"]
    U = 6
    enc_in = jax.random.normal(k_enc, (B, T, F), dtype=jnp.float32)
    pred_in = jax.random.randint(k_tok, (B, U), 1, cfg["vocab"], dtype=jnp.int32)
    enc_len = jnp.array([16, 12], dtype=jnp.int32)
    pred_len = jnp.array([6, 4], dtype=jnp.int32)

    fwd = jax.jit(functools.partial(model_forward, cfg=cfg))
    joint_out, ctc_log_probs, sub_len = fwd(params, enc_in, pred_in, enc_len, pred_len)
    jax.block_until_ready((joint_out, ctc_log_probs, sub_len))

    assert joint_out.shape == (B, 3, U + 1, cfg["vocab"])
    assert ctc_log_probs.shape == (B, 3, cfg["vocab"])
    assert sub_len.shape == (B,)
    print("KERNEL_OK")
</pallas_src>

<mosaic_0001>
module attributes {stable_mosaic.version = 11 : i64} {
  func.func @_linear_kernel(%arg0: i32, %arg1: memref<104x9xf32, #tpu.memory_space<vmem>>, %arg2: memref<9x16xf32, #tpu.memory_space<vmem>>, %arg3: memref<1x16xf32, #tpu.memory_space<vmem>>, %arg4: memref<104x16xf32, #tpu.memory_space<vmem>>) attributes {dimension_semantics = [#tpu.dimension_semantics<parallel>], iteration_bounds = array<i64: 1>, scalar_prefetch = 0 : i64, scratch_operands = 0 : i64, tpu.core_type = #tpu.core_type<tc>, window_params = [{transform_indices = @transform_0, window_bounds = array<i64: 104, 9>}, {pipeline_mode = #tpu.pipeline_mode<synchronous>, transform_indices = @transform_1, window_bounds = array<i64: 9, 16>}, {pipeline_mode = #tpu.pipeline_mode<synchronous>, transform_indices = @transform_2, window_bounds = array<i64: 1, 16>}, {transform_indices = @transform_3, window_bounds = array<i64: 104, 16>}]} {
    %c0 = arith.constant 0 : index
    %c0_0 = arith.constant 0 : index
    %0 = vector.load %arg1[%c0, %c0_0] : memref<104x9xf32, #tpu.memory_space<vmem>>, vector<104x9xf32>
    %c0_1 = arith.constant 0 : index
    %c0_2 = arith.constant 0 : index
    %1 = vector.load %arg2[%c0_1, %c0_2] : memref<9x16xf32, #tpu.memory_space<vmem>>, vector<9x16xf32>
    %cst = arith.constant dense<0.000000e+00> : vector<104x16xf32>
    %2 = tpu.matmul %0, %1, %cst {dimension_numbers = #tpu.dot_dimension_numbers<[1], [0], [0], [1], [0, 0, 1, 1], [], []>} : vector<104x9xf32>, vector<9x16xf32>, vector<104x16xf32> -> vector<104x16xf32>
    %c0_3 = arith.constant 0 : index
    %c0_4 = arith.constant 0 : index
    %3 = vector.load %arg3[%c0_3, %c0_4] : memref<1x16xf32, #tpu.memory_space<vmem>>, vector<1x16xf32>
    %4 = vector.broadcast %3 : vector<1x16xf32> to vector<104x16xf32>
    %5 = arith.addf %2, %4 : vector<104x16xf32>
    %cst_5 = arith.constant 0.000000e+00 : f32
    %6 = vector.broadcast %cst_5 : f32 to vector<104x16xf32>
    %7 = arith.maximumf %5, %6 : vector<104x16xf32>
    %c0_6 = arith.constant 0 : index
    %c0_7 = arith.constant 0 : index
    %8 = vector.load %arg4[%c0_6, %c0_7] : memref<104x16xf32, #tpu.memory_space<vmem>>, vector<104x16xf32>
    tpu.vector_store %arg4[%c0_6, %c0_7], %7 {strides = array<i32>} : memref<104x16xf32, #tpu.memory_space<vmem>>, vector<104x16xf32>,
    return
  }
  func.func @transform_0(%arg0: i32) -> (i32, i32) {
    %c0_i32 = arith.constant 0 : i32
    %c0_i32_0 = arith.constant 0 : i32
    return %arg0, %c0_i32 : i32, i32
  }
  func.func @transform_1(%arg0: i32) -> (i32, i32) {
    %c0_i32 = arith.constant 0 : i32
    %c0_i32_0 = arith.constant 0 : i32
    %c0_i32_1 = arith.constant 0 : i32
    return %c0_i32, %c0_i32_0 : i32, i32
  }
  func.func @transform_2(%arg0: i32) -> (i32, i32) {
    %c0_i32 = arith.constant 0 : i32
    %c0_i32_0 = arith.constant 0 : i32
    %c0_i32_1 = arith.constant 0 : i32
    return %c0_i32, %c0_i32_0 : i32, i32
  }
  func.func @transform_3(%arg0: i32) -> (i32, i32) {
    %c0_i32 = arith.constant 0 : i32
    %c0_i32_0 = arith.constant 0 : i32
    return %arg0, %c0_i32 : i32, i32
  }
}

module attributes {stable_mosaic.version = 11 : i64} {
  func.func @_linear_kernel(%arg0: i32, %arg1: memref<24x144xf32, #tpu.memory_space<vmem>>, %arg2: memref<144x16xf32, #tpu.memory_space<vmem>>, %arg3: memref<1x16xf32, #tpu.memory_space<vmem>>, %arg4: memref<24x16xf32, #tpu.memory_space<vmem>>) attributes {dimension_semantics = [#tpu.dimension_semantics<parallel>], iteration_bounds = array<i64: 1>, scalar_prefetch = 0 : i64, scratch_operands = 0 : i64, tpu.core_type = #tpu.core_type<tc>, window_params = [{transform_indices = @transform_0, window_bounds = array<i64: 24, 144>}, {pipeline_mode = #tpu.pipeline_mode<synchronous>, transform_indices = @transform_1, window_bounds = array<i64: 144, 16>}, {pipeline_mode = #tpu.pipeline_mode<synchronous>, transform_indices = @transform_2, window_bounds = array<i64: 1, 16>}, {transform_indices = @transform_3, window_bounds = array<i64: 24, 16>}]} {
    %c0 = arith.constant 0 : index
    %c0_0 = arith.constant 0 : index
    %0 = vector.load %arg1[%c0, %c0_0] : memref<24x144xf32, #tpu.memory_space<vmem>>, vector<24x144xf32>
    %c0_1 = arith.constant 0 : index
    %c0_2 = arith.constant 0 : index
    %1 = vector.load %arg2[%c0_1, %c0_2] : memref<144x16xf32, #tpu.memory_space<vmem>>, vector<144x16xf32>
    %cst = arith.constant dense<0.000000e+00> : vector<24x16xf32>
    %2 = tpu.matmul %0, %1, %cst {dimension_numbers = #tpu.dot_dimension_numbers<[1], [0], [0], [1], [0, 0, 1, 1], [], []>} : vector<24x144xf32>, vector<144x16xf32>, vector<24x16xf32> -> vector<24x16xf32>
    %c0_3 = arith.constant 0 : index
    %c0_4 = arith.constant 0 : index
    %3 = vector.load %arg3[%c0_3, %c0_4] : memref<1x16xf32, #tpu.memory_space<vmem>>, vector<1x16xf32>
    %4 = vector.broadcast %3 : vector<1x16xf32> to vector<24x16xf32>
    %5 = arith.addf %2, %4 : vector<24x16xf32>
    %cst_5 = arith.constant 0.000000e+00 : f32
    %6 = vector.broadcast %cst_5 : f32 to vector<24x16xf32>
    %7 = arith.maximumf %5, %6 : vector<24x16xf32>
    %c0_6 = arith.constant 0 : index
    %c0_7 = arith.constant 0 : index
    %8 = vector.load %arg4[%c0_6, %c0_7] : memref<24x16xf32, #tpu.memory_space<vmem>>, vector<24x16xf32>
    tpu.vector_store %arg4[%c0_6, %c0_7], %7 {strides = array<i32>} : memref<24x16xf32, #tpu.memory_space<vmem>>, vector<24x16xf32>,
    return
  }
  func.func @transform_0(%arg0: i32) -> (i32, i32) {
    %c0_i32 = arith.constant 0 : i32
    %c0_i32_0 = arith.constant 0 : i32
    return %arg0, %c0_i32 : i32, i32
  }
  func.func @transform_1(%arg0: i32) -> (i32, i32) {
    %c0_i32 = arith.constant 0 : i32
    %c0_i32_0 = arith.constant 0 : i32
    %c0_i32_1 = arith.constant 0 : i32
    return %c0_i32, %c0_i32_0 : i32, i32
  }
  func.func @transform_2(%arg0: i32) -> (i32, i32) {
    %c0_i32 = arith.constant 0 : i32
    %c0_i32_0 = arith.constant 0 : i32
    %c0_i32_1 = arith.constant 0 : i32
    return %c0_i32, %c0_i32_0 : i32, i32
  }
  func.func @transform_3(%arg0: i32) -> (i32, i32) {
    %c0_i32 = arith.constant 0 : i32
    %c0_i32_0 = arith.constant 0 : i32
    return %arg0, %c0_i32 : i32, i32
  }
}

module attributes {stable_mosaic.version = 11 : i64} {
  func.func @_linear_kernel(%arg0: i32, %arg1: memref<8x48xf32, #tpu.memory_space<vmem>>, %arg2: memref<48x16xf32, #tpu.memory_space<vmem>>, %arg3: memref<1x16xf32, #tpu.memory_space<vmem>>, %arg4: memref<8x16xf32, #tpu.memory_space<vmem>>) attributes {dimension_semantics = [#tpu.dimension_semantics<parallel>], iteration_bounds = array<i64: 1>, scalar_prefetch = 0 : i64, scratch_operands = 0 : i64, tpu.core_type = #tpu.core_type<tc>, window_params = [{transform_indices = @transform_0, window_bounds = array<i64: 8, 48>}, {pipeline_mode = #tpu.pipeline_mode<synchronous>, transform_indices = @transform_1, window_bounds = array<i64: 48, 16>}, {pipeline_mode = #tpu.pipeline_mode<synchronous>, transform_indices = @transform_2, window_bounds = array<i64: 1, 16>}, {transform_indices = @transform_3, window_bounds = array<i64: 8, 16>}]} {
    %c0 = arith.constant 0 : index
    %c0_0 = arith.constant 0 : index
    %0 = vector.load %arg1[%c0, %c0_0] : memref<8x48xf32, #tpu.memory_space<vmem>>, vector<8x48xf32>
    %c0_1 = arith.constant 0 : index
    %c0_2 = arith.constant 0 : index
    %1 = vector.load %arg2[%c0_1, %c0_2] : memref<48x16xf32, #tpu.memory_space<vmem>>, vector<48x16xf32>
    %cst = arith.constant dense<0.000000e+00> : vector<8x16xf32>
    %2 = tpu.matmul %0, %1, %cst {dimension_numbers = #tpu.dot_dimension_numbers<[1], [0], [0], [1], [0, 0, 1, 1], [], []>} : vector<8x48xf32>, vector<48x16xf32>, vector<8x16xf32> -> vector<8x16xf32>
    %c0_3 = arith.constant 0 : index
    %c0_4 = arith.constant 0 : index
    %3 = vector.load %arg3[%c0_3, %c0_4] : memref<1x16xf32, #tpu.memory_space<vmem>>, vector<1x16xf32>
    %4 = vector.broadcast %3 : vector<1x16xf32> to vector<8x16xf32>
    %5 = arith.addf %2, %4 : vector<8x16xf32>
    %c0_5 = arith.constant 0 : index
    %c0_6 = arith.constant 0 : index
    %6 = vector.load %arg4[%c0_5, %c0_6] : memref<8x16xf32, #tpu.memory_space<vmem>>, vector<8x16xf32>
    tpu.vector_store %arg4[%c0_5, %c0_6], %5 {strides = array<i32>} : memref<8x16xf32, #tpu.memory_space<vmem>>, vector<8x16xf32>,
    return
  }
  func.func @transform_0(%arg0: i32) -> (i32, i32) {
    %c0_i32 = arith.constant 0 : i32
    %c0_i32_0 = arith.constant 0 : i32
    return %arg0, %c0_i32 : i32, i32
  }
  func.func @transform_1(%arg0: i32) -> (i32, i32) {
    %c0_i32 = arith.constant 0 : i32
    %c0_i32_0 = arith.constant 0 : i32
    %c0_i32_1 = arith.constant 0 : i32
    return %c0_i32, %c0_i32_0 : i32, i32
  }
  func.func @transform_2(%arg0: i32) -> (i32, i32) {
    %c0_i32 = arith.constant 0 : i32
    %c0_i32_0 = arith.constant 0 : i32
    %c0_i32_1 = arith.constant 0 : i32
    return %c0_i32, %c0_i32_0 : i32, i32
  }
  func.func @transform_3(%arg0: i32) -> (i32, i32) {
    %c0_i32 = arith.constant 0 : i32
    %c0_i32_0 = arith.constant 0 : i32
    return %arg0, %c0_i32 : i32, i32
  }
}

module attributes {stable_mosaic.version = 11 : i64} {
  func.func @_ffn_res_kernel(%arg0: i32, %arg1: memref<8x16xf32, #tpu.memory_space<vmem>>, %arg2: memref<1x16xf32, #tpu.memory_space<vmem>>, %arg3: memref<1x16xf32, #tpu.memory_space<vmem>>, %arg4: memref<16x32xf32, #tpu.memory_space<vmem>>, %arg5: memref<1x32xf32, #tpu.memory_space<vmem>>, %arg6: memref<32x16xf32, #tpu.memory_space<vmem>>, %arg7: memref<1x16xf32, #tpu.memory_space<vmem>>, %arg8: memref<8x16xf32, #tpu.memory_space<vmem>>) attributes {dimension_semantics = [#tpu.dimension_semantics<parallel>], iteration_bounds = array<i64: 1>, scalar_prefetch = 0 : i64, scratch_operands = 0 : i64, tpu.core_type = #tpu.core_type<tc>, window_params = [{transform_indices = @transform_0, window_bounds = array<i64: 8, 16>}, {pipeline_mode = #tpu.pipeline_mode<synchronous>, transform_indices = @transform_1, window_bounds = array<i64: 1, 16>}, {pipeline_mode = #tpu.pipeline_mode<synchronous>, transform_indices = @transform_2, window_bounds = array<i64: 1, 16>}, {pipeline_mode = #tpu.pipeline_mode<synchronous>, transform_indices = @transform_3, window_bounds = array<i64: 16, 32>}, {pipeline_mode = #tpu.pipeline_mode<synchronous>, transform_indices = @transform_4, window_bounds = array<i64: 1, 32>}, {pipeline_mode = #tpu.pipeline_mode<synchronous>, transform_indices = @transform_5, window_bounds = array<i64: 32, 16>}, {pipeline_mode = #tpu.pipeline_mode<synchronous>, transform_indices = @transform_6, window_bounds = array<i64: 1, 16>}, {transform_indices = @transform_7, window_bounds = array<i64: 8, 16>}]} {
    %c0 = arith.constant 0 : index
    %c0_0 = arith.constant 0 : index
    %0 = vector.load %arg1[%c0, %c0_0] : memref<8x16xf32, #tpu.memory_space<vmem>>, vector<8x16xf32>
    %c0_1 = arith.constant 0 : index
    %c0_2 = arith.constant 0 : index
    %1 = vector.load %arg2[%c0_1, %c0_2] : memref<1x16xf32, #tpu.memory_space<vmem>>, vector<1x16xf32>
    %c0_3 = arith.constant 0 : index
    %c0_4 = arith.constant 0 : index
    %2 = vector.load %arg3[%c0_3, %c0_4] : memref<1x16xf32, #tpu.memory_space<vmem>>, vector<1x16xf32>
    %cst = arith.constant dense<0.000000e+00> : vector<8xf32>
    %3 = vector.multi_reduction <add>, %0, %cst [1] : vector<8x16xf32> to vector<8xf32>
    %4 = vector.shape_cast %3 : vector<8xf32> to vector<8x1xf32>
    %cst_5 = arith.constant 1.600000e+01 : f32
    %5 = vector.broadcast %cst_5 : f32 to vector<8x1xf32>
    %6 = arith.divf %4, %5 : vector<8x1xf32>
    %7 = vector.broadcast %6 : vector<8x1xf32> to vector<8x16xf32>
    %8 = arith.subf %0, %7 : vector<8x16xf32>
    %9 = arith.mulf %8, %8 : vector<8x16xf32>
    %cst_6 = arith.constant dense<0.000000e+00> : vector<8xf32>
    %10 = vector.multi_reduction <add>, %9, %cst_6 [1] : vector<8x16xf32> to vector<8xf32>
    %11 = vector.shape_cast %10 : vector<8xf32> to vector<8x1xf32>
    %cst_7 = arith.constant 1.600000e+01 : f32
    %12 = vector.broadcast %cst_7 : f32 to vector<8x1xf32>
    %13 = arith.divf %11, %12 : vector<8x1xf32>
    %14 = vector.broadcast %6 : vector<8x1xf32> to vector<8x16xf32>
    %15 = arith.subf %0, %14 : vector<8x16xf32>
    %cst_8 = arith.constant 9.99999974E-6 : f32
    %16 = vector.broadcast %cst_8 : f32 to vector<8x1xf32>
    %17 = arith.addf %13, %16 : vector<8x1xf32>
    %18 = math.rsqrt %17 : vector<8x1xf32>
    %19 = vector.broadcast %18 : vector<8x1xf32> to vector<8x16xf32>
    %20 = arith.mulf %15, %19 : vector<8x16xf32>
    %21 = vector.broadcast %1 : vector<1x16xf32> to vector<8x16xf32>
    %22 = arith.mulf %20, %21 : vector<8x16xf32>
    %23 = vector.broadcast %2 : vector<1x16xf32> to vector<8x16xf32>
    %24 = arith.addf %22, %23 : vector<8x16xf32>
    %c0_9 = arith.constant 0 : index
    %c0_10 = arith.constant 0 : index
    %25 = vector.load %arg4[%c0_9, %c0_10] : memref<16x32xf32, #tpu.memory_space<vmem>>, vector<16x32xf32>
    %cst_11 = arith.constant dense<0.000000e+00> : vector<8x32xf32>
    %26 = tpu.matmul %24, %25, %cst_11 {dimension_numbers = #tpu.dot_dimension_numbers<[1], [0], [0], [1], [0, 0, 1, 1], [], []>} : vector<8x16xf32>, vector<16x32xf32>, vector<8x32xf32> -> vector<8x32xf32>
    %c0_12 = arith.constant 0 : index
    %c0_13 = arith.constant 0 : index
    %27 = vector.load %arg5[%c0_12, %c0_13] : memref<1x32xf32, #tpu.memory_space<vmem>>, vector<1x32xf32>
    %28 = vector.broadcast %27 : vector<1x32xf32> to vector<8x32xf32>
    %29 = arith.addf %26, %28 : vector<8x32xf32>
    %30 = arith.negf %29 : vector<8x32xf32>
    %31 = math.exp %30 : vector<8x32xf32>
    %cst_14 = arith.constant 1.000000e+00 : f32
    %32 = vector.broadcast %cst_14 : f32 to vector<8x32xf32>
    %33 = arith.addf %32, %31 : vector<8x32xf32>
    %34 = arith.divf %32, %33 : vector<8x32xf32>
    %35 = arith.mulf %29, %34 : vector<8x32xf32>
    %c0_15 = arith.constant 0 : index
    %c0_16 = arith.constant 0 : index
    %36 = vector.load %arg6[%c0_15, %c0_16] : memref<32x16xf32, #tpu.memory_space<vmem>>, vector<32x16xf32>
    %cst_17 = arith.constant dense<0.000000e+00> : vector<8x16xf32>
    %37 = tpu.matmul %35, %36, %cst_17 {dimension_numbers = #tpu.dot_dimension_numbers<[1], [0], [0], [1], [0, 0, 1, 1], [], []>} : vector<8x32xf32>, vector<32x16xf32>, vector<8x16xf32> -> vector<8x16xf32>
    %c0_18 = arith.constant 0 : index
    %c0_19 = arith.constant 0 : index
    %38 = vector.load %arg7[%c0_18, %c0_19] : memref<1x16xf32, #tpu.memory_space<vmem>>, vector<1x16xf32>
    %39 = vector.broadcast %38 : vector<1x16xf32> to vector<8x16xf32>
    %40 = arith.addf %37, %39 : vector<8x16xf32>
    %cst_20 = arith.constant 5.000000e-01 : f32
    %41 = vector.broadcast %cst_20 : f32 to vector<8x16xf32>
    %42 = arith.mulf %41, %40 : vector<8x16xf32>
    %43 = arith.addf %0, %42 : vector<8x16xf32>
    %c0_21 = arith.constant 0 : index
    %c0_22 = arith.constant 0 : index
    %44 = vector.load %arg8[%c0_21, %c0_22] : memref<8x16xf32, #tpu.memory_space<vmem>>, vector<8x16xf32>
    tpu.vector_store %arg8[%c0_21, %c0_22], %43 {strides = array<i32>} : memref<8x16xf32, #tpu.memory_space<vmem>>, vector<8x16xf32>,
    return
  }
  func.func @transform_0(%arg0: i32) -> (i32, i32) {
    %c0_i32 = arith.constant 0 : i32
    %c0_i32_0 = arith.constant 0 : i32
    return %arg0, %c0_i32 : i32, i32
  }
  func.func @transform_1(%arg0: i32) -> (i32, i32) {
    %c0_i32 = arith.constant 0 : i32
    %c0_i32_0 = arith.constant 0 : i32
    %c0_i32_1 = arith.constant 0 : i32
    return %c0_i32, %c0_i32_0 : i32, i32
  }
  func.func @transform_2(%arg0: i32) -> (i32, i32) {
    %c0_i32 = arith.constant 0 : i32
    %c0_i32_0 = arith.constant 0 : i32
    %c0_i32_1 = arith.constant 0 : i32
    return %c0_i32, %c0_i32_0 : i32, i32
  }
  func.func @transform_3(%arg0: i32) -> (i32, i32) {
    %c0_i32 = arith.constant 0 : i32
    %c0_i32_0 = arith.constant 0 : i32
    %c0_i32_1 = arith.constant 0 : i32
    return %c0_i32, %c0_i32_0 : i32, i32
  }
  func.func @transform_4(%arg0: i32) -> (i32, i32) {
    %c0_i32 = arith.constant 0 : i32
    %c0_i32_0 = arith.constant 0 : i32
    %c0_i32_1 = arith.constant 0 : i32
    return %c0_i32, %c0_i32_0 : i32, i32
  }
  func.func @transform_5(%arg0: i32) -> (i32, i32) {
    %c0_i32 = arith.constant 0 : i32
    %c0_i32_0 = arith.constant 0 : i32
    %c0_i32_1 = arith.constant 0 : i32
    return %c0_i32, %c0_i32_0 : i32, i32
  }
  func.func @transform_6(%arg0: i32) -> (i32, i32) {
    %c0_i32 = arith.constant 0 : i32
    %c0_i32_0 = arith.constant 0 : i32
    %c0_i32_1 = arith.constant 0 : i32
    return %c0_i32, %c0_i32_0 : i32, i32
  }
  func.func @transform_7(%arg0: i32) -> (i32, i32) {
    %c0_i32 = arith.constant 0 : i32
    %c0_i32_0 = arith.constant 0 : i32
    return %arg0, %c0_i32 : i32, i32
  }
}

module attributes {stable_mosaic.version = 11 : i64} {
  func.func @_mhsa_res_kernel(%arg0: i32, %arg1: memref<1x3x16xf32, #tpu.memory_space<vmem>>, %arg2: memref<1x16xf32, #tpu.memory_space<vmem>>, %arg3: memref<1x16xf32, #tpu.memory_space<vmem>>, %arg4: memref<16x48xf32, #tpu.memory_space<vmem>>, %arg5: memref<1x48xf32, #tpu.memory_space<vmem>>, %arg6: memref<16x16xf32, #tpu.memory_space<vmem>>, %arg7: memref<1x16xf32, #tpu.memory_space<vmem>>, %arg8: memref<1x1x3xf32, #tpu.memory_space<vmem>>, %arg9: memref<1x3x16xf32, #tpu.memory_space<vmem>>) attributes {dimension_semantics = [#tpu.dimension_semantics<parallel>], iteration_bounds = array<i64: 2>, scalar_prefetch = 0 : i64, scratch_operands = 0 : i64, tpu.core_type = #tpu.core_type<tc>, window_params = [{transform_indices = @transform_0, window_bounds = array<i64: 1, 3, 16>}, {pipeline_mode = #tpu.pipeline_mode<synchronous>, transform_indices = @transform_1, window_bounds = array<i64: 1, 16>}, {pipeline_mode = #tpu.pipeline_mode<synchronous>, transform_indices = @transform_2, window_bounds = array<i64: 1, 16>}, {pipeline_mode = #tpu.pipeline_mode<synchronous>, transform_indices = @transform_3, window_bounds = array<i64: 16, 48>}, {pipeline_mode = #tpu.pipeline_mode<synchronous>, transform_indices = @transform_4, window_bounds = array<i64: 1, 48>}, {pipeline_mode = #tpu.pipeline_mode<synchronous>, transform_indices = @transform_5, window_bounds = array<i64: 16, 16>}, {pipeline_mode = #tpu.pipeline_mode<synchronous>, transform_indices = @transform_6, window_bounds = array<i64: 1, 16>}, {transform_indices = @transform_7, window_bounds = array<i64: 1, 1, 3>}, {transform_indices = @transform_8, window_bounds = array<i64: 1, 3, 16>}]} {
    %c0 = arith.constant 0 : index
    %c0_0 = arith.constant 0 : index
    %c0_1 = arith.constant 0 : index
    %0 = vector.load %arg1[%c0, %c0_0, %c0_1] : memref<1x3x16xf32, #tpu.memory_space<vmem>>, vector<1x3x16xf32>
    %1 = vector.shape_cast %0 : vector<1x3x16xf32> to vector<3x16xf32>
    %c0_2 = arith.constant 0 : index
    %c0_3 = arith.constant 0 : index
    %2 = vector.load %arg2[%c0_2, %c0_3] : memref<1x16xf32, #tpu.memory_space<vmem>>, vector<1x16xf32>
    %c0_4 = arith.constant 0 : index
    %c0_5 = arith.constant 0 : index
    %3 = vector.load %arg3[%c0_4, %c0_5] : memref<1x16xf32, #tpu.memory_space<vmem>>, vector<1x16xf32>
    %cst = arith.constant dense<0.000000e+00> : vector<3xf32>
    %4 = vector.multi_reduction <add>, %1, %cst [1] : vector<3x16xf32> to vector<3xf32>
    %5 = vector.shape_cast %4 : vector<3xf32> to vector<3x1xf32>
    %cst_6 = arith.constant 1.600000e+01 : f32
    %6 = vector.broadcast %cst_6 : f32 to vector<3x1xf32>
    %7 = arith.divf %5, %6 : vector<3x1xf32>
    %8 = vector.broadcast %7 : vector<3x1xf32> to vector<3x16xf32>
    %9 = arith.subf %1, %8 : vector<3x16xf32>
    %10 = arith.mulf %9, %9 : vector<3x16xf32>
    %cst_7 = arith.constant dense<0.000000e+00> : vector<3xf32>
    %11 = vector.multi_reduction <add>, %10, %cst_7 [1] : vector<3x16xf32> to vector<3xf32>
    %12 = vector.shape_cast %11 : vector<3xf32> to vector<3x1xf32>
    %cst_8 = arith.constant 1.600000e+01 : f32
    %13 = vector.broadcast %cst_8 : f32 to vector<3x1xf32>
    %14 = arith.divf %12, %13 : vector<3x1xf32>
    %15 = vector.broadcast %7 : vector<3x1xf32> to vector<3x16xf32>
    %16 = arith.subf %1, %15 : vector<3x16xf32>
    %cst_9 = arith.constant 9.99999974E-6 : f32
    %17 = vector.broadcast %cst_9 : f32 to vector<3x1xf32>
    %18 = arith.addf %14, %17 : vector<3x1xf32>
    %19 = math.rsqrt %18 : vector<3x1xf32>
    %20 = vector.broadcast %19 : vector<3x1xf32> to vector<3x16xf32>
    %21 = arith.mulf %16, %20 : vector<3x16xf32>
    %22 = vector.broadcast %2 : vector<1x16xf32> to vector<3x16xf32>
    %23 = arith.mulf %21, %22 : vector<3x16xf32>
    %24 = vector.broadcast %3 : vector<1x16xf32> to vector<3x16xf32>
    %25 = arith.addf %23, %24 : vector<3x16xf32>
    %c0_10 = arith.constant 0 : index
    %c0_11 = arith.constant 0 : index
    %26 = vector.load %arg4[%c0_10, %c0_11] : memref<16x48xf32, #tpu.memory_space<vmem>>, vector<16x48xf32>
    %cst_12 = arith.constant dense<0.000000e+00> : vector<3x48xf32>
    %27 = tpu.matmul %25, %26, %cst_12 {dimension_numbers = #tpu.dot_dimension_numbers<[1], [0], [0], [1], [0, 0, 1, 1], [], []>} : vector<3x16xf32>, vector<16x48xf32>, vector<3x48xf32> -> vector<3x48xf32>
    %c0_13 = arith.constant 0 : index
    %c0_14 = arith.constant 0 : index
    %28 = vector.load %arg5[%c0_13, %c0_14] : memref<1x48xf32, #tpu.memory_space<vmem>>, vector<1x48xf32>
    %29 = vector.broadcast %28 : vector<1x48xf32> to vector<3x48xf32>
    %30 = arith.addf %27, %29 : vector<3x48xf32>
    %c0_15 = arith.constant 0 : index
    %c0_16 = arith.constant 0 : index
    %c0_17 = arith.constant 0 : index
    %31 = vector.load %arg8[%c0_15, %c0_16, %c0_17] : memref<1x1x3xf32, #tpu.memory_space<vmem>>, vector<1x1x3xf32>
    %32 = vector.shape_cast %31 : vector<1x1x3xf32> to vector<1x3xf32>
    %c0_18 = arith.constant 0 : index
    %c0_19 = arith.constant 0 : index
    %33 = vector.load %arg6[%c0_18, %c0_19] : memref<16x16xf32, #tpu.memory_space<vmem>>, vector<16x16xf32>
    %cst_20 = arith.constant 0.000000e+00 : f32
    %34 = vector.broadcast %cst_20 : f32 to vector<3x16xf32>
    %35 = vector.extract_strided_slice %30 {offsets = [0, 0], sizes = [3, 4], strides = [1, 1]} : vector<3x48xf32> to vector<3x4xf32>
    %36 = vector.extract_strided_slice %30 {offsets = [0, 16], sizes = [3, 4], strides = [1, 1]} : vector<3x48xf32> to vector<3x4xf32>
    %37 = vector.extract_strided_slice %30 {offsets = [0, 32], sizes = [3, 4], strides = [1, 1]} : vector<3x48xf32> to vector<3x4xf32>
    "tpu.trace_start"() <{level = 10 : i32, message = "td,sd->ts"}> : () -> ()
    %cst_21 = arith.constant dense<0.000000e+00> : vector<3x3xf32>
    %38 = tpu.matmul %35, %36, %cst_21 {dimension_numbers = #tpu.dot_dimension_numbers<[1], [1], [0], [0], [0, 0, 1, 0], [], []>} : vector<3x4xf32>, vector<3x4xf32>, vector<3x3xf32> -> vector<3x3xf32>
    "tpu.trace_stop"() : () -> ()
    %cst_22 = arith.constant 5.000000e-01 : f32
    %39 = vector.broadcast %cst_22 : f32 to vector<3x3xf32>
    %40 = arith.mulf %38, %39 : vector<3x3xf32>
    %41 = vector.broadcast %32 : vector<1x3xf32> to vector<3x3xf32>
    %42 = arith.addf %40, %41 : vector<3x3xf32>
    %cst_23 = arith.constant dense<0xFF800000> : vector<3xf32>
    %43 = vector.multi_reduction <maximumf>, %42, %cst_23 [1] : vector<3x3xf32> to vector<3xf32>
    %44 = vector.shape_cast %43 : vector<3xf32> to vector<3x1xf32>
    %45 = vector.broadcast %44 : vector<3x1xf32> to vector<3x3xf32>
    %46 = arith.subf %42, %45 : vector<3x3xf32>
    %47 = math.exp %46 : vector<3x3xf32>
    %cst_24 = arith.constant dense<0.000000e+00> : vector<3xf32>
    %48 = vector.multi_reduction <add>, %47, %cst_24 [1] : vector<3x3xf32> to vector<3xf32>
    %49 = vector.shape_cast %48 : vector<3xf32> to vector<3x1xf32>
    %50 = tpu.reciprocal %49 {approx = true} : vector<3x1xf32> -> vector<3x1xf32>
    %51 = vector.broadcast %50 : vector<3x1xf32> to vector<3x3xf32>
    %52 = arith.mulf %47, %51 : vector<3x3xf32>
    %cst_25 = arith.constant dense<0.000000e+00> : vector<3x4xf32>
    %53 = tpu.matmul %52, %37, %cst_25 {dimension_numbers = #tpu.dot_dimension_numbers<[1], [0], [0], [1], [0, 0, 1, 1], [], []>} : vector<3x3xf32>, vector<3x4xf32>, vector<3x4xf32> -> vector<3x4xf32>
    %54 = vector.extract_strided_slice %33 {offsets = [0, 0], sizes = [4, 16], strides = [1, 1]} : vector<16x16xf32> to vector<4x16xf32>
    %cst_26 = arith.constant dense<0.000000e+00> : vector<3x16xf32>
    %55 = tpu.matmul %53, %54, %cst_26 {dimension_numbers = #tpu.dot_dimension_numbers<[1], [0], [0], [1], [0, 0, 1, 1], [], []>} : vector<3x4xf32>, vector<4x16xf32>, vector<3x16xf32> -> vector<3x16xf32>
    %56 = arith.addf %34, %55 : vector<3x16xf32>
    %57 = vector.extract_strided_slice %30 {offsets = [0, 4], sizes = [3, 4], strides = [1, 1]} : vector<3x48xf32> to vector<3x4xf32>
    %58 = vector.extract_strided_slice %30 {offsets = [0, 20], sizes = [3, 4], strides = [1, 1]} : vector<3x48xf32> to vector<3x4xf32>
    %59 = vector.extract_strided_slice %30 {offsets = [0, 36], sizes = [3, 4], strides = [1, 1]} : vector<3x48xf32> to vector<3x4xf32>
    "tpu.trace_start"() <{level = 10 : i32, message = "td,sd->ts"}> : () -> ()
    %cst_27 = arith.constant dense<0.000000e+00> : vector<3x3xf32>
    %60 = tpu.matmul %57, %58, %cst_27 {dimension_numbers = #tpu.dot_dimension_numbers<[1], [1], [0], [0], [0, 0, 1, 0], [], []>} : vector<3x4xf32>, vector<3x4xf32>, vector<3x3xf32> -> vector<3x3xf32>
    "tpu.trace_stop"() : () -> ()
    %cst_28 = arith.constant 5.000000e-01 : f32
    %61 = vector.broadcast %cst_28 : f32 to vector<3x3xf32>
    %62 = arith.mulf %60, %61 : vector<3x3xf32>
    %63 = vector.broadcast %32 : vector<1x3xf32> to vector<3x3xf32>
    %64 = arith.addf %62, %63 : vector<3x3xf32>
    %cst_29 = arith.constant dense<0xFF800000> : vector<3xf32>
    %65 = vector.multi_reduction <maximumf>, %64, %cst_29 [1] : vector<3x3xf32> to vector<3xf32>
    %66 = vector.shape_cast %65 : vector<3xf32> to vector<3x1xf32>
    %67 = vector.broadcast %66 : vector<3x1xf32> to vector<3x3xf32>
    %68 = arith.subf %64, %67 : vector<3x3xf32>
    %69 = math.exp %68 : vector<3x3xf32>
    %cst_30 = arith.constant dense<0.000000e+00> : vector<3xf32>
    %70 = vector.multi_reduction <add>, %69, %cst_30 [1] : vector<3x3xf32> to vector<3xf32>
    %71 = vector.shape_cast %70 : vector<3xf32> to vector<3x1xf32>
    %72 = tpu.reciprocal %71 {approx = true} : vector<3x1xf32> -> vector<3x1xf32>
    %73 = vector.broadcast %72 : vector<3x1xf32> to vector<3x3xf32>
    %74 = arith.mulf %69, %73 : vector<3x3xf32>
    %cst_31 = arith.constant dense<0.000000e+00> : vector<3x4xf32>
    %75 = tpu.matmul %74, %59, %cst_31 {dimension_numbers = #tpu.dot_dimension_numbers<[1], [0], [0], [1], [0, 0, 1, 1], [], []>} : vector<3x3xf32>, vector<3x4xf32>, vector<3x4xf32> -> vector<3x4xf32>
    %76 = vector.extract_strided_slice %33 {offsets = [4, 0], sizes = [4, 16], strides = [1, 1]} : vector<16x16xf32> to vector<4x16xf32>
    %cst_32 = arith.constant dense<0.000000e+00> : vector<3x16xf32>
    %77 = tpu.matmul %75, %76, %cst_32 {dimension_numbers = #tpu.dot_dimension_numbers<[1], [0], [0], [1], [0, 0, 1, 1], [], []>} : vector<3x4xf32>, vector<4x16xf32>, vector<3x16xf32> -> vector<3x16xf32>
    %78 = arith.addf %56, %77 : vector<3x16xf32>
    %79 = vector.extract_strided_slice %30 {offsets = [0, 8], sizes = [3, 4], strides = [1, 1]} : vector<3x48xf32> to vector<3x4xf32>
    %80 = vector.extract_strided_slice %30 {offsets = [0, 24], sizes = [3, 4], strides = [1, 1]} : vector<3x48xf32> to vector<3x4xf32>
    %81 = vector.extract_strided_slice %30 {offsets = [0, 40], sizes = [3, 4], strides = [1, 1]} : vector<3x48xf32> to vector<3x4xf32>
    "tpu.trace_start"() <{level = 10 : i32, message = "td,sd->ts"}> : () -> ()
    %cst_33 = arith.constant dense<0.000000e+00> : vector<3x3xf32>
    %82 = tpu.matmul %79, %80, %cst_33 {dimension_numbers = #tpu.dot_dimension_numbers<[1], [1], [0], [0], [0, 0, 1, 0], [], []>} : vector<3x4xf32>, vector<3x4xf32>, vector<3x3xf32> -> vector<3x3xf32>
    "tpu.trace_stop"() : () -> ()
    %cst_34 = arith.constant 5.000000e-01 : f32
    %83 = vector.broadcast %cst_34 : f32 to vector<3x3xf32>
    %84 = arith.mulf %82, %83 : vector<3x3xf32>
    %85 = vector.broadcast %32 : vector<1x3xf32> to vector<3x3xf32>
    %86 = arith.addf %84, %85 : vector<3x3xf32>
    %cst_35 = arith.constant dense<0xFF800000> : vector<3xf32>
    %87 = vector.multi_reduction <maximumf>, %86, %cst_35 [1] : vector<3x3xf32> to vector<3xf32>
    %88 = vector.shape_cast %87 : vector<3xf32> to vector<3x1xf32>
    %89 = vector.broadcast %88 : vector<3x1xf32> to vector<3x3xf32>
    %90 = arith.subf %86, %89 : vector<3x3xf32>
    %91 = math.exp %90 : vector<3x3xf32>
    %cst_36 = arith.constant dense<0.000000e+00> : vector<3xf32>
    %92 = vector.multi_reduction <add>, %91, %cst_36 [1] : vector<3x3xf32> to vector<3xf32>
    %93 = vector.shape_cast %92 : vector<3xf32> to vector<3x1xf32>
    %94 = tpu.reciprocal %93 {approx = true} : vector<3x1xf32> -> vector<3x1xf32>
    %95 = vector.broadcast %94 : vector<3x1xf32> to vector<3x3xf32>
    %96 = arith.mulf %91, %95 : vector<3x3xf32>
    %cst_37 = arith.constant dense<0.000000e+00> : vector<3x4xf32>
    %97 = tpu.matmul %96, %81, %cst_37 {dimension_numbers = #tpu.dot_dimension_numbers<[1], [0], [0], [1], [0, 0, 1, 1], [], []>} : vector<3x3xf32>, vector<3x4xf32>, vector<3x4xf32> -> vector<3x4xf32>
    %98 = vector.extract_strided_slice %33 {offsets = [8, 0], sizes = [4, 16], strides = [1, 1]} : vector<16x16xf32> to vector<4x16xf32>
    %cst_38 = arith.constant dense<0.000000e+00> : vector<3x16xf32>
    %99 = tpu.matmul %97, %98, %cst_38 {dimension_numbers = #tpu.dot_dimension_numbers<[1], [0], [0], [1], [0, 0, 1, 1], [], []>} : vector<3x4xf32>, vector<4x16xf32>, vector<3x16xf32> -> vector<3x16xf32>
    %100 = arith.addf %78, %99 : vector<3x16xf32>
    %101 = vector.extract_strided_slice %30 {offsets = [0, 12], sizes = [3, 4], strides = [1, 1]} : vector<3x48xf32> to vector<3x4xf32>
    %102 = vector.extract_strided_slice %30 {offsets = [0, 28], sizes = [3, 4], strides = [1, 1]} : vector<3x48xf32> to vector<3x4xf32>
    %103 = vector.extract_strided_slice %30 {offsets = [0, 44], sizes = [3, 4], strides = [1, 1]} : vector<3x48xf32> to vector<3x4xf32>
    "tpu.trace_start"() <{level = 10 : i32, message = "td,sd->ts"}> : () -> ()
    %cst_39 = arith.constant dense<0.000000e+00> : vector<3x3xf32>
    %104 = tpu.matmul %101, %102, %cst_39 {dimension_numbers = #tpu.dot_dimension_numbers<[1], [1], [0], [0], [0, 0, 1, 0], [], []>} : vector<3x4xf32>, vector<3x4xf32>, vector<3x3xf32> -> vector<3x3xf32>
    "tpu.trace_stop"() : () -> ()
    %cst_40 = arith.constant 5.000000e-01 : f32
    %105 = vector.broadcast %cst_40 : f32 to vector<3x3xf32>
    %106 = arith.mulf %104, %105 : vector<3x3xf32>
    %107 = vector.broadcast %32 : vector<1x3xf32> to vector<3x3xf32>
    %108 = arith.addf %106, %107 : vector<3x3xf32>
    %cst_41 = arith.constant dense<0xFF800000> : vector<3xf32>
    %109 = vector.multi_reduction <maximumf>, %108, %cst_41 [1] : vector<3x3xf32> to vector<3xf32>
    %110 = vector.shape_cast %109 : vector<3xf32> to vector<3x1xf32>
    %111 = vector.broadcast %110 : vector<3x1xf32> to vector<3x3xf32>
    %112 = arith.subf %108, %111 : vector<3x3xf32>
    %113 = math.exp %112 : vector<3x3xf32>
    %cst_42 = arith.constant dense<0.000000e+00> : vector<3xf32>
    %114 = vector.multi_reduction <add>, %113, %cst_42 [1] : vector<3x3xf32> to vector<3xf32>
    %115 = vector.shape_cast %114 : vector<3xf32> to vector<3x1xf32>
    %116 = tpu.reciprocal %115 {approx = true} : vector<3x1xf32> -> vector<3x1xf32>
    %117 = vector.broadcast %116 : vector<3x1xf32> to vector<3x3xf32>
    %118 = arith.mulf %113, %117 : vector<3x3xf32>
    %cst_43 = arith.constant dense<0.000000e+00> : vector<3x4xf32>
    %119 = tpu.matmul %118, %103, %cst_43 {dimension_numbers = #tpu.dot_dimension_numbers<[1], [0], [0], [1], [0, 0, 1, 1], [], []>} : vector<3x3xf32>, vector<3x4xf32>, vector<3x4xf32> -> vector<3x4xf32>
    %120 = vector.extract_strided_slice %33 {offsets = [12, 0], sizes = [4, 16], strides = [1, 1]} : vector<16x16xf32> to vector<4x16xf32>
    %cst_44 = arith.constant dense<0.000000e+00> : vector<3x16xf32>
    %121 = tpu.matmul %119, %120, %cst_44 {dimension_numbers = #tpu.dot_dimension_numbers<[1], [0], [0], [1], [0, 0, 1, 1], [], []>} : vector<3x4xf32>, vector<4x16xf32>, vector<3x16xf32> -> vector<3x16xf32>
    %122 = arith.addf %100, %121 : vector<3x16xf32>
    %123 = arith.addf %1, %122 : vector<3x16xf32>
    %c0_45 = arith.constant 0 : index
    %c0_46 = arith.constant 0 : index
    %124 = vector.load %arg7[%c0_45, %c0_46] : memref<1x16xf32, #tpu.memory_space<vmem>>, vector<1x16xf32>
    %125 = vector.broadcast %124 : vector<1x16xf32> to vector<3x16xf32>
    %126 = arith.addf %123, %125 : vector<3x16xf32>
    %c0_47 = arith.constant 0 : index
    %c0_48 = arith.constant 0 : index
    %c0_49 = arith.constant 0 : index
    %127 = vector.load %arg9[%c0_47, %c0_48, %c0_49] : memref<1x3x16xf32, #tpu.memory_space<vmem>>, vector<1x3x16xf32>
    %128 = vector.shape_cast %127 : vector<1x3x16xf32> to vector<3x16xf32>
    %129 = vector.shape_cast %126 : vector<3x16xf32> to vector<1x3x16xf32>
    tpu.vector_store %arg9[%c0_47, %c0_48, %c0_49], %129 {strides = array<i32>} : memref<1x3x16xf32, #tpu.memory_space<vmem>>, vector<1x3x16xf32>,
    return
  }
  func.func @transform_0(%arg0: i32) -> (i32, i32, i32) {
    %c0_i32 = arith.constant 0 : i32
    %c0_i32_0 = arith.constant 0 : i32
    %c0_i32_1 = arith.constant 0 : i32
    return %arg0, %c0_i32, %c0_i32_0 : i32, i32, i32
  }
  func.func @transform_1(%arg0: i32) -> (i32, i32) {
    %c0_i32 = arith.constant 0 : i32
    %c0_i32_0 = arith.constant 0 : i32
    %c0_i32_1 = arith.constant 0 : i32
    return %c0_i32, %c0_i32_0 : i32, i32
  }
  func.func @transform_2(%arg0: i32) -> (i32, i32) {
    %c0_i32 = arith.constant 0 : i32
    %c0_i32_0 = arith.constant 0 : i32
    %c0_i32_1 = arith.constant 0 : i32
    return %c0_i32, %c0_i32_0 : i32, i32
  }
  func.func @transform_3(%arg0: i32) -> (i32, i32) {
    %c0_i32 = arith.constant 0 : i32
    %c0_i32_0 = arith.constant 0 : i32
    %c0_i32_1 = arith.constant 0 : i32
    return %c0_i32, %c0_i32_0 : i32, i32
  }
  func.func @transform_4(%arg0: i32) -> (i32, i32) {
    %c0_i32 = arith.constant 0 : i32
    %c0_i32_0 = arith.constant 0 : i32
    %c0_i32_1 = arith.constant 0 : i32
    return %c0_i32, %c0_i32_0 : i32, i32
  }
  func.func @transform_5(%arg0: i32) -> (i32, i32) {
    %c0_i32 = arith.constant 0 : i32
    %c0_i32_0 = arith.constant 0 : i32
    %c0_i32_1 = arith.constant 0 : i32
    return %c0_i32, %c0_i32_0 : i32, i32
  }
  func.func @transform_6(%arg0: i32) -> (i32, i32) {
    %c0_i32 = arith.constant 0 : i32
    %c0_i32_0 = arith.constant 0 : i32
    %c0_i32_1 = arith.constant 0 : i32
    return %c0_i32, %c0_i32_0 : i32, i32
  }
  func.func @transform_7(%arg0: i32) -> (i32, i32, i32) {
    %c0_i32 = arith.constant 0 : i32
    %c0_i32_0 = arith.constant 0 : i32
    %c0_i32_1 = arith.constant 0 : i32
    return %arg0, %c0_i32, %c0_i32_0 : i32, i32, i32
  }
  func.func @transform_8(%arg0: i32) -> (i32, i32, i32) {
    %c0_i32 = arith.constant 0 : i32
    %c0_i32_0 = arith.constant 0 : i32
    %c0_i32_1 = arith.constant 0 : i32
    return %arg0, %c0_i32, %c0_i32_0 : i32, i32, i32
  }
}

module attributes {stable_mosaic.version = 11 : i64} {
  func.func @_conv_module_res_kernel(%arg0: i32, %arg1: memref<1x3x16xf32, #tpu.memory_space<vmem>>, %arg2: memref<1x16xf32, #tpu.memory_space<vmem>>, %arg3: memref<1x16xf32, #tpu.memory_space<vmem>>, %arg4: memref<16x32xf32, #tpu.memory_space<vmem>>, %arg5: memref<1x32xf32, #tpu.memory_space<vmem>>, %arg6: memref<3x16xf32, #tpu.memory_space<vmem>>, %arg7: memref<1x16xf32, #tpu.memory_space<vmem>>, %arg8: memref<1x16xf32, #tpu.memory_space<vmem>>, %arg9: memref<1x16xf32, #tpu.memory_space<vmem>>, %arg10: memref<16x16xf32, #tpu.memory_space<vmem>>, %arg11: memref<1x16xf32, #tpu.memory_space<vmem>>, %arg12: memref<1x3x16xf32, #tpu.memory_space<vmem>>, %arg13: memref<5x16xf32, #tpu.memory_space<vmem>>) attributes {dimension_semantics = [#tpu.dimension_semantics<parallel>], iteration_bounds = array<i64: 2>, scalar_prefetch = 0 : i64, scratch_operands = 1 : i64, tpu.core_type = #tpu.core_type<tc>, window_params = [{transform_indices = @transform_0, window_bounds = array<i64: 1, 3, 16>}, {pipeline_mode = #tpu.pipeline_mode<synchronous>, transform_indices = @transform_1, window_bounds = array<i64: 1, 16>}, {pipeline_mode = #tpu.pipeline_mode<synchronous>, transform_indices = @transform_2, window_bounds = array<i64: 1, 16>}, {pipeline_mode = #tpu.pipeline_mode<synchronous>, transform_indices = @transform_3, window_bounds = array<i64: 16, 32>}, {pipeline_mode = #tpu.pipeline_mode<synchronous>, transform_indices = @transform_4, window_bounds = array<i64: 1, 32>}, {pipeline_mode = #tpu.pipeline_mode<synchronous>, transform_indices = @transform_5, window_bounds = array<i64: 3, 16>}, {pipeline_mode = #tpu.pipeline_mode<synchronous>, transform_indices = @transform_6, window_bounds = array<i64: 1, 16>}, {pipeline_mode = #tpu.pipeline_mode<synchronous>, transform_indices = @transform_7, window_bounds = array<i64: 1, 16>}, {pipeline_mode = #tpu.pipeline_mode<synchronous>, transform_indices = @transform_8, window_bounds = array<i64: 1, 16>}, {pipeline_mode = #tpu.pipeline_mode<synchronous>, transform_indices = @transform_9, window_bounds = array<i64: 16, 16>}, {pipeline_mode = #tpu.pipeline_mode<synchronous>, transform_indices = @transform_10, window_bounds = array<i64: 1, 16>}, {transform_indices = @transform_11, window_bounds = array<i64: 1, 3, 16>}]} {
    %c0 = arith.constant 0 : index
    %c0_0 = arith.constant 0 : index
    %c0_1 = arith.constant 0 : index
    %0 = vector.load %arg1[%c0, %c0_0, %c0_1] : memref<1x3x16xf32, #tpu.memory_space<vmem>>, vector<1x3x16xf32>
    %1 = vector.shape_cast %0 : vector<1x3x16xf32> to vector<3x16xf32>
    %c0_2 = arith.constant 0 : index
    %c0_3 = arith.constant 0 : index
    %2 = vector.load %arg2[%c0_2, %c0_3] : memref<1x16xf32, #tpu.memory_space<vmem>>, vector<1x16xf32>
    %c0_4 = arith.constant 0 : index
    %c0_5 = arith.constant 0 : index
    %3 = vector.load %arg3[%c0_4, %c0_5] : memref<1x16xf32, #tpu.memory_space<vmem>>, vector<1x16xf32>
    %cst = arith.constant dense<0.000000e+00> : vector<3xf32>
    %4 = vector.multi_reduction <add>, %1, %cst [1] : vector<3x16xf32> to vector<3xf32>
    %5 = vector.shape_cast %4 : vector<3xf32> to vector<3x1xf32>
    %cst_6 = arith.constant 1.600000e+01 : f32
    %6 = vector.broadcast %cst_6 : f32 to vector<3x1xf32>
    %7 = arith.divf %5, %6 : vector<3x1xf32>
    %8 = vector.broadcast %7 : vector<3x1xf32> to vector<3x16xf32>
    %9 = arith.subf %1, %8 : vector<3x16xf32>
    %10 = arith.mulf %9, %9 : vector<3x16xf32>
    %cst_7 = arith.constant dense<0.000000e+00> : vector<3xf32>
    %11 = vector.multi_reduction <add>, %10, %cst_7 [1] : vector<3x16xf32> to vector<3xf32>
    %12 = vector.shape_cast %11 : vector<3xf32> to vector<3x1xf32>
    %cst_8 = arith.constant 1.600000e+01 : f32
    %13 = vector.broadcast %cst_8 : f32 to vector<3x1xf32>
    %14 = arith.divf %12, %13 : vector<3x1xf32>
    %15 = vector.broadcast %7 : vector<3x1xf32> to vector<3x16xf32>
    %16 = arith.subf %1, %15 : vector<3x16xf32>
    %cst_9 = arith.constant 9.99999974E-6 : f32
    %17 = vector.broadcast %cst_9 : f32 to vector<3x1xf32>
    %18 = arith.addf %14, %17 : vector<3x1xf32>
    %19 = math.rsqrt %18 : vector<3x1xf32>
    %20 = vector.broadcast %19 : vector<3x1xf32> to vector<3x16xf32>
    %21 = arith.mulf %16, %20 : vector<3x16xf32>
    %22 = vector.broadcast %2 : vector<1x16xf32> to vector<3x16xf32>
    %23 = arith.mulf %21, %22 : vector<3x16xf32>
    %24 = vector.broadcast %3 : vector<1x16xf32> to vector<3x16xf32>
    %25 = arith.addf %23, %24 : vector<3x16xf32>
    %c0_10 = arith.constant 0 : index
    %c0_11 = arith.constant 0 : index
    %26 = vector.load %arg4[%c0_10, %c0_11] : memref<16x32xf32, #tpu.memory_space<vmem>>, vector<16x32xf32>
    %cst_12 = arith.constant dense<0.000000e+00> : vector<3x32xf32>
    %27 = tpu.matmul %25, %26, %cst_12 {dimension_numbers = #tpu.dot_dimension_numbers<[1], [0], [0], [1], [0, 0, 1, 1], [], []>} : vector<3x16xf32>, vector<16x32xf32>, vector<3x32xf32> -> vector<3x32xf32>
    %c0_13 = arith.constant 0 : index
    %c0_14 = arith.constant 0 : index
    %28 = vector.load %arg5[%c0_13, %c0_14] : memref<1x32xf32, #tpu.memory_space<vmem>>, vector<1x32xf32>
    %29 = vector.broadcast %28 : vector<1x32xf32> to vector<3x32xf32>
    %30 = arith.addf %27, %29 : vector<3x32xf32>
    %31 = vector.extract_strided_slice %30 {offsets = [0, 0], sizes = [3, 16], strides = [1, 1]} : vector<3x32xf32> to vector<3x16xf32>
    %32 = vector.extract_strided_slice %30 {offsets = [0, 16], sizes = [3, 16], strides = [1, 1]} : vector<3x32xf32> to vector<3x16xf32>
    %33 = arith.negf %32 : vector<3x16xf32>
    %34 = math.exp %33 : vector<3x16xf32>
    %cst_15 = arith.constant 1.000000e+00 : f32
    %35 = vector.broadcast %cst_15 : f32 to vector<3x16xf32>
    %36 = arith.addf %35, %34 : vector<3x16xf32>
    %37 = arith.divf %35, %36 : vector<3x16xf32>
    %38 = arith.mulf %31, %37 : vector<3x16xf32>
    %cst_16 = arith.constant 0.000000e+00 : f32
    %39 = vector.broadcast %cst_16 : f32 to vector<5x16xf32>
    %c0_17 = arith.constant 0 : index
    %c0_18 = arith.constant 0 : index
    %40 = vector.load %arg13[%c0_17, %c0_18] : memref<5x16xf32, #tpu.memory_space<vmem>>, vector<5x16xf32>
    tpu.vector_store %arg13[%c0_17, %c0_18], %39 {strides = array<i32>} : memref<5x16xf32, #tpu.memory_space<vmem>>, vector<5x16xf32>,
    %c1 = arith.constant 1 : index
    %c0_19 = arith.constant 0 : index
    %41 = vector.load %arg13[%c1, %c0_19] : memref<5x16xf32, #tpu.memory_space<vmem>>, vector<3x16xf32>
    tpu.vector_store %arg13[%c1, %c0_19], %38 {strides = array<i32>} : memref<5x16xf32, #tpu.memory_space<vmem>>, vector<3x16xf32>,
    %c0_20 = arith.constant 0 : index
    %c0_21 = arith.constant 0 : index
    %42 = vector.load %arg6[%c0_20, %c0_21] : memref<3x16xf32, #tpu.memory_space<vmem>>, vector<3x16xf32>
    %cst_22 = arith.constant 0.000000e+00 : f32
    %43 = vector.broadcast %cst_22 : f32 to vector<3x16xf32>
    %c0_23 = arith.constant 0 : index
    %c0_24 = arith.constant 0 : index
    %44 = vector.load %arg13[%c0_23, %c0_24] : memref<5x16xf32, #tpu.memory_space<vmem>>, vector<3x16xf32>
    %45 = vector.extract_strided_slice %42 {offsets = [0, 0], sizes = [1, 16], strides = [1, 1]} : vector<3x16xf32> to vector<1x16xf32>
    %46 = vector.broadcast %45 : vector<1x16xf32> to vector<3x16xf32>
    %47 = arith.mulf %44, %46 : vector<3x16xf32>
    %48 = arith.addf %43, %47 : vector<3x16xf32>
    %c1_25 = arith.constant 1 : index
    %c0_26 = arith.constant 0 : index
    %49 = vector.load %arg13[%c1_25, %c0_26] : memref<5x16xf32, #tpu.memory_space<vmem>>, vector<3x16xf32>
    %50 = vector.extract_strided_slice %42 {offsets = [1, 0], sizes = [1, 16], strides = [1, 1]} : vector<3x16xf32> to vector<1x16xf32>
    %51 = vector.broadcast %50 : vector<1x16xf32> to vector<3x16xf32>
    %52 = arith.mulf %49, %51 : vector<3x16xf32>
    %53 = arith.addf %48, %52 : vector<3x16xf32>
    %c2 = arith.constant 2 : index
    %c0_27 = arith.constant 0 : index
    %54 = vector.load %arg13[%c2, %c0_27] : memref<5x16xf32, #tpu.memory_space<vmem>>, vector<3x16xf32>
    %55 = vector.extract_strided_slice %42 {offsets = [2, 0], sizes = [1, 16], strides = [1, 1]} : vector<3x16xf32> to vector<1x16xf32>
    %56 = vector.broadcast %55 : vector<1x16xf32> to vector<3x16xf32>
    %57 = arith.mulf %54, %56 : vector<3x16xf32>
    %58 = arith.addf %53, %57 : vector<3x16xf32>
    %c0_28 = arith.constant 0 : index
    %c0_29 = arith.constant 0 : index
    %59 = vector.load %arg7[%c0_28, %c0_29] : memref<1x16xf32, #tpu.memory_space<vmem>>, vector<1x16xf32>
    %60 = vector.broadcast %59 : vector<1x16xf32> to vector<3x16xf32>
    %61 = arith.addf %58, %60 : vector<3x16xf32>
    %c0_30 = arith.constant 0 : index
    %c0_31 = arith.constant 0 : index
    %62 = vector.load %arg8[%c0_30, %c0_31] : memref<1x16xf32, #tpu.memory_space<vmem>>, vector<1x16xf32>
    %63 = vector.broadcast %62 : vector<1x16xf32> to vector<3x16xf32>
    %64 = arith.mulf %61, %63 : vector<3x16xf32>
    %c0_32 = arith.constant 0 : index
    %c0_33 = arith.constant 0 : index
    %65 = vector.load %arg9[%c0_32, %c0_33] : memref<1x16xf32, #tpu.memory_space<vmem>>, vector<1x16xf32>
    %66 = vector.broadcast %65 : vector<1x16xf32> to vector<3x16xf32>
    %67 = arith.addf %64, %66 : vector<3x16xf32>
    %68 = arith.negf %67 : vector<3x16xf32>
    %69 = math.exp %68 : vector<3x16xf32>
    %cst_34 = arith.constant 1.000000e+00 : f32
    %70 = vector.broadcast %cst_34 : f32 to vector<3x16xf32>
    %71 = arith.addf %70, %69 : vector<3x16xf32>
    %72 = arith.divf %70, %71 : vector<3x16xf32>
    %73 = arith.mulf %67, %72 : vector<3x16xf32>
    %c0_35 = arith.constant 0 : index
    %c0_36 = arith.constant 0 : index
    %74 = vector.load %arg10[%c0_35, %c0_36] : memref<16x16xf32, #tpu.memory_space<vmem>>, vector<16x16xf32>
    %cst_37 = arith.constant dense<0.000000e+00> : vector<3x16xf32>
    %75 = tpu.matmul %73, %74, %cst_37 {dimension_numbers = #tpu.dot_dimension_numbers<[1], [0], [0], [1], [0, 0, 1, 1], [], []>} : vector<3x16xf32>, vector<16x16xf32>, vector<3x16xf32> -> vector<3x16xf32>
    %c0_38 = arith.constant 0 : index
    %c0_39 = arith.constant 0 : index
    %76 = vector.load %arg11[%c0_38, %c0_39] : memref<1x16xf32, #tpu.memory_space<vmem>>, vector<1x16xf32>
    %77 = vector.broadcast %76 : vector<1x16xf32> to vector<3x16xf32>
    %78 = arith.addf %75, %77 : vector<3x16xf32>
    %79 = arith.addf %1, %78 : vector<3x16xf32>
    %c0_40 = arith.constant 0 : index
    %c0_41 = arith.constant 0 : index
    %c0_42 = arith.constant 0 : index
    %80 = vector.load %arg12[%c0_40, %c0_41, %c0_42] : memref<1x3x16xf32, #tpu.memory_space<vmem>>, vector<1x3x16xf32>
    %81 = vector.shape_cast %80 : vector<1x3x16xf32> to vector<3x16xf32>
    %82 = vector.shape_cast %79 : vector<3x16xf32> to vector<1x3x16xf32>
    tpu.vector_store %arg12[%c0_40, %c0_41, %c0_42], %82 {strides = array<i32>} : memref<1x3x16xf32, #tpu.memory_space<vmem>>, vector<1x3x16xf32>,
    return
  }
  func.func @transform_0(%arg0: i32) -> (i32, i32, i32) {
    %c0_i32 = arith.constant 0 : i32
    %c0_i32_0 = arith.constant 0 : i32
    %c0_i32_1 = arith.constant 0 : i32
    return %arg0, %c0_i32, %c0_i32_0 : i32, i32, i32
  }
  func.func @transform_1(%arg0: i32) -> (i32, i32) {
    %c0_i32 = arith.constant 0 : i32
    %c0_i32_0 = arith.constant 0 : i32
    %c0_i32_1 = arith.constant 0 : i32
    return %c0_i32, %c0_i32_0 : i32, i32
  }
  func.func @transform_2(%arg0: i32) -> (i32, i32) {
    %c0_i32 = arith.constant 0 : i32
    %c0_i32_0 = arith.constant 0 : i32
    %c0_i32_1 = arith.constant 0 : i32
    return %c0_i32, %c0_i32_0 : i32, i32
  }
  func.func @transform_3(%arg0: i32) -> (i32, i32) {
    %c0_i32 = arith.constant 0 : i32
    %c0_i32_0 = arith.constant 0 : i32
    %c0_i32_1 = arith.constant 0 : i32
    return %c0_i32, %c0_i32_0 : i32, i32
  }
  func.func @transform_4(%arg0: i32) -> (i32, i32) {
    %c0_i32 = arith.constant 0 : i32
    %c0_i32_0 = arith.constant 0 : i32
    %c0_i32_1 = arith.constant 0 : i32
    return %c0_i32, %c0_i32_0 : i32, i32
  }
  func.func @transform_5(%arg0: i32) -> (i32, i32) {
    %c0_i32 = arith.constant 0 : i32
    %c0_i32_0 = arith.constant 0 : i32
    %c0_i32_1 = arith.constant 0 : i32
    return %c0_i32, %c0_i32_0 : i32, i32
  }
  func.func @transform_6(%arg0: i32) -> (i32, i32) {
    %c0_i32 = arith.constant 0 : i32
    %c0_i32_0 = arith.constant 0 : i32
    %c0_i32_1 = arith.constant 0 : i32
    return %c0_i32, %c0_i32_0 : i32, i32
  }
  func.func @transform_7(%arg0: i32) -> (i32, i32) {
    %c0_i32 = arith.constant 0 : i32
    %c0_i32_0 = arith.constant 0 : i32
    %c0_i32_1 = arith.constant 0 : i32
    return %c0_i32, %c0_i32_0 : i32, i32
  }
  func.func @transform_8(%arg0: i32) -> (i32, i32) {
    %c0_i32 = arith.constant 0 : i32
    %c0_i32_0 = arith.constant 0 : i32
    %c0_i32_1 = arith.constant 0 : i32
    return %c0_i32, %c0_i32_0 : i32, i32
  }
  func.func @transform_9(%arg0: i32) -> (i32, i32) {
    %c0_i32 = arith.constant 0 : i32
    %c0_i32_0 = arith.constant 0 : i32
    %c0_i32_1 = arith.constant 0 : i32
    return %c0_i32, %c0_i32_0 : i32, i32
  }
  func.func @transform_10(%arg0: i32) -> (i32, i32) {
    %c0_i32 = arith.constant 0 : i32
    %c0_i32_0 = arith.constant 0 : i32
    %c0_i32_1 = arith.constant 0 : i32
    return %c0_i32, %c0_i32_0 : i32, i32
  }
  func.func @transform_11(%arg0: i32) -> (i32, i32, i32) {
    %c0_i32 = arith.constant 0 : i32
    %c0_i32_0 = arith.constant 0 : i32
    %c0_i32_1 = arith.constant 0 : i32
    return %arg0, %c0_i32, %c0_i32_0 : i32, i32, i32
  }
}

module attributes {stable_mosaic.version = 11 : i64} {
  func.func @_ffn_res_final_ln_kernel(%arg0: i32, %arg1: memref<8x16xf32, #tpu.memory_space<vmem>>, %arg2: memref<1x16xf32, #tpu.memory_space<vmem>>, %arg3: memref<1x16xf32, #tpu.memory_space<vmem>>, %arg4: memref<16x32xf32, #tpu.memory_space<vmem>>, %arg5: memref<1x32xf32, #tpu.memory_space<vmem>>, %arg6: memref<32x16xf32, #tpu.memory_space<vmem>>, %arg7: memref<1x16xf32, #tpu.memory_space<vmem>>, %arg8: memref<1x16xf32, #tpu.memory_space<vmem>>, %arg9: memref<1x16xf32, #tpu.memory_space<vmem>>, %arg10: memref<8x16xf32, #tpu.memory_space<vmem>>) attributes {dimension_semantics = [#tpu.dimension_semantics<parallel>], iteration_bounds = array<i64: 1>, scalar_prefetch = 0 : i64, scratch_operands = 0 : i64, tpu.core_type = #tpu.core_type<tc>, window_params = [{transform_indices = @transform_0, window_bounds = array<i64: 8, 16>}, {pipeline_mode = #tpu.pipeline_mode<synchronous>, transform_indices = @transform_1, window_bounds = array<i64: 1, 16>}, {pipeline_mode = #tpu.pipeline_mode<synchronous>, transform_indices = @transform_2, window_bounds = array<i64: 1, 16>}, {pipeline_mode = #tpu.pipeline_mode<synchronous>, transform_indices = @transform_3, window_bounds = array<i64: 16, 32>}, {pipeline_mode = #tpu.pipeline_mode<synchronous>, transform_indices = @transform_4, window_bounds = array<i64: 1, 32>}, {pipeline_mode = #tpu.pipeline_mode<synchronous>, transform_indices = @transform_5, window_bounds = array<i64: 32, 16>}, {pipeline_mode = #tpu.pipeline_mode<synchronous>, transform_indices = @transform_6, window_bounds = array<i64: 1, 16>}, {pipeline_mode = #tpu.pipeline_mode<synchronous>, transform_indices = @transform_7, window_bounds = array<i64: 1, 16>}, {pipeline_mode = #tpu.pipeline_mode<synchronous>, transform_indices = @transform_8, window_bounds = array<i64: 1, 16>}, {transform_indices = @transform_9, window_bounds = array<i64: 8, 16>}]} {
    %c0 = arith.constant 0 : index
    %c0_0 = arith.constant 0 : index
    %0 = vector.load %arg1[%c0, %c0_0] : memref<8x16xf32, #tpu.memory_space<vmem>>, vector<8x16xf32>
    %c0_1 = arith.constant 0 : index
    %c0_2 = arith.constant 0 : index
    %1 = vector.load %arg2[%c0_1, %c0_2] : memref<1x16xf32, #tpu.memory_space<vmem>>, vector<1x16xf32>
    %c0_3 = arith.constant 0 : index
    %c0_4 = arith.constant 0 : index
    %2 = vector.load %arg3[%c0_3, %c0_4] : memref<1x16xf32, #tpu.memory_space<vmem>>, vector<1x16xf32>
    %cst = arith.constant dense<0.000000e+00> : vector<8xf32>
    %3 = vector.multi_reduction <add>, %0, %cst [1] : vector<8x16xf32> to vector<8xf32>
    %4 = vector.shape_cast %3 : vector<8xf32> to vector<8x1xf32>
    %cst_5 = arith.constant 1.600000e+01 : f32
    %5 = vector.broadcast %cst_5 : f32 to vector<8x1xf32>
    %6 = arith.divf %4, %5 : vector<8x1xf32>
    %7 = vector.broadcast %6 : vector<8x1xf32> to vector<8x16xf32>
    %8 = arith.subf %0, %7 : vector<8x16xf32>
    %9 = arith.mulf %8, %8 : vector<8x16xf32>
    %cst_6 = arith.constant dense<0.000000e+00> : vector<8xf32>
    %10 = vector.multi_reduction <add>, %9, %cst_6 [1] : vector<8x16xf32> to vector<8xf32>
    %11 = vector.shape_cast %10 : vector<8xf32> to vector<8x1xf32>
    %cst_7 = arith.constant 1.600000e+01 : f32
    %12 = vector.broadcast %cst_7 : f32 to vector<8x1xf32>
    %13 = arith.divf %11, %12 : vector<8x1xf32>
    %14 = vector.broadcast %6 : vector<8x1xf32> to vector<8x16xf32>
    %15 = arith.subf %0, %14 : vector<8x16xf32>
    %cst_8 = arith.constant 9.99999974E-6 : f32
    %16 = vector.broadcast %cst_8 : f32 to vector<8x1xf32>
    %17 = arith.addf %13, %16 : vector<8x1xf32>
    %18 = math.rsqrt %17 : vector<8x1xf32>
    %19 = vector.broadcast %18 : vector<8x1xf32> to vector<8x16xf32>
    %20 = arith.mulf %15, %19 : vector<8x16xf32>
    %21 = vector.broadcast %1 : vector<1x16xf32> to vector<8x16xf32>
    %22 = arith.mulf %20, %21 : vector<8x16xf32>
    %23 = vector.broadcast %2 : vector<1x16xf32> to vector<8x16xf32>
    %24 = arith.addf %22, %23 : vector<8x16xf32>
    %c0_9 = arith.constant 0 : index
    %c0_10 = arith.constant 0 : index
    %25 = vector.load %arg4[%c0_9, %c0_10] : memref<16x32xf32, #tpu.memory_space<vmem>>, vector<16x32xf32>
    %cst_11 = arith.constant dense<0.000000e+00> : vector<8x32xf32>
    %26 = tpu.matmul %24, %25, %cst_11 {dimension_numbers = #tpu.dot_dimension_numbers<[1], [0], [0], [1], [0, 0, 1, 1], [], []>} : vector<8x16xf32>, vector<16x32xf32>, vector<8x32xf32> -> vector<8x32xf32>
    %c0_12 = arith.constant 0 : index
    %c0_13 = arith.constant 0 : index
    %27 = vector.load %arg5[%c0_12, %c0_13] : memref<1x32xf32, #tpu.memory_space<vmem>>, vector<1x32xf32>
    %28 = vector.broadcast %27 : vector<1x32xf32> to vector<8x32xf32>
    %29 = arith.addf %26, %28 : vector<8x32xf32>
    %30 = arith.negf %29 : vector<8x32xf32>
    %31 = math.exp %30 : vector<8x32xf32>
    %cst_14 = arith.constant 1.000000e+00 : f32
    %32 = vector.broadcast %cst_14 : f32 to vector<8x32xf32>
    %33 = arith.addf %32, %31 : vector<8x32xf32>
    %34 = arith.divf %32, %33 : vector<8x32xf32>
    %35 = arith.mulf %29, %34 : vector<8x32xf32>
    %c0_15 = arith.constant 0 : index
    %c0_16 = arith.constant 0 : index
    %36 = vector.load %arg6[%c0_15, %c0_16] : memref<32x16xf32, #tpu.memory_space<vmem>>, vector<32x16xf32>
    %cst_17 = arith.constant dense<0.000000e+00> : vector<8x16xf32>
    %37 = tpu.matmul %35, %36, %cst_17 {dimension_numbers = #tpu.dot_dimension_numbers<[1], [0], [0], [1], [0, 0, 1, 1], [], []>} : vector<8x32xf32>, vector<32x16xf32>, vector<8x16xf32> -> vector<8x16xf32>
    %c0_18 = arith.constant 0 : index
    %c0_19 = arith.constant 0 : index
    %38 = vector.load %arg7[%c0_18, %c0_19] : memref<1x16xf32, #tpu.memory_space<vmem>>, vector<1x16xf32>
    %39 = vector.broadcast %38 : vector<1x16xf32> to vector<8x16xf32>
    %40 = arith.addf %37, %39 : vector<8x16xf32>
    %cst_20 = arith.constant 5.000000e-01 : f32
    %41 = vector.broadcast %cst_20 : f32 to vector<8x16xf32>
    %42 = arith.mulf %41, %40 : vector<8x16xf32>
    %43 = arith.addf %0, %42 : vector<8x16xf32>
    %c0_21 = arith.constant 0 : index
    %c0_22 = arith.constant 0 : index
    %44 = vector.load %arg8[%c0_21, %c0_22] : memref<1x16xf32, #tpu.memory_space<vmem>>, vector<1x16xf32>
    %c0_23 = arith.constant 0 : index
    %c0_24 = arith.constant 0 : index
    %45 = vector.load %arg9[%c0_23, %c0_24] : memref<1x16xf32, #tpu.memory_space<vmem>>, vector<1x16xf32>
    %cst_25 = arith.constant dense<0.000000e+00> : vector<8xf32>
    %46 = vector.multi_reduction <add>, %43, %cst_25 [1] : vector<8x16xf32> to vector<8xf32>
    %47 = vector.shape_cast %46 : vector<8xf32> to vector<8x1xf32>
    %cst_26 = arith.constant 1.600000e+01 : f32
    %48 = vector.broadcast %cst_26 : f32 to vector<8x1xf32>
    %49 = arith.divf %47, %48 : vector<8x1xf32>
    %50 = vector.broadcast %49 : vector<8x1xf32> to vector<8x16xf32>
    %51 = arith.subf %43, %50 : vector<8x16xf32>
    %52 = arith.mulf %51, %51 : vector<8x16xf32>
    %cst_27 = arith.constant dense<0.000000e+00> : vector<8xf32>
    %53 = vector.multi_reduction <add>, %52, %cst_27 [1] : vector<8x16xf32> to vector<8xf32>
    %54 = vector.shape_cast %53 : vector<8xf32> to vector<8x1xf32>
    %cst_28 = arith.constant 1.600000e+01 : f32
    %55 = vector.broadcast %cst_28 : f32 to vector<8x1xf32>
    %56 = arith.divf %54, %55 : vector<8x1xf32>
    %57 = vector.broadcast %49 : vector<8x1xf32> to vector<8x16xf32>
    %58 = arith.subf %43, %57 : vector<8x16xf32>
    %cst_29 = arith.constant 9.99999974E-6 : f32
    %59 = vector.broadcast %cst_29 : f32 to vector<8x1xf32>
    %60 = arith.addf %56, %59 : vector<8x1xf32>
    %61 = math.rsqrt %60 : vector<8x1xf32>
    %62 = vector.broadcast %61 : vector<8x1xf32> to vector<8x16xf32>
    %63 = arith.mulf %58, %62 : vector<8x16xf32>
    %64 = vector.broadcast %44 : vector<1x16xf32> to vector<8x16xf32>
    %65 = arith.mulf %63, %64 : vector<8x16xf32>
    %66 = vector.broadcast %45 : vector<1x16xf32> to vector<8x16xf32>
    %67 = arith.addf %65, %66 : vector<8x16xf32>
    %c0_30 = arith.constant 0 : index
    %c0_31 = arith.constant 0 : index
    %68 = vector.load %arg10[%c0_30, %c0_31] : memref<8x16xf32, #tpu.memory_space<vmem>>, vector<8x16xf32>
    tpu.vector_store %arg10[%c0_30, %c0_31], %67 {strides = array<i32>} : memref<8x16xf32, #tpu.memory_space<vmem>>, vector<8x16xf32>,
    return
  }
  func.func @transform_0(%arg0: i32) -> (i32, i32) {
    %c0_i32 = arith.constant 0 : i32
    %c0_i32_0 = arith.constant 0 : i32
    return %arg0, %c0_i32 : i32, i32
  }
  func.func @transform_1(%arg0: i32) -> (i32, i32) {
    %c0_i32 = arith.constant 0 : i32
    %c0_i32_0 = arith.constant 0 : i32
    %c0_i32_1 = arith.constant 0 : i32
    return %c0_i32, %c0_i32_0 : i32, i32
  }
  func.func @transform_2(%arg0: i32) -> (i32, i32) {
    %c0_i32 = arith.constant 0 : i32
    %c0_i32_0 = arith.constant 0 : i32
    %c0_i32_1 = arith.constant 0 : i32
    return %c0_i32, %c0_i32_0 : i32, i32
  }
  func.func @transform_3(%arg0: i32) -> (i32, i32) {
    %c0_i32 = arith.constant 0 : i32
    %c0_i32_0 = arith.constant 0 : i32
    %c0_i32_1 = arith.constant 0 : i32
    return %c0_i32, %c0_i32_0 : i32, i32
  }
  func.func @transform_4(%arg0: i32) -> (i32, i32) {
    %c0_i32 = arith.constant 0 : i32
    %c0_i32_0 = arith.constant 0 : i32
    %c0_i32_1 = arith.constant 0 : i32
    return %c0_i32, %c0_i32_0 : i32, i32
  }
  func.func @transform_5(%arg0: i32) -> (i32, i32) {
    %c0_i32 = arith.constant 0 : i32
    %c0_i32_0 = arith.constant 0 : i32
    %c0_i32_1 = arith.constant 0 : i32
    return %c0_i32, %c0_i32_0 : i32, i32
  }
  func.func @transform_6(%arg0: i32) -> (i32, i32) {
    %c0_i32 = arith.constant 0 : i32
    %c0_i32_0 = arith.constant 0 : i32
    %c0_i32_1 = arith.constant 0 : i32
    return %c0_i32, %c0_i32_0 : i32, i32
  }
  func.func @transform_7(%arg0: i32) -> (i32, i32) {
    %c0_i32 = arith.constant 0 : i32
    %c0_i32_0 = arith.constant 0 : i32
    %c0_i32_1 = arith.constant 0 : i32
    return %c0_i32, %c0_i32_0 : i32, i32
  }
  func.func @transform_8(%arg0: i32) -> (i32, i32) {
    %c0_i32 = arith.constant 0 : i32
    %c0_i32_0 = arith.constant 0 : i32
    %c0_i32_1 = arith.constant 0 : i32
    return %c0_i32, %c0_i32_0 : i32, i32
  }
  func.func @transform_9(%arg0: i32) -> (i32, i32) {
    %c0_i32 = arith.constant 0 : i32
    %c0_i32_0 = arith.constant 0 : i32
    return %arg0, %c0_i32 : i32, i32
  }
}

module attributes {stable_mosaic.version = 11 : i64} {
  func.func @_linear_kernel(%arg0: i32, %arg1: memref<16x8xf32, #tpu.memory_space<vmem>>, %arg2: memref<8x64xf32, #tpu.memory_space<vmem>>, %arg3: memref<1x64xf32, #tpu.memory_space<vmem>>, %arg4: memref<16x64xf32, #tpu.memory_space<vmem>>) attributes {dimension_semantics = [#tpu.dimension_semantics<parallel>], iteration_bounds = array<i64: 1>, scalar_prefetch = 0 : i64, scratch_operands = 0 : i64, tpu.core_type = #tpu.core_type<tc>, window_params = [{transform_indices = @transform_0, window_bounds = array<i64: 16, 8>}, {pipeline_mode = #tpu.pipeline_mode<synchronous>, transform_indices = @transform_1, window_bounds = array<i64: 8, 64>}, {pipeline_mode = #tpu.pipeline_mode<synchronous>, transform_indices = @transform_2, window_bounds = array<i64: 1, 64>}, {transform_indices = @transform_3, window_bounds = array<i64: 16, 64>}]} {
    %c0 = arith.constant 0 : index
    %c0_0 = arith.constant 0 : index
    %0 = vector.load %arg1[%c0, %c0_0] : memref<16x8xf32, #tpu.memory_space<vmem>>, vector<16x8xf32>
    %c0_1 = arith.constant 0 : index
    %c0_2 = arith.constant 0 : index
    %1 = vector.load %arg2[%c0_1, %c0_2] : memref<8x64xf32, #tpu.memory_space<vmem>>, vector<8x64xf32>
    %cst = arith.constant dense<0.000000e+00> : vector<16x64xf32>
    %2 = tpu.matmul %0, %1, %cst {dimension_numbers = #tpu.dot_dimension_numbers<[1], [0], [0], [1], [0, 0, 1, 1], [], []>} : vector<16x8xf32>, vector<8x64xf32>, vector<16x64xf32> -> vector<16x64xf32>
    %c0_3 = arith.constant 0 : index
    %c0_4 = arith.constant 0 : index
    %3 = vector.load %arg3[%c0_3, %c0_4] : memref<1x64xf32, #tpu.memory_space<vmem>>, vector<1x64xf32>
    %4 = vector.broadcast %3 : vector<1x64xf32> to vector<16x64xf32>
    %5 = arith.addf %2, %4 : vector<16x64xf32>
    %c0_5 = arith.constant 0 : index
    %c0_6 = arith.constant 0 : index
    %6 = vector.load %arg4[%c0_5, %c0_6] : memref<16x64xf32, #tpu.memory_space<vmem>>, vector<16x64xf32>
    tpu.vector_store %arg4[%c0_5, %c0_6], %5 {strides = array<i32>} : memref<16x64xf32, #tpu.memory_space<vmem>>, vector<16x64xf32>,
    return
  }
  func.func @transform_0(%arg0: i32) -> (i32, i32) {
    %c0_i32 = arith.constant 0 : i32
    %c0_i32_0 = arith.constant 0 : i32
    return %arg0, %c0_i32 : i32, i32
  }
  func.func @transform_1(%arg0: i32) -> (i32, i32) {
    %c0_i32 = arith.constant 0 : i32
    %c0_i32_0 = arith.constant 0 : i32
    %c0_i32_1 = arith.constant 0 : i32
    return %c0_i32, %c0_i32_0 : i32, i32
  }
  func.func @transform_2(%arg0: i32) -> (i32, i32) {
    %c0_i32 = arith.constant 0 : i32
    %c0_i32_0 = arith.constant 0 : i32
    %c0_i32_1 = arith.constant 0 : i32
    return %c0_i32, %c0_i32_0 : i32, i32
  }
  func.func @transform_3(%arg0: i32) -> (i32, i32) {
    %c0_i32 = arith.constant 0 : i32
    %c0_i32_0 = arith.constant 0 : i32
    return %arg0, %c0_i32 : i32, i32
  }
}

module attributes {stable_mosaic.version = 11 : i64} {
  func.func @_ctc_kernel(%arg0: i32, %arg1: memref<8x16xf32, #tpu.memory_space<vmem>>, %arg2: memref<16x11xf32, #tpu.memory_space<vmem>>, %arg3: memref<1x11xf32, #tpu.memory_space<vmem>>, %arg4: memref<8x11xf32, #tpu.memory_space<vmem>>) attributes {dimension_semantics = [#tpu.dimension_semantics<parallel>], iteration_bounds = array<i64: 1>, scalar_prefetch = 0 : i64, scratch_operands = 0 : i64, tpu.core_type = #tpu.core_type<tc>, window_params = [{transform_indices = @transform_0, window_bounds = array<i64: 8, 16>}, {pipeline_mode = #tpu.pipeline_mode<synchronous>, transform_indices = @transform_1, window_bounds = array<i64: 16, 11>}, {pipeline_mode = #tpu.pipeline_mode<synchronous>, transform_indices = @transform_2, window_bounds = array<i64: 1, 11>}, {transform_indices = @transform_3, window_bounds = array<i64: 8, 11>}]} {
    %c0 = arith.constant 0 : index
    %c0_0 = arith.constant 0 : index
    %0 = vector.load %arg1[%c0, %c0_0] : memref<8x16xf32, #tpu.memory_space<vmem>>, vector<8x16xf32>
    %c0_1 = arith.constant 0 : index
    %c0_2 = arith.constant 0 : index
    %1 = vector.load %arg2[%c0_1, %c0_2] : memref<16x11xf32, #tpu.memory_space<vmem>>, vector<16x11xf32>
    %cst = arith.constant dense<0.000000e+00> : vector<8x11xf32>
    %2 = tpu.matmul %0, %1, %cst {dimension_numbers = #tpu.dot_dimension_numbers<[1], [0], [0], [1], [0, 0, 1, 1], [], []>} : vector<8x16xf32>, vector<16x11xf32>, vector<8x11xf32> -> vector<8x11xf32>
    %c0_3 = arith.constant 0 : index
    %c0_4 = arith.constant 0 : index
    %3 = vector.load %arg3[%c0_3, %c0_4] : memref<1x11xf32, #tpu.memory_space<vmem>>, vector<1x11xf32>
    %4 = vector.broadcast %3 : vector<1x11xf32> to vector<8x11xf32>
    %5 = arith.addf %2, %4 : vector<8x11xf32>
    %cst_5 = arith.constant dense<0xFF800000> : vector<8xf32>
    %6 = vector.multi_reduction <maximumf>, %5, %cst_5 [1] : vector<8x11xf32> to vector<8xf32>
    %7 = vector.shape_cast %6 : vector<8xf32> to vector<8x1xf32>
    %8 = vector.broadcast %7 : vector<8x1xf32> to vector<8x11xf32>
    %9 = arith.subf %5, %8 : vector<8x11xf32>
    %10 = math.exp %9 : vector<8x11xf32>
    %cst_6 = arith.constant dense<0.000000e+00> : vector<8xf32>
    %11 = vector.multi_reduction <add>, %10, %cst_6 [1] : vector<8x11xf32> to vector<8xf32>
    %12 = vector.shape_cast %11 : vector<8xf32> to vector<8x1xf32>
    %13 = math.log %12 : vector<8x1xf32>
    %14 = vector.broadcast %13 : vector<8x1xf32> to vector<8x11xf32>
    %15 = arith.subf %9, %14 : vector<8x11xf32>
    %c0_7 = arith.constant 0 : index
    %c0_8 = arith.constant 0 : index
    %16 = vector.load %arg4[%c0_7, %c0_8] : memref<8x11xf32, #tpu.memory_space<vmem>>, vector<8x11xf32>
    tpu.vector_store %arg4[%c0_7, %c0_8], %15 {strides = array<i32>} : memref<8x11xf32, #tpu.memory_space<vmem>>, vector<8x11xf32>,
    return
  }
  func.func @transform_0(%arg0: i32) -> (i32, i32) {
    %c0_i32 = arith.constant 0 : i32
    %c0_i32_0 = arith.constant 0 : i32
    return %arg0, %c0_i32 : i32, i32
  }
  func.func @transform_1(%arg0: i32) -> (i32, i32) {
    %c0_i32 = arith.constant 0 : i32
    %c0_i32_0 = arith.constant 0 : i32
    %c0_i32_1 = arith.constant 0 : i32
    return %c0_i32, %c0_i32_0 : i32, i32
  }
  func.func @transform_2(%arg0: i32) -> (i32, i32) {
    %c0_i32 = arith.constant 0 : i32
    %c0_i32_0 = arith.constant 0 : i32
    %c0_i32_1 = arith.constant 0 : i32
    return %c0_i32, %c0_i32_0 : i32, i32
  }
  func.func @transform_3(%arg0: i32) -> (i32, i32) {
    %c0_i32 = arith.constant 0 : i32
    %c0_i32_0 = arith.constant 0 : i32
    return %arg0, %c0_i32 : i32, i32
  }
}

module attributes {stable_mosaic.version = 11 : i64} {
  func.func @_joint_kernel(%arg0: i32, %arg1: memref<1x3x16xf32, #tpu.memory_space<vmem>>, %arg2: memref<1x7x16xf32, #tpu.memory_space<vmem>>, %arg3: memref<16x16xf32, #tpu.memory_space<vmem>>, %arg4: memref<1x16xf32, #tpu.memory_space<vmem>>, %arg5: memref<16x16xf32, #tpu.memory_space<vmem>>, %arg6: memref<1x16xf32, #tpu.memory_space<vmem>>, %arg7: memref<16x11xf32, #tpu.memory_space<vmem>>, %arg8: memref<1x11xf32, #tpu.memory_space<vmem>>, %arg9: memref<1x3x7x11xf32, #tpu.memory_space<vmem>>) attributes {dimension_semantics = [#tpu.dimension_semantics<parallel>], iteration_bounds = array<i64: 2>, scalar_prefetch = 0 : i64, scratch_operands = 0 : i64, tpu.core_type = #tpu.core_type<tc>, window_params = [{transform_indices = @transform_0, window_bounds = array<i64: 1, 3, 16>}, {transform_indices = @transform_1, window_bounds = array<i64: 1, 7, 16>}, {pipeline_mode = #tpu.pipeline_mode<synchronous>, transform_indices = @transform_2, window_bounds = array<i64: 16, 16>}, {pipeline_mode = #tpu.pipeline_mode<synchronous>, transform_indices = @transform_3, window_bounds = array<i64: 1, 16>}, {pipeline_mode = #tpu.pipeline_mode<synchronous>, transform_indices = @transform_4, window_bounds = array<i64: 16, 16>}, {pipeline_mode = #tpu.pipeline_mode<synchronous>, transform_indices = @transform_5, window_bounds = array<i64: 1, 16>}, {pipeline_mode = #tpu.pipeline_mode<synchronous>, transform_indices = @transform_6, window_bounds = array<i64: 16, 11>}, {pipeline_mode = #tpu.pipeline_mode<synchronous>, transform_indices = @transform_7, window_bounds = array<i64: 1, 11>}, {transform_indices = @transform_8, window_bounds = array<i64: 1, 3, 7, 11>}]} {
    %c0 = arith.constant 0 : index
    %c0_0 = arith.constant 0 : index
    %c0_1 = arith.constant 0 : index
    %0 = vector.load %arg1[%c0, %c0_0, %c0_1] : memref<1x3x16xf32, #tpu.memory_space<vmem>>, vector<1x3x16xf32>
    %1 = vector.shape_cast %0 : vector<1x3x16xf32> to vector<3x16xf32>
    %c0_2 = arith.constant 0 : index
    %c0_3 = arith.constant 0 : index
    %c0_4 = arith.constant 0 : index
    %2 = vector.load %arg2[%c0_2, %c0_3, %c0_4] : memref<1x7x16xf32, #tpu.memory_space<vmem>>, vector<1x7x16xf32>
    %3 = vector.shape_cast %2 : vector<1x7x16xf32> to vector<7x16xf32>
    %c0_5 = arith.constant 0 : index
    %c0_6 = arith.constant 0 : index
    %4 = vector.load %arg3[%c0_5, %c0_6] : memref<16x16xf32, #tpu.memory_space<vmem>>, vector<16x16xf32>
    %cst = arith.constant dense<0.000000e+00> : vector<3x16xf32>
    %5 = tpu.matmul %1, %4, %cst {dimension_numbers = #tpu.dot_dimension_numbers<[1], [0], [0], [1], [0, 0, 1, 1], [], []>} : vector<3x16xf32>, vector<16x16xf32>, vector<3x16xf32> -> vector<3x16xf32>
    %c0_7 = arith.constant 0 : index
    %c0_8 = arith.constant 0 : index
    %6 = vector.load %arg4[%c0_7, %c0_8] : memref<1x16xf32, #tpu.memory_space<vmem>>, vector<1x16xf32>
    %7 = vector.broadcast %6 : vector<1x16xf32> to vector<3x16xf32>
    %8 = arith.addf %5, %7 : vector<3x16xf32>
    %c0_9 = arith.constant 0 : index
    %c0_10 = arith.constant 0 : index
    %9 = vector.load %arg5[%c0_9, %c0_10] : memref<16x16xf32, #tpu.memory_space<vmem>>, vector<16x16xf32>
    %cst_11 = arith.constant dense<0.000000e+00> : vector<7x16xf32>
    %10 = tpu.matmul %3, %9, %cst_11 {dimension_numbers = #tpu.dot_dimension_numbers<[1], [0], [0], [1], [0, 0, 1, 1], [], []>} : vector<7x16xf32>, vector<16x16xf32>, vector<7x16xf32> -> vector<7x16xf32>
    %c0_12 = arith.constant 0 : index
    %c0_13 = arith.constant 0 : index
    %11 = vector.load %arg6[%c0_12, %c0_13] : memref<1x16xf32, #tpu.memory_space<vmem>>, vector<1x16xf32>
    %12 = vector.broadcast %11 : vector<1x16xf32> to vector<7x16xf32>
    %13 = arith.addf %10, %12 : vector<7x16xf32>
    %14 = vector.shape_cast %8 : vector<3x16xf32> to vector<3x1x16xf32>
    %15 = vector.shape_cast %13 : vector<7x16xf32> to vector<1x7x16xf32>
    %16 = vector.broadcast %14 : vector<3x1x16xf32> to vector<3x7x16xf32>
    %17 = vector.broadcast %15 : vector<1x7x16xf32> to vector<3x7x16xf32>
    %18 = arith.addf %16, %17 : vector<3x7x16xf32>
    %19 = math.tanh %18 : vector<3x7x16xf32>
    %20 = vector.shape_cast %19 : vector<3x7x16xf32> to vector<21x16xf32>
    %c0_14 = arith.constant 0 : index
    %c0_15 = arith.constant 0 : index
    %21 = vector.load %arg7[%c0_14, %c0_15] : memref<16x11xf32, #tpu.memory_space<vmem>>, vector<16x11xf32>
    %cst_16 = arith.constant dense<0.000000e+00> : vector<21x11xf32>
    %22 = tpu.matmul %20, %21, %cst_16 {dimension_numbers = #tpu.dot_dimension_numbers<[1], [0], [0], [1], [0, 0, 1, 1], [], []>} : vector<21x16xf32>, vector<16x11xf32>, vector<21x11xf32> -> vector<21x11xf32>
    %c0_17 = arith.constant 0 : index
    %c0_18 = arith.constant 0 : index
    %23 = vector.load %arg8[%c0_17, %c0_18] : memref<1x11xf32, #tpu.memory_space<vmem>>, vector<1x11xf32>
    %24 = vector.broadcast %23 : vector<1x11xf32> to vector<21x11xf32>
    %25 = arith.addf %22, %24 : vector<21x11xf32>
    %26 = vector.shape_cast %25 : vector<21x11xf32> to vector<3x7x11xf32>
    %c0_19 = arith.constant 0 : index
    %c0_20 = arith.constant 0 : index
    %c0_21 = arith.constant 0 : index
    %c0_22 = arith.constant 0 : index
    %27 = vector.load %arg9[%c0_19, %c0_20, %c0_21, %c0_22] : memref<1x3x7x11xf32, #tpu.memory_space<vmem>>, vector<1x3x7x11xf32>
    %28 = vector.shape_cast %27 : vector<1x3x7x11xf32> to vector<3x7x11xf32>
    %29 = vector.shape_cast %26 : vector<3x7x11xf32> to vector<1x3x7x11xf32>
    tpu.vector_store %arg9[%c0_19, %c0_20, %c0_21, %c0_22], %29 {strides = array<i32>} : memref<1x3x7x11xf32, #tpu.memory_space<vmem>>, vector<1x3x7x11xf32>,
    return
  }
  func.func @transform_0(%arg0: i32) -> (i32, i32, i32) {
    %c0_i32 = arith.constant 0 : i32
    %c0_i32_0 = arith.constant 0 : i32
    %c0_i32_1 = arith.constant 0 : i32
    return %arg0, %c0_i32, %c0_i32_0 : i32, i32, i32
  }
  func.func @transform_1(%arg0: i32) -> (i32, i32, i32) {
    %c0_i32 = arith.constant 0 : i32
    %c0_i32_0 = arith.constant 0 : i32
    %c0_i32_1 = arith.constant 0 : i32
    return %arg0, %c0_i32, %c0_i32_0 : i32, i32, i32
  }
  func.func @transform_2(%arg0: i32) -> (i32, i32) {
    %c0_i32 = arith.constant 0 : i32
    %c0_i32_0 = arith.constant 0 : i32
    %c0_i32_1 = arith.constant 0 : i32
    return %c0_i32, %c0_i32_0 : i32, i32
  }
  func.func @transform_3(%arg0: i32) -> (i32, i32) {
    %c0_i32 = arith.constant 0 : i32
    %c0_i32_0 = arith.constant 0 : i32
    %c0_i32_1 = arith.constant 0 : i32
    return %c0_i32, %c0_i32_0 : i32, i32
  }
  func.func @transform_4(%arg0: i32) -> (i32, i32) {
    %c0_i32 = arith.constant 0 : i32
    %c0_i32_0 = arith.constant 0 : i32
    %c0_i32_1 = arith.constant 0 : i32
    return %c0_i32, %c0_i32_0 : i32, i32
  }
  func.func @transform_5(%arg0: i32) -> (i32, i32) {
    %c0_i32 = arith.constant 0 : i32
    %c0_i32_0 = arith.constant 0 : i32
    %c0_i32_1 = arith.constant 0 : i32
    return %c0_i32, %c0_i32_0 : i32, i32
  }
  func.func @transform_6(%arg0: i32) -> (i32, i32) {
    %c0_i32 = arith.constant 0 : i32
    %c0_i32_0 = arith.constant 0 : i32
    %c0_i32_1 = arith.constant 0 : i32
    return %c0_i32, %c0_i32_0 : i32, i32
  }
  func.func @transform_7(%arg0: i32) -> (i32, i32) {
    %c0_i32 = arith.constant 0 : i32
    %c0_i32_0 = arith.constant 0 : i32
    %c0_i32_1 = arith.constant 0 : i32
    return %c0_i32, %c0_i32_0 : i32, i32
  }
  func.func @transform_8(%arg0: i32) -> (i32, i32, i32, i32) {
    %c0_i32 = arith.constant 0 : i32
    %c0_i32_0 = arith.constant 0 : i32
    %c0_i32_1 = arith.constant 0 : i32
    %c0_i32_2 = arith.constant 0 : i32
    return %arg0, %c0_i32, %c0_i32_0, %c0_i32_1 : i32, i32, i32, i32
  }
}

</mosaic_0001>

<llo_original>
// kernel: model_forward.14
$region0: #{model_forward.14}
  #allocation0 [shape = 'u32[]', space=smem, size = 0x4, offset = 0x4, fixed_abs, tag = 'smem constant byte address 0x4 - core index']
  #allocation1 [shape = 'u32[144,128]{1,0:T(1,128)}', space=vmem, size = 0x12000, scoped, tag = 'internal scratch']
  %s0 = inlined_call_operand.vmem [shape: f32[104,9], index: 0, kind: input, shape index: {}]
  %s1 = inlined_call_operand.vmem [shape: f32[9,16], index: 1, kind: input, shape index: {}]
  %s2 = inlined_call_operand.vmem [shape: f32[1,16], index: 2, kind: input, shape index: {}]
  %s3 = inlined_call_operand.vmem [shape: f32[104,16], index: 3, kind: output, shape index: {}]
  %s4 = sld [smem:[#allocation0]]
  $region22: #{model_forward.14} parent=0
    _
  %s6 = ssub.s32 1, %s4
  %s7 = scalar_select 0, %s6, %s4
  // Predicated region
  $region2: #{model_forward.14} parent=0 // pred_check
    _
  $region3: #{model_forward.14} parent=0 // pred_check_branch
    %9 = sbr.rel (0) target = $region5
  $region4: #{model_forward.14} parent=0 // pred_region
    _
  $region5: #{model_forward.14} parent=0 // pred_fallthru
    _
  // Predicated region
  $region6: #{model_forward.14} parent=0 // pred_check
    _
  $region7: #{model_forward.14} parent=0 // pred_check_branch
    %11 = sbr.rel (0) target = $region9
  $region8: #{model_forward.14} parent=0 // pred_region
    _
  $region9: #{model_forward.14} parent=0 // pred_fallthru
    _
  // Predicated region
  $region10: #{model_forward.14} parent=0 // pred_check
    _
  $region11: #{model_forward.14} parent=0 // pred_check_branch
    %13 = sbr.rel (0) target = $region13
  $region12: #{model_forward.14} parent=0 // pred_region
    _
  $region13: #{model_forward.14} parent=0 // pred_fallthru
    _
  %v14 = vld [vmem:[%s0] sm:$0xff]
  %v15 = vld [vmem:[%s0 + $0x8] sm:$0xff]
  %v16 = vld [vmem:[%s0 + $0x10] sm:$0xff]
  %v17 = vld [vmem:[%s0 + $0x18] sm:$0xff]
  %v18 = vld [vmem:[%s0 + $0x20] sm:$0xff]
  %v19 = vld [vmem:[%s0 + $0x28] sm:$0xff]
  %v20 = vld [vmem:[%s0 + $0x30] sm:$0xff]
  %v21 = vld [vmem:[%s0 + $0x38] sm:$0xff]
  %v22 = vld [vmem:[%s0 + $0x40] sm:$0xff]
  %v23 = vld [vmem:[%s0 + $0x48] sm:$0xff]
  %v24 = vld [vmem:[%s0 + $0x50] sm:$0xff]
  %v25 = vld [vmem:[%s0 + $0x58] sm:$0xff]
  %v26 = vld [vmem:[%s0 + $0x60] sm:$0xff]
  %v27 = vld [vmem:[%s1] sm:$0xff]
  %v28 = vld [vmem:[%s1 + $0x8] sm:$0x1]
  %v29 = vld [vmem:[%s2] sm:$0x1]
  %v31 = vlaneseq
  %v32 = vshrl.u32 %v31, 7
  %v33 = vsub.s32 0, %v32
  %v34 = vrot.slane %v29, %v33
  %vm36 = vcmask 72704
  %v38 = vsel %vm36, %v14, 0
  %v41 = vsel %vm36, %v15, 0
  %v44 = vsel %vm36, %v16, 0
  %v47 = vsel %vm36, %v17, 0
  %v50 = vsel %vm36, %v18, 0
  %v53 = vsel %vm36, %v19, 0
  %v56 = vsel %vm36, %v20, 0
  %v59 = vsel %vm36, %v21, 0
  %v62 = vsel %vm36, %v22, 0
  %v65 = vsel %vm36, %v23, 0
  %v68 = vsel %vm36, %v24, 0
  %v71 = vsel %vm36, %v25, 0
  %v74 = vsel %vm36, %v26, 0
  %vm76 = vcmask 1040384
  %v78 = vsel %vm76, %v28, 0
  %80 = vmatprep.subr.mxu0 0.0
  %81 = vmatpush1.msra.mxu0 %v27
  %82 = vmatprep.subr.mxu0 0.0
  %83 = vmatpush1.msra.mxu0 %v78
  %84 = vmatprep.subr.mxu0 0.0
  %85 = vmatpush1.msra.mxu0 0.0
  %86 = vmatprep.subr.mxu0 0.0
  %87 = vmatpush1.msra.mxu0 0.0
  %88 = vmatprep.subr.mxu0 0.0
  %89 = vmatpush1.msra.mxu0 0.0
  %90 = vmatprep.subr.mxu0 0.0
  %91 = vmatpush1.msra.mxu0 0.0
  %92 = vmatprep.subr.mxu0 0.0
  %93 = vmatpush1.msra.mxu0 0.0
  %94 = vmatprep.subr.mxu0 0.0
  %95 = vmatpush1.msra.mxu0 0.0
  %96 = vmatprep.subr.mxu0 0.0
  %97 = vmatpush1.msra.mxu0 0.0
  %98 = vmatprep.subr.mxu0 0.0
  %99 = vmatpush1.msra.mxu0 0.0
  %100 = vmatprep.subr.mxu0 0.0
  %101 = vmatpush1.msra.mxu0 0.0
  %102 = vmatprep.subr.mxu0 0.0
  %103 = vmatpush1.msra.mxu0 0.0
  %104 = vmatprep.subr.mxu0 0.0
  %105 = vmatpush1.msra.mxu0 0.0
  %106 = vmatprep.subr.mxu0 0.0
  %107 = vmatpush1.msra.mxu0 0.0
  %108 = vmatprep.subr.mxu0 0.0
  %109 = vmatpush1.msra.mxu0 0.0
  %110 = vmatprep.subr.mxu0 0.0
  %111 = vmatpush1.msra.mxu0 0.0
  %112 = vmatprep.subr.mxu0 0.0
  %113 = vmatpush1.msra.mxu0 0.0
  %114 = vmatprep.subr.mxu0 0.0
  %115 = vmatpush1.msra.mxu0 0.0
  %116 = vmatprep.subr.mxu0 0.0
  %117 = vmatpush1.msra.mxu0 0.0
  %118 = vmatprep.subr.mxu0 0.0
  %119 = vmatpush1.msra.mxu0 0.0
  %120 = vmatprep.subr.mxu0 0.0
  %121 = vmatpush1.msra.mxu0 0.0
  %122 = vmatprep.subr.mxu0 0.0
  %123 = vmatpush1.msra.mxu0 0.0
  %124 = vmatprep.subr.mxu0 0.0
  %125 = vmatpush1.msra.mxu0 0.0
  %126 = vmatprep.subr.mxu0 0.0
  %127 = vmatpush1.msra.mxu0 0.0
  %128 = vmatprep.subr.mxu0 0.0
  %129 = vmatpush1.msra.mxu0 0.0
  %130 = vmatprep.subr.mxu0 0.0
  %131 = vmatpush1.msra.mxu0 0.0
  %132 = vmatprep.subr.mxu0 0.0
  %133 = vmatpush1.msra.mxu0 0.0
  %134 = vmatprep.subr.mxu0 0.0
  %135 = vmatpush1.msra.mxu0 0.0
  %136 = vmatprep.subr.mxu0 0.0
  %137 = vmatpush1.msra.mxu0 0.0
  %138 = vmatprep.subr.mxu0 0.0
  %139 = vmatpush1.msra.mxu0 0.0
  %140 = vmatprep.subr.mxu0 0.0
  %141 = vmatpush1.msra.mxu0 0.0
  %142 = vmatprep.subr.mxu0 0.0
  %143 = vmatpush1.msra.mxu0 0.0
  %144 = vmatprep.mubr.f32.mxu0 0.0
  %145 = vmatmul.mubr.f32.gmra.mrb[0].mxu0 %v38
  %v146 = vpop.f32.mrb[0].mxu0
  %v147 = vadd.f32 %v34, %v146
  %v148 = vpop.f32.mrb[0].mxu0
  %149 = vmatprep.mubr.f32.mxu0 0.0
  %150 = vmatmul.mubr.f32.gmra.mrb[0].mxu0 %v41
  %v151 = vpop.f32.mrb[0].mxu0
  %v152 = vadd.f32 %v34, %v151
  %v153 = vpop.f32.mrb[0].mxu0
  %154 = vmatprep.mubr.f32.mxu0 0.0
  %155 = vmatmul.mubr.f32.gmra.mrb[0].mxu0 %v44
  %v156 = vpop.f32.mrb[0].mxu0
  %v157 = vadd.f32 %v34, %v156
  %v158 = vpop.f32.mrb[0].mxu0
  %159 = vmatprep.mubr.f32.mxu0 0.0
  %160 = vmatmul.mubr.f32.gmra.mrb[0].mxu0 %v47
  %v161 = vpop.f32.mrb[0].mxu0
  %v162 = vadd.f32 %v34, %v161
  %v163 = vpop.f32.mrb[0].mxu0
  %164 = vmatprep.mubr.f32.mxu0 0.0
  %165 = vmatmul.mubr.f32.gmra.mrb[0].mxu0 %v50
  %v166 = vpop.f32.mrb[0].mxu0
  %v167 = vadd.f32 %v34, %v166
  %v168 = vpop.f32.mrb[0].mxu0
  %169 = vmatprep.mubr.f32.mxu0 0.0
  %170 = vmatmul.mubr.f32.gmra.mrb[0].mxu0 %v53
  %v171 = vpop.f32.mrb[0].mxu0
  %v172 = vadd.f32 %v34, %v171
  %v173 = vpop.f32.mrb[0].mxu0
  %174 = vmatprep.mubr.f32.mxu0 0.0
  %175 = vmatmul.mubr.f32.gmra.mrb[0].mxu0 %v56
  %v176 = vpop.f32.mrb[0].mxu0
  %v177 = vadd.f32 %v34, %v176
  %v178 = vpop.f32.mrb[0].mxu0
  %179 = vmatprep.mubr.f32.mxu0 0.0
  %180 = vmatmul.mubr.f32.gmra.mrb[0].mxu0 %v59
  %v181 = vpop.f32.mrb[0].mxu0
  %v182 = vadd.f32 %v34, %v181
  %v183 = vpop.f32.mrb[0].mxu0
  %184 = vmatprep.mubr.f32.mxu0 0.0
  %185 = vmatmul.mubr.f32.gmra.mrb[0].mxu0 %v62
  %v186 = vpop.f32.mrb[0].mxu0
  %v187 = vadd.f32 %v34, %v186
  %v188 = vpop.f32.mrb[0].mxu0
  %189 = vmatprep.mubr.f32.mxu0 0.0
  %190 = vmatmul.mubr.f32.gmra.mrb[0].mxu0 %v65
  %v191 = vpop.f32.mrb[0].mxu0
  %v192 = vadd.f32 %v34, %v191
  %v193 = vpop.f32.mrb[0].mxu0
  %194 = vmatprep.mubr.f32.mxu0 0.0
  %195 = vmatmul.mubr.f32.gmra.mrb[0].mxu0 %v68
  %v196 = vpop.f32.mrb[0].mxu0
  %v197 = vadd.f32 %v34, %v196
  %v198 = vpop.f32.mrb[0].mxu0
  %199 = vmatprep.mubr.f32.mxu0 0.0
  %200 = vmatmul.mubr.f32.gmra.mrb[0].mxu0 %v71
  %v201 = vpop.f32.mrb[0].mxu0
  %v202 = vadd.f32 %v34, %v201
  %v203 = vpop.f32.mrb[0].mxu0
  %204 = vmatprep.mubr.f32.mxu0 0.0
  %205 = vmatmul.mubr.f32.gmra.mrb[0].mxu0 %v74
  %v206 = vpop.f32.mrb[0].mxu0
  %v207 = vadd.f32 %v34, %v206
  %v208 = vpop.f32.mrb[0].mxu0
  %209 = vdwg.mxu0
  %v210 = vmax.f32 %v147, 0.0
  %v211 = vmax.f32 %v152, 0.0
  %v212 = vmax.f32 %v157, 0.0
  %v213 = vmax.f32 %v162, 0.0
  %v214 = vmax.f32 %v167, 0.0
  %v215 = vmax.f32 %v172, 0.0
  %v216 = vmax.f32 %v177, 0.0
  %v217 = vmax.f32 %v182, 0.0
  %v218 = vmax.f32 %v187, 0.0
  %v219 = vmax.f32 %v192, 0.0
  %v220 = vmax.f32 %v197, 0.0
  %v221 = vmax.f32 %v202, 0.0
  %v222 = vmax.f32 %v207, 0.0
  %vm223 = vcmask 130048
  %224 = vst.msk [vmem:[%s3] sm:$0xff] %vm223, %v210
  %225 = vst.msk [vmem:[%s3 + $0x8] sm:$0xff] %vm223, %v211
  %226 = vst.msk [vmem:[%s3 + $0x10] sm:$0xff] %vm223, %v212
  %227 = vst.msk [vmem:[%s3 + $0x18] sm:$0xff] %vm223, %v213
  %228 = vst.msk [vmem:[%s3 + $0x20] sm:$0xff] %vm223, %v214
  %229 = vst.msk [vmem:[%s3 + $0x28] sm:$0xff] %vm223, %v215
  %230 = vst.msk [vmem:[%s3 + $0x30] sm:$0xff] %vm223, %v216
  %231 = vst.msk [vmem:[%s3 + $0x38] sm:$0xff] %vm223, %v217
  %232 = vst.msk [vmem:[%s3 + $0x40] sm:$0xff] %vm223, %v218
  %233 = vst.msk [vmem:[%s3 + $0x48] sm:$0xff] %vm223, %v219
  %234 = vst.msk [vmem:[%s3 + $0x50] sm:$0xff] %vm223, %v220
  %235 = vst.msk [vmem:[%s3 + $0x58] sm:$0xff] %vm223, %v221
  %236 = vst.msk [vmem:[%s3 + $0x60] sm:$0xff] %vm223, %v222
  // Predicated region
  $region14: #{model_forward.14} parent=0 // pred_check
    _
  $region15: #{model_forward.14} parent=0 // pred_check_branch
    %238 = sbr.rel (0) target = $region17
  $region16: #{model_forward.14} parent=0 // pred_region
    _
  $region17: #{model_forward.14} parent=0 // pred_fallthru
    _
  // Predicated region
  $region18: #{model_forward.14} parent=0 // pred_check
    _
  $region19: #{model_forward.14} parent=0 // pred_check_branch
    %240 = sbr.rel (0) target = $region21
  $region20: #{model_forward.14} parent=0 // pred_region
    _
  $region21: #{model_forward.14} parent=0 // pred_fallthru
    _

// kernel: model_forward.15
$region0: #{model_forward.15}
  #allocation0 [shape = 'u32[]', space=smem, size = 0x4, offset = 0x4, fixed_abs, tag = 'smem constant byte address 0x4 - core index']
  #allocation1 [shape = 'u32[144,128]{1,0:T(1,128)}', space=vmem, size = 0x12000, scoped, tag = 'internal scratch']
  %s0 = inlined_call_operand.vmem [shape: f32[24,144], index: 0, kind: input, shape index: {}]
  %s1 = inlined_call_operand.vmem [shape: f32[144,16], index: 1, kind: input, shape index: {}]
  %s2 = inlined_call_operand.vmem [shape: f32[1,16], index: 2, kind: input, shape index: {}]
  %s3 = inlined_call_operand.vmem [shape: f32[24,16], index: 3, kind: output, shape index: {}]
  %s4 = sld [smem:[#allocation0]]
  $region22: #{model_forward.15} parent=0
    _
  %s6 = ssub.s32 1, %s4
  %s7 = scalar_select 0, %s6, %s4
  // Predicated region
  $region2: #{model_forward.15} parent=0 // pred_check
    _
  $region3: #{model_forward.15} parent=0 // pred_check_branch
    %9 = sbr.rel (0) target = $region5
  $region4: #{model_forward.15} parent=0 // pred_region
    _
  $region5: #{model_forward.15} parent=0 // pred_fallthru
    _
  // Predicated region
  $region6: #{model_forward.15} parent=0 // pred_check
    _
  $region7: #{model_forward.15} parent=0 // pred_check_branch
    %11 = sbr.rel (0) target = $region9
  $region8: #{model_forward.15} parent=0 // pred_region
    _
  $region9: #{model_forward.15} parent=0 // pred_fallthru
    _
  // Predicated region
  $region10: #{model_forward.15} parent=0 // pred_check
    _
  $region11: #{model_forward.15} parent=0 // pred_check_branch
    %13 = sbr.rel (0) target = $region13
  $region12: #{model_forward.15} parent=0 // pred_region
    _
  $region13: #{model_forward.15} parent=0 // pred_fallthru
    _
  %v14 = vld [vmem:[%s0] sm:$0xff]
  %v15 = vld [vmem:[%s0 + $0x8] sm:$0xff]
  %v16 = vld [vmem:[%s0 + $0x10] sm:$0xff]
  %v17 = vld [vmem:[%s0 + $0x18] sm:$0xff]
  %v18 = vld [vmem:[%s0 + $0x20] sm:$0xff]
  %v19 = vld [vmem:[%s0 + $0x28] sm:$0xff]
  %v20 = vld [vmem:[%s1] sm:$0xff]
  %v21 = vld [vmem:[%s1 + $0x8] sm:$0xff]
  %v22 = vld [vmem:[%s1 + $0x10] sm:$0xff]
  %v23 = vld [vmem:[%s1 + $0x18] sm:$0xff]
  %v24 = vld [vmem:[%s1 + $0x20] sm:$0xff]
  %v25 = vld [vmem:[%s1 + $0x28] sm:$0xff]
  %v26 = vld [vmem:[%s1 + $0x30] sm:$0xff]
  %v27 = vld [vmem:[%s1 + $0x38] sm:$0xff]
  %v28 = vld [vmem:[%s1 + $0x40] sm:$0xff]
  %v29 = vld [vmem:[%s1 + $0x48] sm:$0xff]
  %v30 = vld [vmem:[%s1 + $0x50] sm:$0xff]
  %v31 = vld [vmem:[%s1 + $0x58] sm:$0xff]
  %v32 = vld [vmem:[%s1 + $0x60] sm:$0xff]
  %v33 = vld [vmem:[%s1 + $0x68] sm:$0xff]
  %v34 = vld [vmem:[%s1 + $0x70] sm:$0xff]
  %v35 = vld [vmem:[%s1 + $0x78] sm:$0xff]
  %v36 = vld [vmem:[%s1 + $0x80] sm:$0xff]
  %v37 = vld [vmem:[%s1 + $0x88] sm:$0xff]
  %v38 = vld [vmem:[%s2] sm:$0x1]
  %v40 = vlaneseq
  %v41 = vshrl.u32 %v40, 7
  %v42 = vsub.s32 0, %v41
  %v43 = vrot.slane %v38, %v42
  %vm45 = vcmask 130048
  %v47 = vsel %vm45, %v15, 0
  %v50 = vsel %vm45, %v17, 0
  %v53 = vsel %vm45, %v19, 0
  %55 = vmatprep.subr.mxu0 0.0
  %56 = vmatpush1.msra.mxu0 %v20
  %57 = vmatprep.subr.mxu0 0.0
  %58 = vmatpush1.msra.mxu0 %v21
  %59 = vmatprep.subr.mxu0 0.0
  %60 = vmatpush1.msra.mxu0 %v22
  %61 = vmatprep.subr.mxu0 0.0
  %62 = vmatpush1.msra.mxu0 %v23
  %63 = vmatprep.subr.mxu0 0.0
  %64 = vmatpush1.msra.mxu0 %v24
  %65 = vmatprep.subr.mxu0 0.0
  %66 = vmatpush1.msra.mxu0 %v25
  %67 = vmatprep.subr.mxu0 0.0
  %68 = vmatpush1.msra.mxu0 %v26
  %69 = vmatprep.subr.mxu0 0.0
  %70 = vmatpush1.msra.mxu0 %v27
  %71 = vmatprep.subr.mxu0 0.0
  %72 = vmatpush1.msra.mxu0 %v28
  %73 = vmatprep.subr.mxu0 0.0
  %74 = vmatpush1.msra.mxu0 %v29
  %75 = vmatprep.subr.mxu0 0.0
  %76 = vmatpush1.msra.mxu0 %v30
  %77 = vmatprep.subr.mxu0 0.0
  %78 = vmatpush1.msra.mxu0 %v31
  %79 = vmatprep.subr.mxu0 0.0
  %80 = vmatpush1.msra.mxu0 %v32
  %81 = vmatprep.subr.mxu0 0.0
  %82 = vmatpush1.msra.mxu0 %v33
  %83 = vmatprep.subr.mxu0 0.0
  %84 = vmatpush1.msra.mxu0 %v34
  %85 = vmatprep.subr.mxu0 0.0
  %86 = vmatpush1.msra.mxu0 %v35
  %87 = vmatprep.subr.mxu0 0.0
  %88 = vmatpush1.msra.mxu0 %v36
  %89 = vmatprep.subr.mxu0 0.0
  %90 = vmatpush1.msra.mxu0 %v37
  %91 = vmatprep.subr.mxu0 0.0
  %92 = vmatpush1.msra.mxu0 0.0
  %93 = vmatprep.subr.mxu0 0.0
  %94 = vmatpush1.msra.mxu0 0.0
  %95 = vmatprep.subr.mxu0 0.0
  %96 = vmatpush1.msra.mxu0 0.0
  %97 = vmatprep.subr.mxu0 0.0
  %98 = vmatpush1.msra.mxu0 0.0
  %99 = vmatprep.subr.mxu0 0.0
  %100 = vmatpush1.msra.mxu0 0.0
  %101 = vmatprep.subr.mxu0 0.0
  %102 = vmatpush1.msra.mxu0 0.0
  %103 = vmatprep.subr.mxu0 0.0
  %104 = vmatpush1.msra.mxu0 0.0
  %105 = vmatprep.subr.mxu0 0.0
  %106 = vmatpush1.msra.mxu0 0.0
  %107 = vmatprep.subr.mxu0 0.0
  %108 = vmatpush1.msra.mxu0 0.0
  %109 = vmatprep.subr.mxu0 0.0
  %110 = vmatpush1.msra.mxu0 0.0
  %111 = vmatprep.subr.mxu0 0.0
  %112 = vmatpush1.msra.mxu0 0.0
  %113 = vmatprep.subr.mxu0 0.0
  %114 = vmatpush1.msra.mxu0 0.0
  %115 = vmatprep.subr.mxu0 0.0
  %116 = vmatpush1.msra.mxu0 0.0
  %117 = vmatprep.subr.mxu0 0.0
  %118 = vmatpush1.msra.mxu0 0.0
  %119 = vmatprep.mubr.f32.mxu0 %v47
  %120 = vmatmul.mubr.f32.gmra.mrb[0].mxu0 %v14
  %v121 = vpop.f32.mrb[0].mxu0
  %v122 = vadd.f32 %v43, %v121
  %v123 = vpop.f32.mrb[0].mxu0
  %124 = vmatprep.mubr.f32.mxu0 %v50
  %125 = vmatmul.mubr.f32.gmra.mrb[0].mxu0 %v16
  %v126 = vpop.f32.mrb[0].mxu0
  %v127 = vadd.f32 %v43, %v126
  %v128 = vpop.f32.mrb[0].mxu0
  %129 = vmatprep.mubr.f32.mxu0 %v53
  %130 = vmatmul.mubr.f32.gmra.mrb[0].mxu0 %v18
  %v131 = vpop.f32.mrb[0].mxu0
  %v132 = vadd.f32 %v43, %v131
  %v133 = vpop.f32.mrb[0].mxu0
  %134 = vdwg.mxu0
  %v135 = vmax.f32 %v122, 0.0
  %v136 = vmax.f32 %v127, 0.0
  %v137 = vmax.f32 %v132, 0.0
  %138 = vst.msk [vmem:[%s3] sm:$0xff] %vm45, %v135
  %139 = vst.msk [vmem:[%s3 + $0x8] sm:$0xff] %vm45, %v136
  %140 = vst.msk [vmem:[%s3 + $0x10] sm:$0xff] %vm45, %v137
  // Predicated region
  $region14: #{model_forward.15} parent=0 // pred_check
    _
  $region15: #{model_forward.15} parent=0 // pred_check_branch
    %142 = sbr.rel (0) target = $region17
  $region16: #{model_forward.15} parent=0 // pred_region
    _
  $region17: #{model_forward.15} parent=0 // pred_fallthru
    _
  // Predicated region
  $region18: #{model_forward.15} parent=0 // pred_check
    _
  $region19: #{model_forward.15} parent=0 // pred_check_branch
    %144 = sbr.rel (0) target = $region21
  $region20: #{model_forward.15} parent=0 // pred_region
    _
  $region21: #{model_forward.15} parent=0 // pred_fallthru
    _

// kernel: model_forward.16
$region0: #{model_forward.16}
  #allocation0 [shape = 'u32[]', space=smem, size = 0x4, offset = 0x4, fixed_abs, tag = 'smem constant byte address 0x4 - core index']
  #allocation1 [shape = 'u32[144,128]{1,0:T(1,128)}', space=vmem, size = 0x12000, scoped, tag = 'internal scratch']
  %s0 = inlined_call_operand.vmem [shape: f32[8,48], index: 0, kind: input, shape index: {}]
  %s1 = inlined_call_operand.vmem [shape: f32[48,16], index: 1, kind: input, shape index: {}]
  %s2 = inlined_call_operand.vmem [shape: f32[1,16], index: 2, kind: input, shape index: {}]
  %s3 = inlined_call_operand.vmem [shape: f32[8,16], index: 3, kind: output, shape index: {}]
  %s4 = sld [smem:[#allocation0]]
  $region22: #{model_forward.16} parent=0
    _
  %s6 = ssub.s32 1, %s4
  %s7 = scalar_select 0, %s6, %s4
  // Predicated region
  $region2: #{model_forward.16} parent=0 // pred_check
    _
  $region3: #{model_forward.16} parent=0 // pred_check_branch
    %9 = sbr.rel (0) target = $region5
  $region4: #{model_forward.16} parent=0 // pred_region
    _
  $region5: #{model_forward.16} parent=0 // pred_fallthru
    _
  // Predicated region
  $region6: #{model_forward.16} parent=0 // pred_check
    _
  $region7: #{model_forward.16} parent=0 // pred_check_branch
    %11 = sbr.rel (0) target = $region9
  $region8: #{model_forward.16} parent=0 // pred_region
    _
  $region9: #{model_forward.16} parent=0 // pred_fallthru
    _
  // Predicated region
  $region10: #{model_forward.16} parent=0 // pred_check
    _
  $region11: #{model_forward.16} parent=0 // pred_check_branch
    %13 = sbr.rel (0) target = $region13
  $region12: #{model_forward.16} parent=0 // pred_region
    _
  $region13: #{model_forward.16} parent=0 // pred_fallthru
    _
  %v14 = vld [vmem:[%s0] sm:$0xff]
  %v15 = vld [vmem:[%s1] sm:$0xff]
  %v16 = vld [vmem:[%s1 + $0x8] sm:$0xff]
  %v17 = vld [vmem:[%s1 + $0x10] sm:$0xff]
  %v18 = vld [vmem:[%s1 + $0x18] sm:$0xff]
  %v19 = vld [vmem:[%s1 + $0x20] sm:$0xff]
  %v20 = vld [vmem:[%s1 + $0x28] sm:$0xff]
  %v21 = vld [vmem:[%s2] sm:$0x1]
  %v23 = vlaneseq
  %v24 = vshrl.u32 %v23, 7
  %v25 = vsub.s32 0, %v24
  %v26 = vrot.slane %v21, %v25
  %vm28 = vcmask 392192
  %v30 = vsel %vm28, %v14, 0
  %32 = vmatprep.subr.mxu0 0.0
  %33 = vmatpush1.msra.mxu0 %v15
  %34 = vmatprep.subr.mxu0 0.0
  %35 = vmatpush1.msra.mxu0 %v16
  %36 = vmatprep.subr.mxu0 0.0
  %37 = vmatpush1.msra.mxu0 %v17
  %38 = vmatprep.subr.mxu0 0.0
  %39 = vmatpush1.msra.mxu0 %v18
  %40 = vmatprep.subr.mxu0 0.0
  %41 = vmatpush1.msra.mxu0 %v19
  %42 = vmatprep.subr.mxu0 0.0
  %43 = vmatpush1.msra.mxu0 %v20
  %44 = vmatprep.subr.mxu0 0.0
  %45 = vmatpush1.msra.mxu0 0.0
  %46 = vmatprep.subr.mxu0 0.0
  %47 = vmatpush1.msra.mxu0 0.0
  %48 = vmatprep.subr.mxu0 0.0
  %49 = vmatpush1.msra.mxu0 0.0
  %50 = vmatprep.subr.mxu0 0.0
  %51 = vmatpush1.msra.mxu0 0.0
  %52 = vmatprep.subr.mxu0 0.0
  %53 = vmatpush1.msra.mxu0 0.0
  %54 = vmatprep.subr.mxu0 0.0
  %55 = vmatpush1.msra.mxu0 0.0
  %56 = vmatprep.subr.mxu0 0.0
  %57 = vmatpush1.msra.mxu0 0.0
  %58 = vmatprep.subr.mxu0 0.0
  %59 = vmatpush1.msra.mxu0 0.0
  %60 = vmatprep.subr.mxu0 0.0
  %61 = vmatpush1.msra.mxu0 0.0
  %62 = vmatprep.subr.mxu0 0.0
  %63 = vmatpush1.msra.mxu0 0.0
  %64 = vmatprep.subr.mxu0 0.0
  %65 = vmatpush1.msra.mxu0 0.0
  %66 = vmatprep.subr.mxu0 0.0
  %67 = vmatpush1.msra.mxu0 0.0
  %68 = vmatprep.subr.mxu0 0.0
  %69 = vmatpush1.msra.mxu0 0.0
  %70 = vmatprep.subr.mxu0 0.0
  %71 = vmatpush1.msra.mxu0 0.0
  %72 = vmatprep.subr.mxu0 0.0
  %73 = vmatpush1.msra.mxu0 0.0
  %74 = vmatprep.subr.mxu0 0.0
  %75 = vmatpush1.msra.mxu0 0.0
  %76 = vmatprep.subr.mxu0 0.0
  %77 = vmatpush1.msra.mxu0 0.0
  %78 = vmatprep.subr.mxu0 0.0
  %79 = vmatpush1.msra.mxu0 0.0
  %80 = vmatprep.subr.mxu0 0.0
  %81 = vmatpush1.msra.mxu0 0.0
  %82 = vmatprep.subr.mxu0 0.0
  %83 = vmatpush1.msra.mxu0 0.0
  %84 = vmatprep.subr.mxu0 0.0
  %85 = vmatpush1.msra.mxu0 0.0
  %86 = vmatprep.subr.mxu0 0.0
  %87 = vmatpush1.msra.mxu0 0.0
  %88 = vmatprep.subr.mxu0 0.0
  %89 = vmatpush1.msra.mxu0 0.0
  %90 = vmatprep.subr.mxu0 0.0
  %91 = vmatpush1.msra.mxu0 0.0
  %92 = vmatprep.subr.mxu0 0.0
  %93 = vmatpush1.msra.mxu0 0.0
  %94 = vmatprep.subr.mxu0 0.0
  %95 = vmatpush1.msra.mxu0 0.0
  %96 = vmatprep.mubr.f32.mxu0 0.0
  %97 = vmatmul.mubr.f32.gmra.mrb[0].mxu0 %v30
  %v98 = vpop.f32.mrb[0].mxu0
  %v99 = vadd.f32 %v26, %v98
  %v100 = vpop.f32.mrb[0].mxu0
  %101 = vdwg.mxu0
  %vm102 = vcmask 130048
  %103 = vst.msk [vmem:[%s3] sm:$0xff] %vm102, %v99
  // Predicated region
  $region14: #{model_forward.16} parent=0 // pred_check
    _
  $region15: #{model_forward.16} parent=0 // pred_check_branch
    %105 = sbr.rel (0) target = $region17
  $region16: #{model_forward.16} parent=0 // pred_region
    _
  $region17: #{model_forward.16} parent=0 // pred_fallthru
    _
  // Predicated region
  $region18: #{model_forward.16} parent=0 // pred_check
    _
  $region19: #{model_forward.16} parent=0 // pred_check_branch
    %107 = sbr.rel (0) target = $region21
  $region20: #{model_forward.16} parent=0 // pred_region
    _
  $region21: #{model_forward.16} parent=0 // pred_fallthru
    _

// kernel: model_forward.17
$region0: #{model_forward.17}
  #allocation0 [shape = 'u32[]', space=smem, size = 0x4, offset = 0x4, fixed_abs, tag = 'smem constant byte address 0x4 - core index']
  #allocation1 [shape = 'u32[144,128]{1,0:T(1,128)}', space=vmem, size = 0x12000, scoped, tag = 'internal scratch']
  %s0 = inlined_call_operand.vmem [shape: f32[8,16], index: 0, kind: input, shape index: {}]
  %s1 = inlined_call_operand.vmem [shape: f32[1,16], index: 1, kind: input, shape index: {}]
  %s2 = inlined_call_operand.vmem [shape: f32[1,16], index: 2, kind: input, shape index: {}]
  %s3 = inlined_call_operand.vmem [shape: f32[16,32], index: 3, kind: input, shape index: {}]
  %s4 = inlined_call_operand.vmem [shape: f32[1,32], index: 4, kind: input, shape index: {}]
  %s5 = inlined_call_operand.vmem [shape: f32[32,16], index: 5, kind: input, shape index: {}]
  %s6 = inlined_call_operand.vmem [shape: f32[1,16], index: 6, kind: input, shape index: {}]
  %s7 = inlined_call_operand.vmem [shape: f32[8,16], index: 7, kind: output, shape index: {}]
  %s8 = sld [smem:[#allocation0]]
  $region38: #{model_forward.17} parent=0
    _
  %s10 = ssub.s32 1, %s8
  %s11 = scalar_select 0, %s10, %s8
  // Predicated region
  $region2: #{model_forward.17} parent=0 // pred_check
    _
  $region3: #{model_forward.17} parent=0 // pred_check_branch
    %13 = sbr.rel (0) target = $region5
  $region4: #{model_forward.17} parent=0 // pred_region
    _
  $region5: #{model_forward.17} parent=0 // pred_fallthru
    _
  // Predicated region
  $region6: #{model_forward.17} parent=0 // pred_check
    _
  $region7: #{model_forward.17} parent=0 // pred_check_branch
    %15 = sbr.rel (0) target = $region9
  $region8: #{model_forward.17} parent=0 // pred_region
    _
  $region9: #{model_forward.17} parent=0 // pred_fallthru
    _
  // Predicated region
  $region10: #{model_forward.17} parent=0 // pred_check
    _
  $region11: #{model_forward.17} parent=0 // pred_check_branch
    %17 = sbr.rel (0) target = $region13
  $region12: #{model_forward.17} parent=0 // pred_region
    _
  $region13: #{model_forward.17} parent=0 // pred_fallthru
    _
  // Predicated region
  $region14: #{model_forward.17} parent=0 // pred_check
    _
  $region15: #{model_forward.17} parent=0 // pred_check_branch
    %19 = sbr.rel (0) target = $region17
  $region16: #{model_forward.17} parent=0 // pred_region
    _
  $region17: #{model_forward.17} parent=0 // pred_fallthru
    _
  // Predicated region
  $region18: #{model_forward.17} parent=0 // pred_check
    _
  $region19: #{model_forward.17} parent=0 // pred_check_branch
    %21 = sbr.rel (0) target = $region21
  $region20: #{model_forward.17} parent=0 // pred_region
    _
  $region21: #{model_forward.17} parent=0 // pred_fallthru
    _
  // Predicated region
  $region22: #{model_forward.17} parent=0 // pred_check
    _
  $region23: #{model_forward.17} parent=0 // pred_check_branch
    %23 = sbr.rel (0) target = $region25
  $region24: #{model_forward.17} parent=0 // pred_region
    _
  $region25: #{model_forward.17} parent=0 // pred_fallthru
    _
  // Predicated region
  $region26: #{model_forward.17} parent=0 // pred_check
    _
  $region27: #{model_forward.17} parent=0 // pred_check_branch
    %25 = sbr.rel (0) target = $region29
  $region28: #{model_forward.17} parent=0 // pred_region
    _
  $region29: #{model_forward.17} parent=0 // pred_fallthru
    _
  %v26 = vld [vmem:[%s0] sm:$0xff]
  %v27 = vld [vmem:[%s1] sm:$0x1]
  %v28 = vld [vmem:[%s2] sm:$0x1]
  %vm29 = vcmask 130048
  %v30 = vsel %vm29, %v26, 0.0
  %31 = vadd.xlane.f32.xlu0 %v30
  %v32 = vpop.xlane.xlu0 %31
  %v33 = vrcp.pop 16.0
  %v34 = vmul.f32 %v32, %v33
  %v35 = vsub.f32 %v26, %v34
  %v36 = vmul.f32 %v35, %v35
  %v37 = vsel %vm29, %v36, 0.0
  %38 = vadd.xlane.f32.xlu0 %v37
  %v39 = vpop.xlane.xlu0 %38
  %v40 = vmul.f32 %v39, %v33
  %v41 = vadd.f32 %v40, 1e-05
  %v42 = vrsqrt.pop %v41
  %v43 = vmul.f32 %v35, %v42
  %v45 = vlaneseq
  %v46 = vshrl.u32 %v45, 7
  %v47 = vsub.s32 0, %v46
  %v48 = vrot.slane %v27, %v47
  %v50 = vmul.f32 %v43, %v48
  %v52 = vlaneseq
  %v53 = vshrl.u32 %v52, 7
  %v54 = vsub.s32 0, %v53
  %v55 = vrot.slane %v28, %v54
  %v57 = vadd.f32 %v50, %v55
  %v58 = vld [vmem:[%s3] sm:$0xff]
  %v59 = vld [vmem:[%s3 + $0x8] sm:$0xff]
  %v60 = vld [vmem:[%s4] sm:$0x1]
  %v62 = vlaneseq
  %v63 = vshrl.u32 %v62, 7
  %v64 = vsub.s32 0, %v63
  %v65 = vrot.slane %v60, %v64
  %v68 = vsel %vm29, %v57, 0
  %70 = vmatprep.subr.mxu0 0.0
  %71 = vmatpush1.msra.mxu0 %v58
  %72 = vmatprep.subr.mxu0 0.0
  %73 = vmatpush1.msra.mxu0 %v59
  %74 = vmatprep.subr.mxu0 0.0
  %75 = vmatpush1.msra.mxu0 0.0
  %76 = vmatprep.subr.mxu0 0.0
  %77 = vmatpush1.msra.mxu0 0.0
  %78 = vmatprep.subr.mxu0 0.0
  %79 = vmatpush1.msra.mxu0 0.0
  %80 = vmatprep.subr.mxu0 0.0
  %81 = vmatpush1.msra.mxu0 0.0
  %82 = vmatprep.subr.mxu0 0.0
  %83 = vmatpush1.msra.mxu0 0.0
  %84 = vmatprep.subr.mxu0 0.0
  %85 = vmatpush1.msra.mxu0 0.0
  %86 = vmatprep.subr.mxu0 0.0
  %87 = vmatpush1.msra.mxu0 0.0
  %88 = vmatprep.subr.mxu0 0.0
  %89 = vmatpush1.msra.mxu0 0.0
  %90 = vmatprep.subr.mxu0 0.0
  %91 = vmatpush1.msra.mxu0 0.0
  %92 = vmatprep.subr.mxu0 0.0
  %93 = vmatpush1.msra.mxu0 0.0
  %94 = vmatprep.subr.mxu0 0.0
  %95 = vmatpush1.msra.mxu0 0.0
  %96 = vmatprep.subr.mxu0 0.0
  %97 = vmatpush1.msra.mxu0 0.0
  %98 = vmatprep.subr.mxu0 0.0
  %99 = vmatpush1.msra.mxu0 0.0
  %100 = vmatprep.subr.mxu0 0.0
  %101 = vmatpush1.msra.mxu0 0.0
  %102 = vmatprep.subr.mxu0 0.0
  %103 = vmatpush1.msra.mxu0 0.0
  %104 = vmatprep.subr.mxu0 0.0
  %105 = vmatpush1.msra.mxu0 0.0
  %106 = vmatprep.subr.mxu0 0.0
  %107 = vmatpush1.msra.mxu0 0.0
  %108 = vmatprep.subr.mxu0 0.0
  %109 = vmatpush1.msra.mxu0 0.0
  %110 = vmatprep.subr.mxu0 0.0
  %111 = vmatpush1.msra.mxu0 0.0
  %112 = vmatprep.subr.mxu0 0.0
  %113 = vmatpush1.msra.mxu0 0.0
  %114 = vmatprep.subr.mxu0 0.0
  %115 = vmatpush1.msra.mxu0 0.0
  %116 = vmatprep.subr.mxu0 0.0
  %117 = vmatpush1.msra.mxu0 0.0
  %118 = vmatprep.subr.mxu0 0.0
  %119 = vmatpush1.msra.mxu0 0.0
  %120 = vmatprep.subr.mxu0 0.0
  %121 = vmatpush1.msra.mxu0 0.0
  %122 = vmatprep.subr.mxu0 0.0
  %123 = vmatpush1.msra.mxu0 0.0
  %124 = vmatprep.subr.mxu0 0.0
  %125 = vmatpush1.msra.mxu0 0.0
  %126 = vmatprep.subr.mxu0 0.0
  %127 = vmatpush1.msra.mxu0 0.0
  %128 = vmatprep.subr.mxu0 0.0
  %129 = vmatpush1.msra.mxu0 0.0
  %130 = vmatprep.subr.mxu0 0.0
  %131 = vmatpush1.msra.mxu0 0.0
  %132 = vmatprep.subr.mxu0 0.0
  %133 = vmatpush1.msra.mxu0 0.0
  %134 = vmatprep.mubr.f32.mxu0 0.0
  %135 = vmatmul.mubr.f32.gmra.mrb[0].mxu0 %v68
  %v136 = vpop.f32.mrb[0].mxu0
  %v137 = vadd.f32 %v65, %v136
  %v138 = vpop.f32.mrb[0].mxu0
  %139 = vdwg.mxu0
  %v140 = vxor.u32 %v137, 2147483648
  %v141 = vmul.f32 %v140, 1.442695
  %v142 = vpow.pop %v141
  %v143 = vadd.f32 %v142, 1.0
  %v144 = vrcp.pop %v143
  %v145 = vmul.f32 1.0, %v144
  %v146 = vmul.f32 %v137, %v145
  %v147 = vld [vmem:[%s5] sm:$0xff]
  %v148 = vld [vmem:[%s5 + $0x8] sm:$0xff]
  %v149 = vld [vmem:[%s5 + $0x10] sm:$0xff]
  %v150 = vld [vmem:[%s5 + $0x18] sm:$0xff]
  %v151 = vld [vmem:[%s6] sm:$0x1]
  %v153 = vlaneseq
  %v154 = vshrl.u32 %v153, 7
  %v155 = vsub.s32 0, %v154
  %v156 = vrot.slane %v151, %v155
  %vm158 = vcmask 261120
  %v160 = vsel %vm158, %v146, 0
  %162 = vmatprep.subr.mxu0 0.0
  %163 = vmatpush1.msra.mxu0 %v147
  %164 = vmatprep.subr.mxu0 0.0
  %165 = vmatpush1.msra.mxu0 %v148
  %166 = vmatprep.subr.mxu0 0.0
  %167 = vmatpush1.msra.mxu0 %v149
  %168 = vmatprep.subr.mxu0 0.0
  %169 = vmatpush1.msra.mxu0 %v150
  %170 = vmatprep.subr.mxu0 0.0
  %171 = vmatpush1.msra.mxu0 0.0
  %172 = vmatprep.subr.mxu0 0.0
  %173 = vmatpush1.msra.mxu0 0.0
  %174 = vmatprep.subr.mxu0 0.0
  %175 = vmatpush1.msra.mxu0 0.0
  %176 = vmatprep.subr.mxu0 0.0
  %177 = vmatpush1.msra.mxu0 0.0
  %178 = vmatprep.subr.mxu0 0.0
  %179 = vmatpush1.msra.mxu0 0.0
  %180 = vmatprep.subr.mxu0 0.0
  %181 = vmatpush1.msra.mxu0 0.0
  %182 = vmatprep.subr.mxu0 0.0
  %183 = vmatpush1.msra.mxu0 0.0
  %184 = vmatprep.subr.mxu0 0.0
  %185 = vmatpush1.msra.mxu0 0.0
  %186 = vmatprep.subr.mxu0 0.0
  %187 = vmatpush1.msra.mxu0 0.0
  %188 = vmatprep.subr.mxu0 0.0
  %189 = vmatpush1.msra.mxu0 0.0
  %190 = vmatprep.subr.mxu0 0.0
  %191 = vmatpush1.msra.mxu0 0.0
  %192 = vmatprep.subr.mxu0 0.0
  %193 = vmatpush1.msra.mxu0 0.0
  %194 = vmatprep.subr.mxu0 0.0
  %195 = vmatpush1.msra.mxu0 0.0
  %196 = vmatprep.subr.mxu0 0.0
  %197 = vmatpush1.msra.mxu0 0.0
  %198 = vmatprep.subr.mxu0 0.0
  %199 = vmatpush1.msra.mxu0 0.0
  %200 = vmatprep.subr.mxu0 0.0
  %201 = vmatpush1.msra.mxu0 0.0
  %202 = vmatprep.subr.mxu0 0.0
  %203 = vmatpush1.msra.mxu0 0.0
  %204 = vmatprep.subr.mxu0 0.0
  %205 = vmatpush1.msra.mxu0 0.0
  %206 = vmatprep.subr.mxu0 0.0
  %207 = vmatpush1.msra.mxu0 0.0
  %208 = vmatprep.subr.mxu0 0.0
  %209 = vmatpush1.msra.mxu0 0.0
  %210 = vmatprep.subr.mxu0 0.0
  %211 = vmatpush1.msra.mxu0 0.0
  %212 = vmatprep.subr.mxu0 0.0
  %213 = vmatpush1.msra.mxu0 0.0
  %214 = vmatprep.subr.mxu0 0.0
  %215 = vmatpush1.msra.mxu0 0.0
  %216 = vmatprep.subr.mxu0 0.0
  %217 = vmatpush1.msra.mxu0 0.0
  %218 = vmatprep.subr.mxu0 0.0
  %219 = vmatpush1.msra.mxu0 0.0
  %220 = vmatprep.subr.mxu0 0.0
  %221 = vmatpush1.msra.mxu0 0.0
  %222 = vmatprep.subr.mxu0 0.0
  %223 = vmatpush1.msra.mxu0 0.0
  %224 = vmatprep.subr.mxu0 0.0
  %225 = vmatpush1.msra.mxu0 0.0
  %226 = vmatprep.mubr.f32.mxu0 0.0
  %227 = vmatmul.mubr.f32.gmra.mrb[0].mxu0 %v160
  %v228 = vpop.f32.mrb[0].mxu0
  %v229 = vadd.f32 %v156, %v228
  %v230 = vpop.f32.mrb[0].mxu0
  %231 = vdwg.mxu0
  %v232 = vmul.f32 %v229, 0.5
  %v233 = vadd.f32 %v26, %v232
  %234 = vst.msk [vmem:[%s7] sm:$0xff] %vm29, %v233
  // Predicated region
  $region30: #{model_forward.17} parent=0 // pred_check
    _
  $region31: #{model_forward.17} parent=0 // pred_check_branch
    %236 = sbr.rel (0) target = $region33
  $region32: #{model_forward.17} parent=0 // pred_region
    _
  $region33: #{model_forward.17} parent=0 // pred_fallthru
    _
  // Predicated region
  $region34: #{model_forward.17} parent=0 // pred_check
    _
  $region35: #{model_forward.17} parent=0 // pred_check_branch
    %238 = sbr.rel (0) target = $region37
  $region36: #{model_forward.17} parent=0 // pred_region
    _
  $region37: #{model_forward.17} parent=0 // pred_fallthru
    _

// kernel: model_forward.19
$region0: #{model_forward.19}
  #allocation0 [shape = 'u32[]', space=smem, size = 0x4, offset = 0x4, fixed_abs, tag = 'smem constant byte address 0x4 - core index']
  #allocation1 [shape = 'u32[144,128]{1,0:T(1,128)}', space=vmem, size = 0x12000, scoped, tag = 'internal scratch']
  #allocation2 [shape = 'f32[5,16]{1,0:T(8,128)}', space=vmem, size = 0x1000, scoped, tag = 'scratch operand']
  %s0 = inlined_call_operand.vmem [shape: f32[2,3,16], index: 0, kind: input, shape index: {}]
  %s1 = inlined_call_operand.vmem [shape: f32[1,16], index: 1, kind: input, shape index: {}]
  %s2 = inlined_call_operand.vmem [shape: f32[1,16], index: 2, kind: input, shape index: {}]
  %s3 = inlined_call_operand.vmem [shape: f32[16,32], index: 3, kind: input, shape index: {}]
  %s4 = inlined_call_operand.vmem [shape: f32[1,32], index: 4, kind: input, shape index: {}]
  %s5 = inlined_call_operand.vmem [shape: f32[3,16], index: 5, kind: input, shape index: {}]
  %s6 = inlined_call_operand.vmem [shape: f32[1,16], index: 6, kind: input, shape index: {}]
  %s7 = inlined_call_operand.vmem [shape: f32[1,16], index: 7, kind: input, shape index: {}]
  %s8 = inlined_call_operand.vmem [shape: f32[1,16], index: 8, kind: input, shape index: {}]
  %s9 = inlined_call_operand.vmem [shape: f32[16,16], index: 9, kind: input, shape index: {}]
  %s10 = inlined_call_operand.vmem [shape: f32[1,16], index: 10, kind: input, shape index: {}]
  %s11 = inlined_call_operand.vmem [shape: f32[2,3,16], index: 11, kind: output, shape index: {}]
  %s12 = sld [smem:[#allocation0]]
  $region77: #{model_forward.19} parent=0
    _
  %s14 = ssub.s32 1, %s12
  %s15 = scalar_select 0, %s14, %s12
  loop: start=0, step=1, limit=4
  $region2: #{model_forward.19} parent=0 // loop_pre_header
    _
  $region3: #{model_forward.19} parent=0 // loop_header
    %s17 = sphi 0, %s21
    %p18 = scmp.ge.s32.totalorder %s17, 4
    %s27 = sphi 0, %s29
    %s30 = sphi 0, %s27
    %s31 = sphi 0, %s30
    %s47 = sphi 0, %s31
    %s51 = sphi 0, %s51
    %s53 = sphi 0, %s51
    %s54 = sphi 0, %s53
    %s68 = sphi 0, %s54
    %s72 = sphi 0, %s72
    %s74 = sphi 0, %s72
    %s75 = sphi 0, %s74
    %s89 = sphi 0, %s75
    %s93 = sphi 0, %s93
    %s95 = sphi 0, %s93
    %s96 = sphi 0, %s95
    %s110 = sphi 0, %s96
    %s114 = sphi 0, %s114
    %s116 = sphi 0, %s114
    %s117 = sphi 0, %s116
    %s131 = sphi 0, %s117
    %s135 = sphi 0, %s135
    %s137 = sphi 0, %s135
    %s138 = sphi 0, %s137
    %s152 = sphi 0, %s138
    %s156 = sphi 0, %s156
    %s158 = sphi 0, %s156
    %s159 = sphi 0, %s158
    %s173 = sphi 0, %s159
    %s177 = sphi 0, %s177
    %s179 = sphi 0, %s177
    %s180 = sphi 0, %s179
    %s194 = sphi 0, %s180
    %s198 = sphi 0, %s198
    %s200 = sphi 0, %s198
    %s201 = sphi 0, %s200
    %s215 = sphi 0, %s201
    %s219 = sphi 0, %s219
    %s221 = sphi 0, %s219
    %s222 = sphi 0, %s221
    %s236 = sphi 0, %s222
    %s240 = sphi 0, %s240
    %s242 = sphi 0, %s240
    %s243 = sphi 0, %s242
    %s257 = sphi 0, %s243
    %s263 = sphi 0, %s265
    %s266 = sphi 0, %s263
    %s267 = sphi 0, %s266
    %s283 = sphi 0, %s267
  $region4: #{model_forward.19} parent=0 // loop_header_branch
    %20 = sbr.rel (%p18) target = $region8
  $region5: #{model_forward.19} parent=0 // loop_body
    %s22 = ssub.s32 %s17, 1
    %s23 = ssub.s32 %s17, 2
    %s24 = sadd.s32 %s17, 1
    %s25 = ssub.s32 %s17, %s24
    %p26 = scmp.eq.s32.totalorder %s25, 0
    %s28 = sadd.s32 %s27, 1
    %s29 = scalar_select %p26, %s27, %s28
    %p32 = pneg %p26
    %p33 = scmp.eq.s32.totalorder %s17, 1
    %p34 = por %p32, %p33
    %p35 = scmp.ne.s32.totalorder %s27, %s30
    %p36 = scmp.eq.s32.totalorder %s17, 0
    %p37 = por %p35, %p36
    %p38 = scmp.ne.s32.totalorder %s27, %s30
    %p39 = scmp.eq.s32.totalorder %s22, 1
    %p40 = por %p38, %p39
    %p41 = scmp.ne.s32.totalorder %s30, %s31
    %p42 = scmp.eq.s32.totalorder %s22, 0
    %p43 = por %p41, %p42
    %p44 = scmp.ne.s32.totalorder %s30, %s31
    %p45 = scmp.eq.s32.totalorder %s23, 1
    %p46 = por %p44, %p45
    %p48 = scmp.ne.s32.totalorder %s31, %s47
    %p49 = scmp.eq.s32.totalorder %s23, 0
    %p50 = por %p48, %p49
    %s52 = sadd.s32 %s51, 1
    %p55 = scmp.eq.s32.totalorder %s17, 1
    %p56 = scmp.ne.s32.totalorder %s51, %s53
    %p57 = scmp.eq.s32.totalorder %s17, 0
    %p58 = por %p56, %p57
    %p59 = scmp.ne.s32.totalorder %s51, %s53
    %p60 = scmp.eq.s32.totalorder %s22, 1
    %p61 = por %p59, %p60
    %p62 = scmp.ne.s32.totalorder %s53, %s54
    %p63 = scmp.eq.s32.totalorder %s22, 0
    %p64 = por %p62, %p63
    %p65 = scmp.ne.s32.totalorder %s53, %s54
    %p66 = scmp.eq.s32.totalorder %s23, 1
    %p67 = por %p65, %p66
    %p69 = scmp.ne.s32.totalorder %s54, %s68
    %p70 = scmp.eq.s32.totalorder %s23, 0
    %p71 = por %p69, %p70
    %s73 = sadd.s32 %s72, 1
    %p76 = scmp.eq.s32.totalorder %s17, 1
    %p77 = scmp.ne.s32.totalorder %s72, %s74
    %p78 = scmp.eq.s32.totalorder %s17, 0
    %p79 = por %p77, %p78
    %p80 = scmp.ne.s32.totalorder %s72, %s74
    %p81 = scmp.eq.s32.totalorder %s22, 1
    %p82 = por %p80, %p81
    %p83 = scmp.ne.s32.totalorder %s74, %s75
    %p84 = scmp.eq.s32.totalorder %s22, 0
    %p85 = por %p83, %p84
    %p86 = scmp.ne.s32.totalorder %s74, %s75
    %p87 = scmp.eq.s32.totalorder %s23, 1
    %p88 = por %p86, %p87
    %p90 = scmp.ne.s32.totalorder %s75, %s89
    %p91 = scmp.eq.s32.totalorder %s23, 0
    %p92 = por %p90, %p91
    %s94 = sadd.s32 %s93, 1
    %p97 = scmp.eq.s32.totalorder %s17, 1
    %p98 = scmp.ne.s32.totalorder %s93, %s95
    %p99 = scmp.eq.s32.totalorder %s17, 0
    %p100 = por %p98, %p99
    %p101 = scmp.ne.s32.totalorder %s93, %s95
    %p102 = scmp.eq.s32.totalorder %s22, 1
    %p103 = por %p101, %p102
    %p104 = scmp.ne.s32.totalorder %s95, %s96
    %p105 = scmp.eq.s32.totalorder %s22, 0
    %p106 = por %p104, %p105
    %p107 = scmp.ne.s32.totalorder %s95, %s96
    %p108 = scmp.eq.s32.totalorder %s23, 1
    %p109 = por %p107, %p108
    %p111 = scmp.ne.s32.totalorder %s96, %s110
    %p112 = scmp.eq.s32.totalorder %s23, 0
    %p113 = por %p111, %p112
    %s115 = sadd.s32 %s114, 1
    %p118 = scmp.eq.s32.totalorder %s17, 1
    %p119 = scmp.ne.s32.totalorder %s114, %s116
    %p120 = scmp.eq.s32.totalorder %s17, 0
    %p121 = por %p119, %p120
    %p122 = scmp.ne.s32.totalorder %s114, %s116
    %p123 = scmp.eq.s32.totalorder %s22, 1
    %p124 = por %p122, %p123
    %p125 = scmp.ne.s32.totalorder %s116, %s117
    %p126 = scmp.eq.s32.totalorder %s22, 0
    %p127 = por %p125, %p126
    %p128 = scmp.ne.s32.totalorder %s116, %s117
    %p129 = scmp.eq.s32.totalorder %s23, 1
    %p130 = por %p128, %p129
    %p132 = scmp.ne.s32.totalorder %s117, %s131
    %p133 = scmp.eq.s32.totalorder %s23, 0
    %p134 = por %p132, %p133
    %s136 = sadd.s32 %s135, 1
    %p139 = scmp.eq.s32.totalorder %s17, 1
    %p140 = scmp.ne.s32.totalorder %s135, %s137
    %p141 = scmp.eq.s32.totalorder %s17, 0
    %p142 = por %p140, %p141
    %p143 = scmp.ne.s32.totalorder %s135, %s137
    %p144 = scmp.eq.s32.totalorder %s22, 1
    %p145 = por %p143, %p144
    %p146 = scmp.ne.s32.totalorder %s137, %s138
    %p147 = scmp.eq.s32.totalorder %s22, 0
    %p148 = por %p146, %p147
    %p149 = scmp.ne.s32.totalorder %s137, %s138
    %p150 = scmp.eq.s32.totalorder %s23, 1
    %p151 = por %p149, %p150
    %p153 = scmp.ne.s32.totalorder %s138, %s152
    %p154 = scmp.eq.s32.totalorder %s23, 0
    %p155 = por %p153, %p154
    %s157 = sadd.s32 %s156, 1
    %p160 = scmp.eq.s32.totalorder %s17, 1
    %p161 = scmp.ne.s32.totalorder %s156, %s158
    %p162 = scmp.eq.s32.totalorder %s17, 0
    %p163 = por %p161, %p162
    %p164 = scmp.ne.s32.totalorder %s156, %s158
    %p165 = scmp.eq.s32.totalorder %s22, 1
    %p166 = por %p164, %p165
    %p167 = scmp.ne.s32.totalorder %s158, %s159
    %p168 = scmp.eq.s32.totalorder %s22, 0
    %p169 = por %p167, %p168
    %p170 = scmp.ne.s32.totalorder %s158, %s159
    %p171 = scmp.eq.s32.totalorder %s23, 1
    %p172 = por %p170, %p171
    %p174 = scmp.ne.s32.totalorder %s159, %s173
    %p175 = scmp.eq.s32.totalorder %s23, 0
    %p176 = por %p174, %p175
    %s178 = sadd.s32 %s177, 1
    %p181 = scmp.eq.s32.totalorder %s17, 1
    %p182 = scmp.ne.s32.totalorder %s177, %s179
    %p183 = scmp.eq.s32.totalorder %s17, 0
    %p184 = por %p182, %p183
    %p185 = scmp.ne.s32.totalorder %s177, %s179
    %p186 = scmp.eq.s32.totalorder %s22, 1
    %p187 = por %p185, %p186
    %p188 = scmp.ne.s32.totalorder %s179, %s180
    %p189 = scmp.eq.s32.totalorder %s22, 0
    %p190 = por %p188, %p189
    %p191 = scmp.ne.s32.totalorder %s179, %s180
    %p192 = scmp.eq.s32.totalorder %s23, 1
    %p193 = por %p191, %p192
    %p195 = scmp.ne.s32.totalorder %s180, %s194
    %p196 = scmp.eq.s32.totalorder %s23, 0
    %p197 = por %p195, %p196
    %s199 = sadd.s32 %s198, 1
    %p202 = scmp.eq.s32.totalorder %s17, 1
    %p203 = scmp.ne.s32.totalorder %s198, %s200
    %p204 = scmp.eq.s32.totalorder %s17, 0
    %p205 = por %p203, %p204
    %p206 = scmp.ne.s32.totalorder %s198, %s200
    %p207 = scmp.eq.s32.totalorder %s22, 1
    %p208 = por %p206, %p207
    %p209 = scmp.ne.s32.totalorder %s200, %s201
    %p210 = scmp.eq.s32.totalorder %s22, 0
    %p211 = por %p209, %p210
    %p212 = scmp.ne.s32.totalorder %s200, %s201
    %p213 = scmp.eq.s32.totalorder %s23, 1
    %p214 = por %p212, %p213
    %p216 = scmp.ne.s32.totalorder %s201, %s215
    %p217 = scmp.eq.s32.totalorder %s23, 0
    %p218 = por %p216, %p217
    %s220 = sadd.s32 %s219, 1
    %p223 = scmp.eq.s32.totalorder %s17, 1
    %p224 = scmp.ne.s32.totalorder %s219, %s221
    %p225 = scmp.eq.s32.totalorder %s17, 0
    %p226 = por %p224, %p225
    %p227 = scmp.ne.s32.totalorder %s219, %s221
    %p228 = scmp.eq.s32.totalorder %s22, 1
    %p229 = por %p227, %p228
    %p230 = scmp.ne.s32.totalorder %s221, %s222
    %p231 = scmp.eq.s32.totalorder %s22, 0
    %p232 = por %p230, %p231
    %p233 = scmp.ne.s32.totalorder %s221, %s222
    %p234 = scmp.eq.s32.totalorder %s23, 1
    %p235 = por %p233, %p234
    %p237 = scmp.ne.s32.totalorder %s222, %s236
    %p238 = scmp.eq.s32.totalorder %s23, 0
    %p239 = por %p237, %p238
    %s241 = sadd.s32 %s240, 1
    %p244 = scmp.eq.s32.totalorder %s17, 1
    %p245 = scmp.ne.s32.totalorder %s240, %s242
    %p246 = scmp.eq.s32.totalorder %s17, 0
    %p247 = por %p245, %p246
    %p248 = scmp.ne.s32.totalorder %s240, %s242
    %p249 = scmp.eq.s32.totalorder %s22, 1
    %p250 = por %p248, %p249
    %p251 = scmp.ne.s32.totalorder %s242, %s243
    %p252 = scmp.eq.s32.totalorder %s22, 0
    %p253 = por %p251, %p252
    %p254 = scmp.ne.s32.totalorder %s242, %s243
    %p255 = scmp.eq.s32.totalorder %s23, 1
    %p256 = por %p254, %p255
    %p258 = scmp.ne.s32.totalorder %s243, %s257
    %p259 = scmp.eq.s32.totalorder %s23, 0
    %p260 = por %p258, %p259
    %s261 = ssub.s32 %s17, %s24
    %p262 = scmp.eq.s32.totalorder %s261, 0
    %s264 = sadd.s32 %s263, 1
    %s265 = scalar_select %p262, %s263, %s264
    %p268 = pneg %p262
    %p269 = scmp.eq.s32.totalorder %s17, 1
    %p270 = por %p268, %p269
    %p271 = scmp.ne.s32.totalorder %s263, %s266
    %p272 = scmp.eq.s32.totalorder %s17, 0
    %p273 = por %p271, %p272
    %p274 = scmp.ne.s32.totalorder %s263, %s266
    %p275 = scmp.eq.s32.totalorder %s22, 1
    %p276 = por %p274, %p275
    %p277 = scmp.ne.s32.totalorder %s266, %s267
    %p278 = scmp.eq.s32.totalorder %s22, 0
    %p279 = por %p277, %p278
    %p280 = scmp.ne.s32.totalorder %s266, %s267
    %p281 = scmp.eq.s32.totalorder %s23, 1
    %p282 = por %p280, %p281
    %p284 = scmp.ne.s32.totalorder %s267, %s283
    %p285 = scmp.eq.s32.totalorder %s23, 0
    %p286 = por %p284, %p285
    %p287 = scmp.le.s32.totalorder 1, %s17
    %p288 = scmp.lt.s32.totalorder %s17, 3
    %p289 = pnand %p287, %p288
    %p290 = pneg %p289
    // Predicated region
    $region9: #{model_forward.19} parent=5 // pred_check
      _
    $region10: #{model_forward.19} parent=5 // pred_check_branch
      %292 = sbr.rel (%p289) target = $region12
    $region11: #{model_forward.19} parent=5 // pred_region
      %s293 = ssub.s32 %s17, 1
      // Predicated region
      $region13: #{model_forward.19} parent=11 // pred_check
        %p294 = pneg %p64
      $region14: #{model_forward.19} parent=11 // pred_check_branch
        %296 = sbr.rel (%p294) target = $region16
      $region15: #{model_forward.19} parent=11 // pred_region
        _
      $region16: #{model_forward.19} parent=11 // pred_fallthru
        _
      // Predicated region
      $region17: #{model_forward.19} parent=11 // pred_check
        %p297 = pneg %p85
      $region18: #{model_forward.19} parent=11 // pred_check_branch
        %299 = sbr.rel (%p297) target = $region20
      $region19: #{model_forward.19} parent=11 // pred_region
        _
      $region20: #{model_forward.19} parent=11 // pred_fallthru
        _
      // Predicated region
      $region21: #{model_forward.19} parent=11 // pred_check
        %p300 = pneg %p106
      $region22: #{model_forward.19} parent=11 // pred_check_branch
        %302 = sbr.rel (%p300) target = $region24
      $region23: #{model_forward.19} parent=11 // pred_region
        _
      $region24: #{model_forward.19} parent=11 // pred_fallthru
        _
      // Predicated region
      $region25: #{model_forward.19} parent=11 // pred_check
        %p303 = pneg %p127
      $region26: #{model_forward.19} parent=11 // pred_check_branch
        %305 = sbr.rel (%p303) target = $region28
      $region27: #{model_forward.19} parent=11 // pred_region
        _
      $region28: #{model_forward.19} parent=11 // pred_fallthru
        _
      // Predicated region
      $region29: #{model_forward.19} parent=11 // pred_check
        %p306 = pneg %p148
      $region30: #{model_forward.19} parent=11 // pred_check_branch
        %308 = sbr.rel (%p306) target = $region32
      $region31: #{model_forward.19} parent=11 // pred_region
        _
      $region32: #{model_forward.19} parent=11 // pred_fallthru
        _
      // Predicated region
      $region33: #{model_forward.19} parent=11 // pred_check
        %p309 = pneg %p169
      $region34: #{model_forward.19} parent=11 // pred_check_branch
        %311 = sbr.rel (%p309) target = $region36
      $region35: #{model_forward.19} parent=11 // pred_region
        _
      $region36: #{model_forward.19} parent=11 // pred_fallthru
        _
      // Predicated region
      $region37: #{model_forward.19} parent=11 // pred_check
        %p312 = pneg %p190
      $region38: #{model_forward.19} parent=11 // pred_check_branch
        %314 = sbr.rel (%p312) target = $region40
      $region39: #{model_forward.19} parent=11 // pred_region
        _
      $region40: #{model_forward.19} parent=11 // pred_fallthru
        _
      // Predicated region
      $region41: #{model_forward.19} parent=11 // pred_check
        %p315 = pneg %p211
      $region42: #{model_forward.19} parent=11 // pred_check_branch
        %317 = sbr.rel (%p315) target = $region44
      $region43: #{model_forward.19} parent=11 // pred_region
        _
      $region44: #{model_forward.19} parent=11 // pred_fallthru
        _
      // Predicated region
      $region45: #{model_forward.19} parent=11 // pred_check
        %p318 = pneg %p232
      $region46: #{model_forward.19} parent=11 // pred_check_branch
        %320 = sbr.rel (%p318) target = $region48
      $region47: #{model_forward.19} parent=11 // pred_region
        _
      $region48: #{model_forward.19} parent=11 // pred_fallthru
        _
      // Predicated region
      $region49: #{model_forward.19} parent=11 // pred_check
        %p321 = pneg %p253
      $region50: #{model_forward.19} parent=11 // pred_check_branch
        %323 = sbr.rel (%p321) target = $region52
      $region51: #{model_forward.19} parent=11 // pred_region
        _
      $region52: #{model_forward.19} parent=11 // pred_fallthru
        _
    $region12: #{model_forward.19} parent=5 // pred_fallthru
      _
    %p324 = scmp.lt.s32.totalorder %s17, 2
    // Predicated region
    $region53: #{model_forward.19} parent=5 // pred_check
      %p325 = pneg %p324
    $region54: #{model_forward.19} parent=5 // pred_check_branch
      %327 = sbr.rel (%p325) target = $region56
    $region55: #{model_forward.19} parent=5 // pred_region
      // Predicated region
      $region57: #{model_forward.19} parent=55 // pred_check
        %p328 = pneg %p37
      $region58: #{model_forward.19} parent=55 // pred_check_branch
        %330 = sbr.rel (%p328) target = $region60
      $region59: #{model_forward.19} parent=55 // pred_region
        %p331 = scmp.lt.s32.totalorder %s17, 1
        %s332 = scalar_select %p331, %s17, 1
        %s333 = smul.addr %s332, 4
        %s334 = scalar_lea.vmem %s0, %s333
      $region60: #{model_forward.19} parent=55 // pred_fallthru
        _
    $region56: #{model_forward.19} parent=5 // pred_fallthru
      _
    %p335 = scmp.le.s32.totalorder 1, %s17
    %p336 = scmp.lt.s32.totalorder %s17, 3
    %p337 = pnand %p335, %p336
    %p338 = pneg %p337
    // Predicated region
    $region61: #{model_forward.19} parent=5 // pred_check
      _
    $region62: #{model_forward.19} parent=5 // pred_check_branch
      %340 = sbr.rel (%p337) target = $region64
    $region63: #{model_forward.19} parent=5 // pred_region
      %s341 = ssub.s32 %s17, 1
      %p342 = scmp.lt.s32.totalorder %s22, 1
      %s343 = scalar_select %p342, %s22, 1
      %s344 = smul.addr %s343, 4
      %s345 = scalar_lea.vmem %s0, %s344
      %p346 = pneg %p43
      %p347 = pneg %p40
      %p348 = pneg %p64
      %p349 = pneg %p61
      %p350 = pneg %p85
      %p351 = pneg %p82
      %p352 = pneg %p106
      %p353 = pneg %p103
      %p354 = pneg %p127
      %p355 = pneg %p124
      %p356 = pneg %p148
      %p357 = pneg %p145
      %p358 = pneg %p169
      %p359 = pneg %p166
      %p360 = pneg %p190
      %p361 = pneg %p187
      %p362 = pneg %p211
      %p363 = pneg %p208
      %p364 = pneg %p232
      %p365 = pneg %p229
      %p366 = pneg %p253
      %p367 = pneg %p250
      %p368 = pneg %p279
      %p369 = pneg %p276
      %p370 = scmp.lt.s32.totalorder %s22, 1
      %s371 = scalar_select %p370, %s22, 1
      %s372 = smul.addr %s371, 4
      %s373 = scalar_lea.vmem %s11, %s372
      %p374 = scmp.lt.s32.totalorder %s22, 1
      %s375 = scalar_select %p374, %s22, 1
      %s376 = smul.addr %s375, 4
      %s377 = scalar_lea.vmem %s0, %s376
      %p378 = scmp.lt.s32.totalorder %s22, 1
      %s379 = scalar_select %p378, %s22, 1
      %s380 = smul.addr %s379, 4
      %s381 = scalar_lea.vmem %s11, %s380
      %v382 = vld [vmem:[%s377] sm:$0x7]
      %v383 = vld [vmem:[%s1] sm:$0x1]
      %v384 = vld [vmem:[%s2] sm:$0x1]
      %vm385 = vcmask 124928
      %v386 = vsel %vm385, %v382, 0.0
      %387 = vadd.xlane.f32.xlu0 %v386
      %v388 = vpop.xlane.xlu0 %387
      %v389 = vrcp.pop 16.0
      %v390 = vmul.f32 %v388, %v389
      %v391 = vsub.f32 %v382, %v390
      %v392 = vmul.f32 %v391, %v391
      %v393 = vsel %vm385, %v392, 0.0
      %394 = vadd.xlane.f32.xlu0 %v393
      %v395 = vpop.xlane.xlu0 %394
      %v396 = vmul.f32 %v395, %v389
      %v397 = vadd.f32 %v396, 1e-05
      %v398 = vrsqrt.pop %v397
      %v399 = vmul.f32 %v391, %v398
      %v401 = vlaneseq
      %v402 = vshrl.u32 %v401, 7
      %v403 = vsub.s32 0, %v402
      %v404 = vrot.slane %v383, %v403
      %v406 = vmul.f32 %v399, %v404
      %v408 = vlaneseq
      %v409 = vshrl.u32 %v408, 7
      %v410 = vsub.s32 0, %v409
      %v411 = vrot.slane %v384, %v410
      %v413 = vadd.f32 %v406, %v411
      %v414 = vld [vmem:[%s3] sm:$0xff]
      %v415 = vld [vmem:[%s3 + $0x8] sm:$0xff]
      %v416 = vld [vmem:[%s4] sm:$0x1]
      %v418 = vlaneseq
      %v419 = vshrl.u32 %v418, 7
      %v420 = vsub.s32 0, %v419
      %v421 = vrot.slane %v416, %v420
      %vm423 = vcmask 130048
      %v425 = vsel %vm423, %v413, 0
      %427 = vmatprep.subr.mxu0 0.0
      %428 = vmatpush1.msra.mxu0 %v414
      %429 = vmatprep.subr.mxu0 0.0
      %430 = vmatpush1.msra.mxu0 %v415
      %431 = vmatprep.subr.mxu0 0.0
      %432 = vmatpush1.msra.mxu0 0.0
      %433 = vmatprep.subr.mxu0 0.0
      %434 = vmatpush1.msra.mxu0 0.0
      %435 = vmatprep.subr.mxu0 0.0
      %436 = vmatpush1.msra.mxu0 0.0
      %437 = vmatprep.subr.mxu0 0.0
      %438 = vmatpush1.msra.mxu0 0.0
      %439 = vmatprep.subr.mxu0 0.0
      %440 = vmatpush1.msra.mxu0 0.0
      %441 = vmatprep.subr.mxu0 0.0
      %442 = vmatpush1.msra.mxu0 0.0
      %443 = vmatprep.subr.mxu0 0.0
      %444 = vmatpush1.msra.mxu0 0.0
      %445 = vmatprep.subr.mxu0 0.0
      %446 = vmatpush1.msra.mxu0 0.0
      %447 = vmatprep.subr.mxu0 0.0
      %448 = vmatpush1.msra.mxu0 0.0
      %449 = vmatprep.subr.mxu0 0.0
      %450 = vmatpush1.msra.mxu0 0.0
      %451 = vmatprep.subr.mxu0 0.0
      %452 = vmatpush1.msra.mxu0 0.0
      %453 = vmatprep.subr.mxu0 0.0
      %454 = vmatpush1.msra.mxu0 0.0
      %455 = vmatprep.subr.mxu0 0.0
      %456 = vmatpush1.msra.mxu0 0.0
      %457 = vmatprep.subr.mxu0 0.0
      %458 = vmatpush1.msra.mxu0 0.0
      %459 = vmatprep.subr.mxu0 0.0
      %460 = vmatpush1.msra.mxu0 0.0
      %461 = vmatprep.subr.mxu0 0.0
      %462 = vmatpush1.msra.mxu0 0.0
      %463 = vmatprep.subr.mxu0 0.0
      %464 = vmatpush1.msra.mxu0 0.0
      %465 = vmatprep.subr.mxu0 0.0
      %466 = vmatpush1.msra.mxu0 0.0
      %467 = vmatprep.subr.mxu0 0.0
      %468 = vmatpush1.msra.mxu0 0.0
      %469 = vmatprep.subr.mxu0 0.0
      %470 = vmatpush1.msra.mxu0 0.0
      %471 = vmatprep.subr.mxu0 0.0
      %472 = vmatpush1.msra.mxu0 0.0
      %473 = vmatprep.subr.mxu0 0.0
      %474 = vmatpush1.msra.mxu0 0.0
      %475 = vmatprep.subr.mxu0 0.0
      %476 = vmatpush1.msra.mxu0 0.0
      %477 = vmatprep.subr.mxu0 0.0
      %478 = vmatpush1.msra.mxu0 0.0
      %479 = vmatprep.subr.mxu0 0.0
      %480 = vmatpush1.msra.mxu0 0.0
      %481 = vmatprep.subr.mxu0 0.0
      %482 = vmatpush1.msra.mxu0 0.0
      %483 = vmatprep.subr.mxu0 0.0
      %484 = vmatpush1.msra.mxu0 0.0
      %485 = vmatprep.subr.mxu0 0.0
      %486 = vmatpush1.msra.mxu0 0.0
      %487 = vmatprep.subr.mxu0 0.0
      %488 = vmatpush1.msra.mxu0 0.0
      %489 = vmatprep.subr.mxu0 0.0
      %490 = vmatpush1.msra.mxu0 0.0
      %491 = vmatprep.mubr.f32.mxu0 0.0
      %492 = vmatmul.mubr.f32.gmra.mrb[0].mxu0 %v425
      %v493 = vpop.f32.mrb[0].mxu0
      %v494 = vadd.f32 %v421, %v493
      %v495 = vpop.f32.mrb[0].mxu0
      %496 = vdwg.mxu0
      %v497 = vxor.u32 %v494, 2147483648
      %v498 = vmul.f32 %v497, 1.442695
      %v499 = vpow.pop %v498
      %v500 = vadd.f32 %v499, 1.0
      %v501 = vrcp.pop %v500
      %v502 = vmul.f32 1.0, %v501
      %504 = vrot.lane.b32.xlu0 %v502, 112
      %v505 = vpop.permute.xlu0 %504
      %v507 = vmul.f32 %v494, %v505
      %vm508 = vcmask 126976
      %509 = vst.msk [vmem:[#allocation2] sm:$0x1f] %vm508, 0.0
      %510 = vst.msk [vmem:[#allocation2 + $0x1] sm:$0x7] %vm385, %v507
      %v511 = vld [vmem:[%s5] sm:$0x7]
      %v512 = vld [vmem:[#allocation2] sm:$0x7]
      %v513 = vlaneseq
      %v514 = vshrl.u32 %v513, 7
      %v515 = vsub.s32 0, %v514
      %v516 = vrot.slane %v511, %v515
      %v517 = vmul.f32 %v512, %v516
      %v518 = vadd.f32 %v517, 0.0
      %v519 = vld [vmem:[#allocation2 + $0x1] sm:$0x7]
      %v520 = vlaneseq
      %v521 = vshrl.u32 %v520, 7
      %v522 = vsub.s32 1, %v521
      %v523 = vrot.slane %v511, %v522
      %v524 = vmul.f32 %v519, %v523
      %v525 = vadd.f32 %v518, %v524
      %v526 = vld [vmem:[#allocation2 + $0x2] sm:$0x7]
      %v527 = vlaneseq
      %v528 = vshrl.u32 %v527, 7
      %v529 = vsub.s32 2, %v528
      %v530 = vrot.slane %v511, %v529
      %v531 = vmul.f32 %v526, %v530
      %v532 = vadd.f32 %v525, %v531
      %v533 = vld [vmem:[%s6] sm:$0x1]
      %v535 = vlaneseq
      %v536 = vshrl.u32 %v535, 7
      %v537 = vsub.s32 0, %v536
      %v538 = vrot.slane %v533, %v537
      %v540 = vadd.f32 %v532, %v538
      %v541 = vld [vmem:[%s7] sm:$0x1]
      %v543 = vlaneseq
      %v544 = vshrl.u32 %v543, 7
      %v545 = vsub.s32 0, %v544
      %v546 = vrot.slane %v541, %v545
      %v548 = vmul.f32 %v540, %v546
      %v549 = vld [vmem:[%s8] sm:$0x1]
      %v551 = vlaneseq
      %v552 = vshrl.u32 %v551, 7
      %v553 = vsub.s32 0, %v552
      %v554 = vrot.slane %v549, %v553
      %v556 = vadd.f32 %v548, %v554
      %v557 = vxor.u32 %v556, 2147483648
      %v558 = vmul.f32 %v557, 1.442695
      %v559 = vpow.pop %v558
      %v560 = vadd.f32 %v559, 1.0
      %v561 = vrcp.pop %v560
      %v562 = vmul.f32 1.0, %v561
      %v563 = vmul.f32 %v556, %v562
      %v564 = vld [vmem:[%s9] sm:$0xff]
      %v565 = vld [vmem:[%s9 + $0x8] sm:$0xff]
      %v566 = vld [vmem:[%s10] sm:$0x1]
      %v568 = vlaneseq
      %v569 = vshrl.u32 %v568, 7
      %v570 = vsub.s32 0, %v569
      %v571 = vrot.slane %v566, %v570
      %v574 = vsel %vm423, %v563, 0
      %576 = vmatprep.subr.mxu0 0.0
      %577 = vmatpush1.msra.mxu0 %v564
      %578 = vmatprep.subr.mxu0 0.0
      %579 = vmatpush1.msra.mxu0 %v565
      %580 = vmatprep.subr.mxu0 0.0
      %581 = vmatpush1.msra.mxu0 0.0
      %582 = vmatprep.subr.mxu0 0.0
      %583 = vmatpush1.msra.mxu0 0.0
      %584 = vmatprep.subr.mxu0 0.0
      %585 = vmatpush1.msra.mxu0 0.0
      %586 = vmatprep.subr.mxu0 0.0
      %587 = vmatpush1.msra.mxu0 0.0
      %588 = vmatprep.subr.mxu0 0.0
      %589 = vmatpush1.msra.mxu0 0.0
      %590 = vmatprep.subr.mxu0 0.0
      %591 = vmatpush1.msra.mxu0 0.0
      %592 = vmatprep.subr.mxu0 0.0
      %593 = vmatpush1.msra.mxu0 0.0
      %594 = vmatprep.subr.mxu0 0.0
      %595 = vmatpush1.msra.mxu0 0.0
      %596 = vmatprep.subr.mxu0 0.0
      %597 = vmatpush1.msra.mxu0 0.0
      %598 = vmatprep.subr.mxu0 0.0
      %599 = vmatpush1.msra.mxu0 0.0
      %600 = vmatprep.subr.mxu0 0.0
      %601 = vmatpush1.msra.mxu0 0.0
      %602 = vmatprep.subr.mxu0 0.0
      %603 = vmatpush1.msra.mxu0 0.0
      %604 = vmatprep.subr.mxu0 0.0
      %605 = vmatpush1.msra.mxu0 0.0
      %606 = vmatprep.subr.mxu0 0.0
      %607 = vmatpush1.msra.mxu0 0.0
      %608 = vmatprep.subr.mxu0 0.0
      %609 = vmatpush1.msra.mxu0 0.0
      %610 = vmatprep.subr.mxu0 0.0
      %611 = vmatpush1.msra.mxu0 0.0
      %612 = vmatprep.subr.mxu0 0.0
      %613 = vmatpush1.msra.mxu0 0.0
      %614 = vmatprep.subr.mxu0 0.0
      %615 = vmatpush1.msra.mxu0 0.0
      %616 = vmatprep.subr.mxu0 0.0
      %617 = vmatpush1.msra.mxu0 0.0
      %618 = vmatprep.subr.mxu0 0.0
      %619 = vmatpush1.msra.mxu0 0.0
      %620 = vmatprep.subr.mxu0 0.0
      %621 = vmatpush1.msra.mxu0 0.0
      %622 = vmatprep.subr.mxu0 0.0
      %623 = vmatpush1.msra.mxu0 0.0
      %624 = vmatprep.subr.mxu0 0.0
      %625 = vmatpush1.msra.mxu0 0.0
      %626 = vmatprep.subr.mxu0 0.0
      %627 = vmatpush1.msra.mxu0 0.0
      %628 = vmatprep.subr.mxu0 0.0
      %629 = vmatpush1.msra.mxu0 0.0
      %630 = vmatprep.subr.mxu0 0.0
      %631 = vmatpush1.msra.mxu0 0.0
      %632 = vmatprep.subr.mxu0 0.0
      %633 = vmatpush1.msra.mxu0 0.0
      %634 = vmatprep.subr.mxu0 0.0
      %635 = vmatpush1.msra.mxu0 0.0
      %636 = vmatprep.subr.mxu0 0.0
      %637 = vmatpush1.msra.mxu0 0.0
      %638 = vmatprep.subr.mxu0 0.0
      %639 = vmatpush1.msra.mxu0 0.0
      %640 = vmatprep.mubr.f32.mxu0 0.0
      %641 = vmatmul.mubr.f32.gmra.mrb[0].mxu0 %v574
      %v642 = vpop.f32.mrb[0].mxu0
      %v643 = vadd.f32 %v571, %v642
      %v644 = vpop.f32.mrb[0].mxu0
      %645 = vdwg.mxu0
      %v646 = vadd.f32 %v382, %v643
      %647 = vst.msk [vmem:[%s381] sm:$0x7] %vm385, %v646
      %p648 = scmp.lt.s32.totalorder %s22, 1
      %s649 = scalar_select %p648, %s22, 1
      %s650 = smul.addr %s649, 4
      %s651 = scalar_lea.vmem %s11, %s650
      // Predicated region
      $region65: #{model_forward.19} parent=63 // pred_check
        %p652 = pneg %p276
      $region66: #{model_forward.19} parent=63 // pred_check_branch
        %654 = sbr.rel (%p652) target = $region68
      $region67: #{model_forward.19} parent=63 // pred_region
        _
      $region68: #{model_forward.19} parent=63 // pred_fallthru
        _
    $region64: #{model_forward.19} parent=5 // pred_fallthru
      _
    %p655 = scmp.le.s32.totalorder 2, %s17
    // Predicated region
    $region69: #{model_forward.19} parent=5 // pred_check
      %p656 = pneg %p655
    $region70: #{model_forward.19} parent=5 // pred_check_branch
      %658 = sbr.rel (%p656) target = $region72
    $region71: #{model_forward.19} parent=5 // pred_region
      %s659 = ssub.s32 %s17, 2
      // Predicated region
      $region73: #{model_forward.19} parent=71 // pred_check
        %p660 = pneg %p282
      $region74: #{model_forward.19} parent=71 // pred_check_branch
        %662 = sbr.rel (%p660) target = $region76
      $region75: #{model_forward.19} parent=71 // pred_region
        %p663 = scmp.lt.s32.totalorder %s23, 1
        %s664 = scalar_select %p663, %s23, 1
        %s665 = smul.addr %s664, 4
        %s666 = scalar_lea.vmem %s11, %s665
      $region76: #{model_forward.19} parent=71 // pred_fallthru
        _
    $region72: #{model_forward.19} parent=5 // pred_fallthru
      _
  $region6: #{model_forward.19} parent=0 // loop_footer
    %s21 = sadd.s32 1, %s17
  $region7: #{model_forward.19} parent=0 // loop_footer_branch
    %16 = sbr.rel target = $region3
  $region8: #{model_forward.19} parent=0 // loop_exit
    _

// kernel: model_forward.20
$region0: #{model_forward.20}
  #allocation0 [shape = 'u32[]', space=smem, size = 0x4, offset = 0x4, fixed_abs, tag = 'smem constant byte address 0x4 - core index']
  #allocation1 [shape = 'u32[144,128]{1,0:T(1,128)}', space=vmem, size = 0x12000, scoped, tag = 'internal scratch']
  %s0 = inlined_call_operand.vmem [shape: f32[8,16], index: 0, kind: input, shape index: {}]
  %s1 = inlined_call_operand.vmem [shape: f32[1,16], index: 1, kind: input, shape index: {}]
  %s2 = inlined_call_operand.vmem [shape: f32[1,16], index: 2, kind: input, shape index: {}]
  %s3 = inlined_call_operand.vmem [shape: f32[16,32], index: 3, kind: input, shape index: {}]
  %s4 = inlined_call_operand.vmem [shape: f32[1,32], index: 4, kind: input, shape index: {}]
  %s5 = inlined_call_operand.vmem [shape: f32[32,16], index: 5, kind: input, shape index: {}]
  %s6 = inlined_call_operand.vmem [shape: f32[1,16], index: 6, kind: input, shape index: {}]
  %s7 = inlined_call_operand.vmem [shape: f32[1,16], index: 7, kind: input, shape index: {}]
  %s8 = inlined_call_operand.vmem [shape: f32[1,16], index: 8, kind: input, shape index: {}]
  %s9 = inlined_call_operand.vmem [shape: f32[8,16], index: 9, kind: output, shape index: {}]
  %s10 = sld [smem:[#allocation0]]
  $region46: #{model_forward.20} parent=0
    _
  %s12 = ssub.s32 1, %s10
  %s13 = scalar_select 0, %s12, %s10
  // Predicated region
  $region2: #{model_forward.20} parent=0 // pred_check
    _
  $region3: #{model_forward.20} parent=0 // pred_check_branch
    %15 = sbr.rel (0) target = $region5
  $region4: #{model_forward.20} parent=0 // pred_region
    _
  $region5: #{model_forward.20} parent=0 // pred_fallthru
    _
  // Predicated region
  $region6: #{model_forward.20} parent=0 // pred_check
    _
  $region7: #{model_forward.20} parent=0 // pred_check_branch
    %17 = sbr.rel (0) target = $region9
  $region8: #{model_forward.20} parent=0 // pred_region
    _
  $region9: #{model_forward.20} parent=0 // pred_fallthru
    _
  // Predicated region
  $region10: #{model_forward.20} parent=0 // pred_check
    _
  $region11: #{model_forward.20} parent=0 // pred_check_branch
    %19 = sbr.rel (0) target = $region13
  $region12: #{model_forward.20} parent=0 // pred_region
    _
  $region13: #{model_forward.20} parent=0 // pred_fallthru
    _
  // Predicated region
  $region14: #{model_forward.20} parent=0 // pred_check
    _
  $region15: #{model_forward.20} parent=0 // pred_check_branch
    %21 = sbr.rel (0) target = $region17
  $region16: #{model_forward.20} parent=0 // pred_region
    _
  $region17: #{model_forward.20} parent=0 // pred_fallthru
    _
  // Predicated region
  $region18: #{model_forward.20} parent=0 // pred_check
    _
  $region19: #{model_forward.20} parent=0 // pred_check_branch
    %23 = sbr.rel (0) target = $region21
  $region20: #{model_forward.20} parent=0 // pred_region
    _
  $region21: #{model_forward.20} parent=0 // pred_fallthru
    _
  // Predicated region
  $region22: #{model_forward.20} parent=0 // pred_check
    _
  $region23: #{model_forward.20} parent=0 // pred_check_branch
    %25 = sbr.rel (0) target = $region25
  $region24: #{model_forward.20} parent=0 // pred_region
    _
  $region25: #{model_forward.20} parent=0 // pred_fallthru
    _
  // Predicated region
  $region26: #{model_forward.20} parent=0 // pred_check
    _
  $region27: #{model_forward.20} parent=0 // pred_check_branch
    %27 = sbr.rel (0) target = $region29
  $region28: #{model_forward.20} parent=0 // pred_region
    _
  $region29: #{model_forward.20} parent=0 // pred_fallthru
    _
  // Predicated region
  $region30: #{model_forward.20} parent=0 // pred_check
    _
  $region31: #{model_forward.20} parent=0 // pred_check_branch
    %29 = sbr.rel (0) target = $region33
  $region32: #{model_forward.20} parent=0 // pred_region
    _
  $region33: #{model_forward.20} parent=0 // pred_fallthru
    _
  // Predicated region
  $region34: #{model_forward.20} parent=0 // pred_check
    _
  $region35: #{model_forward.20} parent=0 // pred_check_branch
    %31 = sbr.rel (0) target = $region37
  $region36: #{model_forward.20} parent=0 // pred_region
    _
  $region37: #{model_forward.20} parent=0 // pred_fallthru
    _
  %v32 = vld [vmem:[%s0] sm:$0xff]
  %v33 = vld [vmem:[%s1] sm:$0x1]
  %v34 = vld [vmem:[%s2] sm:$0x1]
  %vm35 = vcmask 130048
  %v36 = vsel %vm35, %v32, 0.0
  %37 = vadd.xlane.f32.xlu0 %v36
  %v38 = vpop.xlane.xlu0 %37
  %v39 = vrcp.pop 16.0
  %v40 = vmul.f32 %v38, %v39
  %v41 = vsub.f32 %v32, %v40
  %v42 = vmul.f32 %v41, %v41
  %v43 = vsel %vm35, %v42, 0.0
  %44 = vadd.xlane.f32.xlu0 %v43
  %v45 = vpop.xlane.xlu0 %44
  %v46 = vmul.f32 %v45, %v39
  %v47 = vadd.f32 %v46, 1e-05
  %v48 = vrsqrt.pop %v47
  %v49 = vmul.f32 %v41, %v48
  %v51 = vlaneseq
  %v52 = vshrl.u32 %v51, 7
  %v53 = vsub.s32 0, %v52
  %v54 = vrot.slane %v33, %v53
  %v56 = vmul.f32 %v49, %v54
  %v58 = vlaneseq
  %v59 = vshrl.u32 %v58, 7
  %v60 = vsub.s32 0, %v59
  %v61 = vrot.slane %v34, %v60
  %v63 = vadd.f32 %v56, %v61
  %v64 = vld [vmem:[%s3] sm:$0xff]
  %v65 = vld [vmem:[%s3 + $0x8] sm:$0xff]
  %v66 = vld [vmem:[%s4] sm:$0x1]
  %v68 = vlaneseq
  %v69 = vshrl.u32 %v68, 7
  %v70 = vsub.s32 0, %v69
  %v71 = vrot.slane %v66, %v70
  %v74 = vsel %vm35, %v63, 0
  %76 = vmatprep.subr.mxu0 0.0
  %77 = vmatpush1.msra.mxu0 %v64
  %78 = vmatprep.subr.mxu0 0.0
  %79 = vmatpush1.msra.mxu0 %v65
  %80 = vmatprep.subr.mxu0 0.0
  %81 = vmatpush1.msra.mxu0 0.0
  %82 = vmatprep.subr.mxu0 0.0
  %83 = vmatpush1.msra.mxu0 0.0
  %84 = vmatprep.subr.mxu0 0.0
  %85 = vmatpush1.msra.mxu0 0.0
  %86 = vmatprep.subr.mxu0 0.0
  %87 = vmatpush1.msra.mxu0 0.0
  %88 = vmatprep.subr.mxu0 0.0
  %89 = vmatpush1.msra.mxu0 0.0
  %90 = vmatprep.subr.mxu0 0.0
  %91 = vmatpush1.msra.mxu0 0.0
  %92 = vmatprep.subr.mxu0 0.0
  %93 = vmatpush1.msra.mxu0 0.0
  %94 = vmatprep.subr.mxu0 0.0
  %95 = vmatpush1.msra.mxu0 0.0
  %96 = vmatprep.subr.mxu0 0.0
  %97 = vmatpush1.msra.mxu0 0.0
  %98 = vmatprep.subr.mxu0 0.0
  %99 = vmatpush1.msra.mxu0 0.0
  %100 = vmatprep.subr.mxu0 0.0
  %101 = vmatpush1.msra.mxu0 0.0
  %102 = vmatprep.subr.mxu0 0.0
  %103 = vmatpush1.msra.mxu0 0.0
  %104 = vmatprep.subr.mxu0 0.0
  %105 = vmatpush1.msra.mxu0 0.0
  %106 = vmatprep.subr.mxu0 0.0
  %107 = vmatpush1.msra.mxu0 0.0
  %108 = vmatprep.subr.mxu0 0.0
  %109 = vmatpush1.msra.mxu0 0.0
  %110 = vmatprep.subr.mxu0 0.0
  %111 = vmatpush1.msra.mxu0 0.0
  %112 = vmatprep.subr.mxu0 0.0
  %113 = vmatpush1.msra.mxu0 0.0
  %114 = vmatprep.subr.mxu0 0.0
  %115 = vmatpush1.msra.mxu0 0.0
  %116 = vmatprep.subr.mxu0 0.0
  %117 = vmatpush1.msra.mxu0 0.0
  %118 = vmatprep.subr.mxu0 0.0
  %119 = vmatpush1.msra.mxu0 0.0
  %120 = vmatprep.subr.mxu0 0.0
  %121 = vmatpush1.msra.mxu0 0.0
  %122 = vmatprep.subr.mxu0 0.0
  %123 = vmatpush1.msra.mxu0 0.0
  %124 = vmatprep.subr.mxu0 0.0
  %125 = vmatpush1.msra.mxu0 0.0
  %126 = vmatprep.subr.mxu0 0.0
  %127 = vmatpush1.msra.mxu0 0.0
  %128 = vmatprep.subr.mxu0 0.0
  %129 = vmatpush1.msra.mxu0 0.0
  %130 = vmatprep.subr.mxu0 0.0
  %131 = vmatpush1.msra.mxu0 0.0
  %132 = vmatprep.subr.mxu0 0.0
  %133 = vmatpush1.msra.mxu0 0.0
  %134 = vmatprep.subr.mxu0 0.0
  %135 = vmatpush1.msra.mxu0 0.0
  %136 = vmatprep.subr.mxu0 0.0
  %137 = vmatpush1.msra.mxu0 0.0
  %138 = vmatprep.subr.mxu0 0.0
  %139 = vmatpush1.msra.mxu0 0.0
  %140 = vmatprep.mubr.f32.mxu0 0.0
  %141 = vmatmul.mubr.f32.gmra.mrb[0].mxu0 %v74
  %v142 = vpop.f32.mrb[0].mxu0
  %v143 = vadd.f32 %v71, %v142
  %v144 = vpop.f32.mrb[0].mxu0
  %145 = vdwg.mxu0
  %v146 = vxor.u32 %v143, 2147483648
  %v147 = vmul.f32 %v146, 1.442695
  %v148 = vpow.pop %v147
  %v149 = vadd.f32 %v148, 1.0
  %v150 = vrcp.pop %v149
  %v151 = vmul.f32 1.0, %v150
  %v152 = vmul.f32 %v143, %v151
  %v153 = vld [vmem:[%s5] sm:$0xff]
  %v154 = vld [vmem:[%s5 + $0x8] sm:$0xff]
  %v155 = vld [vmem:[%s5 + $0x10] sm:$0xff]
  %v156 = vld [vmem:[%s5 + $0x18] sm:$0xff]
  %v157 = vld [vmem:[%s6] sm:$0x1]
  %v159 = vlaneseq
  %v160 = vshrl.u32 %v159, 7
  %v161 = vsub.s32 0, %v160
  %v162 = vrot.slane %v157, %v161
  %vm164 = vcmask 261120
  %v166 = vsel %vm164, %v152, 0
  %168 = vmatprep.subr.mxu0 0.0
  %169 = vmatpush1.msra.mxu0 %v153
  %170 = vmatprep.subr.mxu0 0.0
  %171 = vmatpush1.msra.mxu0 %v154
  %172 = vmatprep.subr.mxu0 0.0
  %173 = vmatpush1.msra.mxu0 %v155
  %174 = vmatprep.subr.mxu0 0.0
  %175 = vmatpush1.msra.mxu0 %v156
  %176 = vmatprep.subr.mxu0 0.0
  %177 = vmatpush1.msra.mxu0 0.0
  %178 = vmatprep.subr.mxu0 0.0
  %179 = vmatpush1.msra.mxu0 0.0
  %180 = vmatprep.subr.mxu0 0.0
  %181 = vmatpush1.msra.mxu0 0.0
  %182 = vmatprep.subr.mxu0 0.0
  %183 = vmatpush1.msra.mxu0 0.0
  %184 = vmatprep.subr.mxu0 0.0
  %185 = vmatpush1.msra.mxu0 0.0
  %186 = vmatprep.subr.mxu0 0.0
  %187 = vmatpush1.msra.mxu0 0.0
  %188 = vmatprep.subr.mxu0 0.0
  %189 = vmatpush1.msra.mxu0 0.0
  %190 = vmatprep.subr.mxu0 0.0
  %191 = vmatpush1.msra.mxu0 0.0
  %192 = vmatprep.subr.mxu0 0.0
  %193 = vmatpush1.msra.mxu0 0.0
  %194 = vmatprep.subr.mxu0 0.0
  %195 = vmatpush1.msra.mxu0 0.0
  %196 = vmatprep.subr.mxu0 0.0
  %197 = vmatpush1.msra.mxu0 0.0
  %198 = vmatprep.subr.mxu0 0.0
  %199 = vmatpush1.msra.mxu0 0.0
  %200 = vmatprep.subr.mxu0 0.0
  %201 = vmatpush1.msra.mxu0 0.0
  %202 = vmatprep.subr.mxu0 0.0
  %203 = vmatpush1.msra.mxu0 0.0
  %204 = vmatprep.subr.mxu0 0.0
  %205 = vmatpush1.msra.mxu0 0.0
  %206 = vmatprep.subr.mxu0 0.0
  %207 = vmatpush1.msra.mxu0 0.0
  %208 = vmatprep.subr.mxu0 0.0
  %209 = vmatpush1.msra.mxu0 0.0
  %210 = vmatprep.subr.mxu0 0.0
  %211 = vmatpush1.msra.mxu0 0.0
  %212 = vmatprep.subr.mxu0 0.0
  %213 = vmatpush1.msra.mxu0 0.0
  %214 = vmatprep.subr.mxu0 0.0
  %215 = vmatpush1.msra.mxu0 0.0
  %216 = vmatprep.subr.mxu0 0.0
  %217 = vmatpush1.msra.mxu0 0.0
  %218 = vmatprep.subr.mxu0 0.0
  %219 = vmatpush1.msra.mxu0 0.0
  %220 = vmatprep.subr.mxu0 0.0
  %221 = vmatpush1.msra.mxu0 0.0
  %222 = vmatprep.subr.mxu0 0.0
  %223 = vmatpush1.msra.mxu0 0.0
  %224 = vmatprep.subr.mxu0 0.0
  %225 = vmatpush1.msra.mxu0 0.0
  %226 = vmatprep.subr.mxu0 0.0
  %227 = vmatpush1.msra.mxu0 0.0
  %228 = vmatprep.subr.mxu0 0.0
  %229 = vmatpush1.msra.mxu0 0.0
  %230 = vmatprep.subr.mxu0 0.0
  %231 = vmatpush1.msra.mxu0 0.0
  %232 = vmatprep.mubr.f32.mxu0 0.0
  %233 = vmatmul.mubr.f32.gmra.mrb[0].mxu0 %v166
  %v234 = vpop.f32.mrb[0].mxu0
  %v235 = vadd.f32 %v162, %v234
  %v236 = vpop.f32.mrb[0].mxu0
  %237 = vdwg.mxu0
  %v238 = vmul.f32 %v235, 0.5
  %v239 = vadd.f32 %v32, %v238
  %v240 = vld [vmem:[%s7] sm:$0x1]
  %v241 = vld [vmem:[%s8] sm:$0x1]
  %v242 = vsel %vm35, %v239, 0.0
  %243 = vadd.xlane.f32.xlu0 %v242
  %v244 = vpop.xlane.xlu0 %243
  %v245 = vmul.f32 %v244, %v39
  %v246 = vsub.f32 %v239, %v245
  %v247 = vmul.f32 %v246, %v246
  %v248 = vsel %vm35, %v247, 0.0
  %249 = vadd.xlane.f32.xlu0 %v248
  %v250 = vpop.xlane.xlu0 %249
  %v251 = vmul.f32 %v250, %v39
  %v252 = vadd.f32 %v251, 1e-05
  %v253 = vrsqrt.pop %v252
  %v254 = vmul.f32 %v246, %v253
  %v256 = vlaneseq
  %v257 = vshrl.u32 %v256, 7
  %v258 = vsub.s32 0, %v257
  %v259 = vrot.slane %v240, %v258
  %v261 = vmul.f32 %v254, %v259
  %v263 = vlaneseq
  %v264 = vshrl.u32 %v263, 7
  %v265 = vsub.s32 0, %v264
  %v266 = vrot.slane %v241, %v265
  %v268 = vadd.f32 %v261, %v266
  %269 = vst.msk [vmem:[%s9] sm:$0xff] %vm35, %v268
  // Predicated region
  $region38: #{model_forward.20} parent=0 // pred_check
    _
  $region39: #{model_forward.20} parent=0 // pred_check_branch
    %271 = sbr.rel (0) target = $region41
  $region40: #{model_forward.20} parent=0 // pred_region
    _
  $region41: #{model_forward.20} parent=0 // pred_fallthru
    _
  // Predicated region
  $region42: #{model_forward.20} parent=0 // pred_check
    _
  $region43: #{model_forward.20} parent=0 // pred_check_branch
    %273 = sbr.rel (0) target = $region45
  $region44: #{model_forward.20} parent=0 // pred_region
    _
  $region45: #{model_forward.20} parent=0 // pred_fallthru
    _

// kernel: model_forward.18
$region0: #{model_forward.18}
  #allocation0 [shape = 'u32[]', space=smem, size = 0x4, offset = 0x4, fixed_abs, tag = 'smem constant byte address 0x4 - core index']
  #allocation1 [shape = 'u32[144,128]{1,0:T(1,128)}', space=vmem, size = 0x12000, scoped, tag = 'internal scratch']
  %s0 = inlined_call_operand.vmem [shape: f32[2,3,16], index: 0, kind: input, shape index: {}]
  %s1 = inlined_call_operand.vmem [shape: f32[1,16], index: 1, kind: input, shape index: {}]
  %s2 = inlined_call_operand.vmem [shape: f32[1,16], index: 2, kind: input, shape index: {}]
  %s3 = inlined_call_operand.vmem [shape: f32[16,48], index: 3, kind: input, shape index: {}]
  %s4 = inlined_call_operand.vmem [shape: f32[1,48], index: 4, kind: input, shape index: {}]
  %s5 = inlined_call_operand.vmem [shape: f32[16,16], index: 5, kind: input, shape index: {}]
  %s6 = inlined_call_operand.vmem [shape: f32[1,16], index: 6, kind: input, shape index: {}]
  %s7 = inlined_call_operand.vmem [shape: f32[2,1,3], index: 7, kind: input, shape index: {}]
  %s8 = inlined_call_operand.vmem [shape: f32[2,3,16], index: 8, kind: output, shape index: {}]
  %s9 = sld [smem:[#allocation0]]
  $region65: #{model_forward.18} parent=0
    _
  %s11 = ssub.s32 1, %s9
  %s12 = scalar_select 0, %s11, %s9
  loop: start=0, step=1, limit=4
  $region2: #{model_forward.18} parent=0 // loop_pre_header
    _
  $region3: #{model_forward.18} parent=0 // loop_header
    %s14 = sphi 0, %s18
    %p15 = scmp.ge.s32.totalorder %s14, 4
    %s24 = sphi 0, %s26
    %s27 = sphi 0, %s24
    %s28 = sphi 0, %s27
    %s44 = sphi 0, %s28
    %s48 = sphi 0, %s48
    %s50 = sphi 0, %s48
    %s51 = sphi 0, %s50
    %s65 = sphi 0, %s51
    %s69 = sphi 0, %s69
    %s71 = sphi 0, %s69
    %s72 = sphi 0, %s71
    %s86 = sphi 0, %s72
    %s90 = sphi 0, %s90
    %s92 = sphi 0, %s90
    %s93 = sphi 0, %s92
    %s107 = sphi 0, %s93
    %s111 = sphi 0, %s111
    %s113 = sphi 0, %s111
    %s114 = sphi 0, %s113
    %s128 = sphi 0, %s114
    %s132 = sphi 0, %s132
    %s134 = sphi 0, %s132
    %s135 = sphi 0, %s134
    %s149 = sphi 0, %s135
    %s153 = sphi 0, %s153
    %s155 = sphi 0, %s153
    %s156 = sphi 0, %s155
    %s170 = sphi 0, %s156
    %s176 = sphi 0, %s178
    %s179 = sphi 0, %s176
    %s180 = sphi 0, %s179
    %s196 = sphi 0, %s180
    %s202 = sphi 0, %s204
    %s205 = sphi 0, %s202
    %s206 = sphi 0, %s205
    %s222 = sphi 0, %s206
  $region4: #{model_forward.18} parent=0 // loop_header_branch
    %17 = sbr.rel (%p15) target = $region8
  $region5: #{model_forward.18} parent=0 // loop_body
    %s19 = ssub.s32 %s14, 1
    %s20 = ssub.s32 %s14, 2
    %s21 = sadd.s32 %s14, 1
    %s22 = ssub.s32 %s14, %s21
    %p23 = scmp.eq.s32.totalorder %s22, 0
    %s25 = sadd.s32 %s24, 1
    %s26 = scalar_select %p23, %s24, %s25
    %p29 = pneg %p23
    %p30 = scmp.eq.s32.totalorder %s14, 1
    %p31 = por %p29, %p30
    %p32 = scmp.ne.s32.totalorder %s24, %s27
    %p33 = scmp.eq.s32.totalorder %s14, 0
    %p34 = por %p32, %p33
    %p35 = scmp.ne.s32.totalorder %s24, %s27
    %p36 = scmp.eq.s32.totalorder %s19, 1
    %p37 = por %p35, %p36
    %p38 = scmp.ne.s32.totalorder %s27, %s28
    %p39 = scmp.eq.s32.totalorder %s19, 0
    %p40 = por %p38, %p39
    %p41 = scmp.ne.s32.totalorder %s27, %s28
    %p42 = scmp.eq.s32.totalorder %s20, 1
    %p43 = por %p41, %p42
    %p45 = scmp.ne.s32.totalorder %s28, %s44
    %p46 = scmp.eq.s32.totalorder %s20, 0
    %p47 = por %p45, %p46
    %s49 = sadd.s32 %s48, 1
    %p52 = scmp.eq.s32.totalorder %s14, 1
    %p53 = scmp.ne.s32.totalorder %s48, %s50
    %p54 = scmp.eq.s32.totalorder %s14, 0
    %p55 = por %p53, %p54
    %p56 = scmp.ne.s32.totalorder %s48, %s50
    %p57 = scmp.eq.s32.totalorder %s19, 1
    %p58 = por %p56, %p57
    %p59 = scmp.ne.s32.totalorder %s50, %s51
    %p60 = scmp.eq.s32.totalorder %s19, 0
    %p61 = por %p59, %p60
    %p62 = scmp.ne.s32.totalorder %s50, %s51
    %p63 = scmp.eq.s32.totalorder %s20, 1
    %p64 = por %p62, %p63
    %p66 = scmp.ne.s32.totalorder %s51, %s65
    %p67 = scmp.eq.s32.totalorder %s20, 0
    %p68 = por %p66, %p67
    %s70 = sadd.s32 %s69, 1
    %p73 = scmp.eq.s32.totalorder %s14, 1
    %p74 = scmp.ne.s32.totalorder %s69, %s71
    %p75 = scmp.eq.s32.totalorder %s14, 0
    %p76 = por %p74, %p75
    %p77 = scmp.ne.s32.totalorder %s69, %s71
    %p78 = scmp.eq.s32.totalorder %s19, 1
    %p79 = por %p77, %p78
    %p80 = scmp.ne.s32.totalorder %s71, %s72
    %p81 = scmp.eq.s32.totalorder %s19, 0
    %p82 = por %p80, %p81
    %p83 = scmp.ne.s32.totalorder %s71, %s72
    %p84 = scmp.eq.s32.totalorder %s20, 1
    %p85 = por %p83, %p84
    %p87 = scmp.ne.s32.totalorder %s72, %s86
    %p88 = scmp.eq.s32.totalorder %s20, 0
    %p89 = por %p87, %p88
    %s91 = sadd.s32 %s90, 1
    %p94 = scmp.eq.s32.totalorder %s14, 1
    %p95 = scmp.ne.s32.totalorder %s90, %s92
    %p96 = scmp.eq.s32.totalorder %s14, 0
    %p97 = por %p95, %p96
    %p98 = scmp.ne.s32.totalorder %s90, %s92
    %p99 = scmp.eq.s32.totalorder %s19, 1
    %p100 = por %p98, %p99
    %p101 = scmp.ne.s32.totalorder %s92, %s93
    %p102 = scmp.eq.s32.totalorder %s19, 0
    %p103 = por %p101, %p102
    %p104 = scmp.ne.s32.totalorder %s92, %s93
    %p105 = scmp.eq.s32.totalorder %s20, 1
    %p106 = por %p104, %p105
    %p108 = scmp.ne.s32.totalorder %s93, %s107
    %p109 = scmp.eq.s32.totalorder %s20, 0
    %p110 = por %p108, %p109
    %s112 = sadd.s32 %s111, 1
    %p115 = scmp.eq.s32.totalorder %s14, 1
    %p116 = scmp.ne.s32.totalorder %s111, %s113
    %p117 = scmp.eq.s32.totalorder %s14, 0
    %p118 = por %p116, %p117
    %p119 = scmp.ne.s32.totalorder %s111, %s113
    %p120 = scmp.eq.s32.totalorder %s19, 1
    %p121 = por %p119, %p120
    %p122 = scmp.ne.s32.totalorder %s113, %s114
    %p123 = scmp.eq.s32.totalorder %s19, 0
    %p124 = por %p122, %p123
    %p125 = scmp.ne.s32.totalorder %s113, %s114
    %p126 = scmp.eq.s32.totalorder %s20, 1
    %p127 = por %p125, %p126
    %p129 = scmp.ne.s32.totalorder %s114, %s128
    %p130 = scmp.eq.s32.totalorder %s20, 0
    %p131 = por %p129, %p130
    %s133 = sadd.s32 %s132, 1
    %p136 = scmp.eq.s32.totalorder %s14, 1
    %p137 = scmp.ne.s32.totalorder %s132, %s134
    %p138 = scmp.eq.s32.totalorder %s14, 0
    %p139 = por %p137, %p138
    %p140 = scmp.ne.s32.totalorder %s132, %s134
    %p141 = scmp.eq.s32.totalorder %s19, 1
    %p142 = por %p140, %p141
    %p143 = scmp.ne.s32.totalorder %s134, %s135
    %p144 = scmp.eq.s32.totalorder %s19, 0
    %p145 = por %p143, %p144
    %p146 = scmp.ne.s32.totalorder %s134, %s135
    %p147 = scmp.eq.s32.totalorder %s20, 1
    %p148 = por %p146, %p147
    %p150 = scmp.ne.s32.totalorder %s135, %s149
    %p151 = scmp.eq.s32.totalorder %s20, 0
    %p152 = por %p150, %p151
    %s154 = sadd.s32 %s153, 1
    %p157 = scmp.eq.s32.totalorder %s14, 1
    %p158 = scmp.ne.s32.totalorder %s153, %s155
    %p159 = scmp.eq.s32.totalorder %s14, 0
    %p160 = por %p158, %p159
    %p161 = scmp.ne.s32.totalorder %s153, %s155
    %p162 = scmp.eq.s32.totalorder %s19, 1
    %p163 = por %p161, %p162
    %p164 = scmp.ne.s32.totalorder %s155, %s156
    %p165 = scmp.eq.s32.totalorder %s19, 0
    %p166 = por %p164, %p165
    %p167 = scmp.ne.s32.totalorder %s155, %s156
    %p168 = scmp.eq.s32.totalorder %s20, 1
    %p169 = por %p167, %p168
    %p171 = scmp.ne.s32.totalorder %s156, %s170
    %p172 = scmp.eq.s32.totalorder %s20, 0
    %p173 = por %p171, %p172
    %s174 = ssub.s32 %s14, %s21
    %p175 = scmp.eq.s32.totalorder %s174, 0
    %s177 = sadd.s32 %s176, 1
    %s178 = scalar_select %p175, %s176, %s177
    %p181 = pneg %p175
    %p182 = scmp.eq.s32.totalorder %s14, 1
    %p183 = por %p181, %p182
    %p184 = scmp.ne.s32.totalorder %s176, %s179
    %p185 = scmp.eq.s32.totalorder %s14, 0
    %p186 = por %p184, %p185
    %p187 = scmp.ne.s32.totalorder %s176, %s179
    %p188 = scmp.eq.s32.totalorder %s19, 1
    %p189 = por %p187, %p188
    %p190 = scmp.ne.s32.totalorder %s179, %s180
    %p191 = scmp.eq.s32.totalorder %s19, 0
    %p192 = por %p190, %p191
    %p193 = scmp.ne.s32.totalorder %s179, %s180
    %p194 = scmp.eq.s32.totalorder %s20, 1
    %p195 = por %p193, %p194
    %p197 = scmp.ne.s32.totalorder %s180, %s196
    %p198 = scmp.eq.s32.totalorder %s20, 0
    %p199 = por %p197, %p198
    %s200 = ssub.s32 %s14, %s21
    %p201 = scmp.eq.s32.totalorder %s200, 0
    %s203 = sadd.s32 %s202, 1
    %s204 = scalar_select %p201, %s202, %s203
    %p207 = pneg %p201
    %p208 = scmp.eq.s32.totalorder %s14, 1
    %p209 = por %p207, %p208
    %p210 = scmp.ne.s32.totalorder %s202, %s205
    %p211 = scmp.eq.s32.totalorder %s14, 0
    %p212 = por %p210, %p211
    %p213 = scmp.ne.s32.totalorder %s202, %s205
    %p214 = scmp.eq.s32.totalorder %s19, 1
    %p215 = por %p213, %p214
    %p216 = scmp.ne.s32.totalorder %s205, %s206
    %p217 = scmp.eq.s32.totalorder %s19, 0
    %p218 = por %p216, %p217
    %p219 = scmp.ne.s32.totalorder %s205, %s206
    %p220 = scmp.eq.s32.totalorder %s20, 1
    %p221 = por %p219, %p220
    %p223 = scmp.ne.s32.totalorder %s206, %s222
    %p224 = scmp.eq.s32.totalorder %s20, 0
    %p225 = por %p223, %p224
    %p226 = scmp.le.s32.totalorder 1, %s14
    %p227 = scmp.lt.s32.totalorder %s14, 3
    %p228 = pnand %p226, %p227
    %p229 = pneg %p228
    // Predicated region
    $region9: #{model_forward.18} parent=5 // pred_check
      _
    $region10: #{model_forward.18} parent=5 // pred_check_branch
      %231 = sbr.rel (%p228) target = $region12
    $region11: #{model_forward.18} parent=5 // pred_region
      %s232 = ssub.s32 %s14, 1
      // Predicated region
      $region13: #{model_forward.18} parent=11 // pred_check
        %p233 = pneg %p61
      $region14: #{model_forward.18} parent=11 // pred_check_branch
        %235 = sbr.rel (%p233) target = $region16
      $region15: #{model_forward.18} parent=11 // pred_region
        _
      $region16: #{model_forward.18} parent=11 // pred_fallthru
        _
      // Predicated region
      $region17: #{model_forward.18} parent=11 // pred_check
        %p236 = pneg %p82
      $region18: #{model_forward.18} parent=11 // pred_check_branch
        %238 = sbr.rel (%p236) target = $region20
      $region19: #{model_forward.18} parent=11 // pred_region
        _
      $region20: #{model_forward.18} parent=11 // pred_fallthru
        _
      // Predicated region
      $region21: #{model_forward.18} parent=11 // pred_check
        %p239 = pneg %p103
      $region22: #{model_forward.18} parent=11 // pred_check_branch
        %241 = sbr.rel (%p239) target = $region24
      $region23: #{model_forward.18} parent=11 // pred_region
        _
      $region24: #{model_forward.18} parent=11 // pred_fallthru
        _
      // Predicated region
      $region25: #{model_forward.18} parent=11 // pred_check
        %p242 = pneg %p124
      $region26: #{model_forward.18} parent=11 // pred_check_branch
        %244 = sbr.rel (%p242) target = $region28
      $region27: #{model_forward.18} parent=11 // pred_region
        _
      $region28: #{model_forward.18} parent=11 // pred_fallthru
        _
      // Predicated region
      $region29: #{model_forward.18} parent=11 // pred_check
        %p245 = pneg %p145
      $region30: #{model_forward.18} parent=11 // pred_check_branch
        %247 = sbr.rel (%p245) target = $region32
      $region31: #{model_forward.18} parent=11 // pred_region
        _
      $region32: #{model_forward.18} parent=11 // pred_fallthru
        _
      // Predicated region
      $region33: #{model_forward.18} parent=11 // pred_check
        %p248 = pneg %p166
      $region34: #{model_forward.18} parent=11 // pred_check_branch
        %250 = sbr.rel (%p248) target = $region36
      $region35: #{model_forward.18} parent=11 // pred_region
        _
      $region36: #{model_forward.18} parent=11 // pred_fallthru
        _
    $region12: #{model_forward.18} parent=5 // pred_fallthru
      _
    %p251 = scmp.lt.s32.totalorder %s14, 2
    // Predicated region
    $region37: #{model_forward.18} parent=5 // pred_check
      %p252 = pneg %p251
    $region38: #{model_forward.18} parent=5 // pred_check_branch
      %254 = sbr.rel (%p252) target = $region40
    $region39: #{model_forward.18} parent=5 // pred_region
      // Predicated region
      $region41: #{model_forward.18} parent=39 // pred_check
        %p255 = pneg %p34
      $region42: #{model_forward.18} parent=39 // pred_check_branch
        %257 = sbr.rel (%p255) target = $region44
      $region43: #{model_forward.18} parent=39 // pred_region
        %p258 = scmp.lt.s32.totalorder %s14, 1
        %s259 = scalar_select %p258, %s14, 1
        %s260 = smul.addr %s259, 4
        %s261 = scalar_lea.vmem %s0, %s260
      $region44: #{model_forward.18} parent=39 // pred_fallthru
        _
      // Predicated region
      $region45: #{model_forward.18} parent=39 // pred_check
        %p262 = pneg %p186
      $region46: #{model_forward.18} parent=39 // pred_check_branch
        %264 = sbr.rel (%p262) target = $region48
      $region47: #{model_forward.18} parent=39 // pred_region
        %p265 = scmp.lt.s32.totalorder %s14, 1
        %s266 = scalar_select %p265, %s14, 1
        %s267 = scalar_lea.vmem %s7, %s266
      $region48: #{model_forward.18} parent=39 // pred_fallthru
        _
    $region40: #{model_forward.18} parent=5 // pred_fallthru
      _
    %p268 = scmp.le.s32.totalorder 1, %s14
    %p269 = scmp.lt.s32.totalorder %s14, 3
    %p270 = pnand %p268, %p269
    %p271 = pneg %p270
    // Predicated region
    $region49: #{model_forward.18} parent=5 // pred_check
      _
    $region50: #{model_forward.18} parent=5 // pred_check_branch
      %273 = sbr.rel (%p270) target = $region52
    $region51: #{model_forward.18} parent=5 // pred_region
      %s274 = ssub.s32 %s14, 1
      %p275 = scmp.lt.s32.totalorder %s19, 1
      %s276 = scalar_select %p275, %s19, 1
      %s277 = smul.addr %s276, 4
      %s278 = scalar_lea.vmem %s0, %s277
      %p279 = pneg %p40
      %p280 = pneg %p37
      %p281 = pneg %p61
      %p282 = pneg %p58
      %p283 = pneg %p82
      %p284 = pneg %p79
      %p285 = pneg %p103
      %p286 = pneg %p100
      %p287 = pneg %p124
      %p288 = pneg %p121
      %p289 = pneg %p145
      %p290 = pneg %p142
      %p291 = pneg %p166
      %p292 = pneg %p163
      %p293 = scmp.lt.s32.totalorder %s19, 1
      %s294 = scalar_select %p293, %s19, 1
      %s295 = scalar_lea.vmem %s7, %s294
      %p296 = pneg %p192
      %p297 = pneg %p189
      %p298 = pneg %p218
      %p299 = pneg %p215
      %p300 = scmp.lt.s32.totalorder %s19, 1
      %s301 = scalar_select %p300, %s19, 1
      %s302 = smul.addr %s301, 4
      %s303 = scalar_lea.vmem %s8, %s302
      %p304 = scmp.lt.s32.totalorder %s19, 1
      %s305 = scalar_select %p304, %s19, 1
      %s306 = smul.addr %s305, 4
      %s307 = scalar_lea.vmem %s0, %s306
      %p308 = scmp.lt.s32.totalorder %s19, 1
      %s309 = scalar_select %p308, %s19, 1
      %s310 = scalar_lea.vmem %s7, %s309
      %p311 = scmp.lt.s32.totalorder %s19, 1
      %s312 = scalar_select %p311, %s19, 1
      %s313 = smul.addr %s312, 4
      %s314 = scalar_lea.vmem %s8, %s313
      %v315 = vld [vmem:[%s307] sm:$0x7]
      %v316 = vld [vmem:[%s1] sm:$0x1]
      %v317 = vld [vmem:[%s2] sm:$0x1]
      %vm318 = vcmask 124928
      %v319 = vsel %vm318, %v315, 0.0
      %320 = vadd.xlane.f32.xlu0 %v319
      %v321 = vpop.xlane.xlu0 %320
      %v322 = vrcp.pop 16.0
      %v323 = vmul.f32 %v321, %v322
      %v324 = vsub.f32 %v315, %v323
      %v325 = vmul.f32 %v324, %v324
      %v326 = vsel %vm318, %v325, 0.0
      %327 = vadd.xlane.f32.xlu0 %v326
      %v328 = vpop.xlane.xlu0 %327
      %v329 = vmul.f32 %v328, %v322
      %v330 = vadd.f32 %v329, 1e-05
      %v331 = vrsqrt.pop %v330
      %v332 = vmul.f32 %v324, %v331
      %v334 = vlaneseq
      %v335 = vshrl.u32 %v334, 7
      %v336 = vsub.s32 0, %v335
      %v337 = vrot.slane %v316, %v336
      %v339 = vmul.f32 %v332, %v337
      %v341 = vlaneseq
      %v342 = vshrl.u32 %v341, 7
      %v343 = vsub.s32 0, %v342
      %v344 = vrot.slane %v317, %v343
      %v346 = vadd.f32 %v339, %v344
      %v347 = vld [vmem:[%s3] sm:$0xff]
      %v348 = vld [vmem:[%s3 + $0x8] sm:$0xff]
      %v349 = vld [vmem:[%s4] sm:$0x1]
      %v351 = vlaneseq
      %v352 = vshrl.u32 %v351, 7
      %v353 = vsub.s32 0, %v352
      %v354 = vrot.slane %v349, %v353
      %vm356 = vcmask 130048
      %v358 = vsel %vm356, %v346, 0
      %360 = vmatprep.subr.mxu0 0.0
      %361 = vmatpush1.msra.mxu0 %v347
      %362 = vmatprep.subr.mxu0 0.0
      %363 = vmatpush1.msra.mxu0 %v348
      %364 = vmatprep.subr.mxu0 0.0
      %365 = vmatpush1.msra.mxu0 0.0
      %366 = vmatprep.subr.mxu0 0.0
      %367 = vmatpush1.msra.mxu0 0.0
      %368 = vmatprep.subr.mxu0 0.0
      %369 = vmatpush1.msra.mxu0 0.0
      %370 = vmatprep.subr.mxu0 0.0
      %371 = vmatpush1.msra.mxu0 0.0
      %372 = vmatprep.subr.mxu0 0.0
      %373 = vmatpush1.msra.mxu0 0.0
      %374 = vmatprep.subr.mxu0 0.0
      %375 = vmatpush1.msra.mxu0 0.0
      %376 = vmatprep.subr.mxu0 0.0
      %377 = vmatpush1.msra.mxu0 0.0
      %378 = vmatprep.subr.mxu0 0.0
      %379 = vmatpush1.msra.mxu0 0.0
      %380 = vmatprep.subr.mxu0 0.0
      %381 = vmatpush1.msra.mxu0 0.0
      %382 = vmatprep.subr.mxu0 0.0
      %383 = vmatpush1.msra.mxu0 0.0
      %384 = vmatprep.subr.mxu0 0.0
      %385 = vmatpush1.msra.mxu0 0.0
      %386 = vmatprep.subr.mxu0 0.0
      %387 = vmatpush1.msra.mxu0 0.0
      %388 = vmatprep.subr.mxu0 0.0
      %389 = vmatpush1.msra.mxu0 0.0
      %390 = vmatprep.subr.mxu0 0.0
      %391 = vmatpush1.msra.mxu0 0.0
      %392 = vmatprep.subr.mxu0 0.0
      %393 = vmatpush1.msra.mxu0 0.0
      %394 = vmatprep.subr.mxu0 0.0
      %395 = vmatpush1.msra.mxu0 0.0
      %396 = vmatprep.subr.mxu0 0.0
      %397 = vmatpush1.msra.mxu0 0.0
      %398 = vmatprep.subr.mxu0 0.0
      %399 = vmatpush1.msra.mxu0 0.0
      %400 = vmatprep.subr.mxu0 0.0
      %401 = vmatpush1.msra.mxu0 0.0
      %402 = vmatprep.subr.mxu0 0.0
      %403 = vmatpush1.msra.mxu0 0.0
      %404 = vmatprep.subr.mxu0 0.0
      %405 = vmatpush1.msra.mxu0 0.0
      %406 = vmatprep.subr.mxu0 0.0
      %407 = vmatpush1.msra.mxu0 0.0
      %408 = vmatprep.subr.mxu0 0.0
      %409 = vmatpush1.msra.mxu0 0.0
      %410 = vmatprep.subr.mxu0 0.0
      %411 = vmatpush1.msra.mxu0 0.0
      %412 = vmatprep.subr.mxu0 0.0
      %413 = vmatpush1.msra.mxu0 0.0
      %414 = vmatprep.subr.mxu0 0.0
      %415 = vmatpush1.msra.mxu0 0.0
      %416 = vmatprep.subr.mxu0 0.0
      %417 = vmatpush1.msra.mxu0 0.0
      %418 = vmatprep.subr.mxu0 0.0
      %419 = vmatpush1.msra.mxu0 0.0
      %420 = vmatprep.subr.mxu0 0.0
      %421 = vmatpush1.msra.mxu0 0.0
      %422 = vmatprep.subr.mxu0 0.0
      %423 = vmatpush1.msra.mxu0 0.0
      %424 = vmatprep.mubr.f32.mxu0 0.0
      %425 = vmatmul.mubr.f32.gmra.mrb[0].mxu0 %v358
      %v426 = vpop.f32.mrb[0].mxu0
      %v427 = vadd.f32 %v354, %v426
      %v428 = vpop.f32.mrb[0].mxu0
      %429 = vdwg.mxu0
      %v430 = vld [vmem:[%s310] sm:$0x1]
      %v431 = vld [vmem:[%s5] sm:$0xff]
      %v432 = vld [vmem:[%s5 + $0x8] sm:$0xff]
      %434 = vrot.lane.b32.xlu0 %v427, 112
      %v435 = vpop.permute.xlu0 %434
      %vm436 = vcmask 31744
      %v437 = vsel %vm436, %v427, 0
      %v439 = vsel %vm436, %v435, 0
      %441 = vmatprep.subr.mxu0 0.0
      %442 = vmatpush1.xpose.msra.mxu0 %v439
      %443 = vmatprep.subr.mxu0 0.0
      %444 = vmatpush1.xpose.msra.mxu0 0.0
      %445 = vmatprep.subr.mxu0 0.0
      %446 = vmatpush1.xpose.msra.mxu0 0.0
      %447 = vmatprep.subr.mxu0 0.0
      %448 = vmatpush1.xpose.msra.mxu0 0.0
      %449 = vmatprep.subr.mxu0 0.0
      %450 = vmatpush1.xpose.msra.mxu0 0.0
      %451 = vmatprep.subr.mxu0 0.0
      %452 = vmatpush1.xpose.msra.mxu0 0.0
      %453 = vmatprep.subr.mxu0 0.0
      %454 = vmatpush1.xpose.msra.mxu0 0.0
      %455 = vmatprep.subr.mxu0 0.0
      %456 = vmatpush1.xpose.msra.mxu0 0.0
      %457 = vmatprep.subr.mxu0 0.0
      %458 = vmatpush1.xpose.msra.mxu0 0.0
      %459 = vmatprep.subr.mxu0 0.0
      %460 = vmatpush1.xpose.msra.mxu0 0.0
      %461 = vmatprep.subr.mxu0 0.0
      %462 = vmatpush1.xpose.msra.mxu0 0.0
      %463 = vmatprep.subr.mxu0 0.0
      %464 = vmatpush1.xpose.msra.mxu0 0.0
      %465 = vmatprep.subr.mxu0 0.0
      %466 = vmatpush1.xpose.msra.mxu0 0.0
      %467 = vmatprep.subr.mxu0 0.0
      %468 = vmatpush1.xpose.msra.mxu0 0.0
      %469 = vmatprep.subr.mxu0 0.0
      %470 = vmatpush1.xpose.msra.mxu0 0.0
      %471 = vmatprep.subr.mxu0 0.0
      %472 = vmatpush1.xpose.msra.mxu0 0.0
      %473 = vmatprep.subr.mxu0 0.0
      %474 = vmatpush1.xpose.msra.mxu0 0.0
      %475 = vmatprep.subr.mxu0 0.0
      %476 = vmatpush1.xpose.msra.mxu0 0.0
      %477 = vmatprep.subr.mxu0 0.0
      %478 = vmatpush1.xpose.msra.mxu0 0.0
      %479 = vmatprep.subr.mxu0 0.0
      %480 = vmatpush1.xpose.msra.mxu0 0.0
      %481 = vmatprep.subr.mxu0 0.0
      %482 = vmatpush1.xpose.msra.mxu0 0.0
      %483 = vmatprep.subr.mxu0 0.0
      %484 = vmatpush1.xpose.msra.mxu0 0.0
      %485 = vmatprep.subr.mxu0 0.0
      %486 = vmatpush1.xpose.msra.mxu0 0.0
      %487 = vmatprep.subr.mxu0 0.0
      %488 = vmatpush1.xpose.msra.mxu0 0.0
      %489 = vmatprep.subr.mxu0 0.0
      %490 = vmatpush1.xpose.msra.mxu0 0.0
      %491 = vmatprep.subr.mxu0 0.0
      %492 = vmatpush1.xpose.msra.mxu0 0.0
      %493 = vmatprep.subr.mxu0 0.0
      %494 = vmatpush1.xpose.msra.mxu0 0.0
      %495 = vmatprep.subr.mxu0 0.0
      %496 = vmatpush1.xpose.msra.mxu0 0.0
      %497 = vmatprep.subr.mxu0 0.0
      %498 = vmatpush1.xpose.msra.mxu0 0.0
      %499 = vmatprep.subr.mxu0 0.0
      %500 = vmatpush1.xpose.msra.mxu0 0.0
      %501 = vmatprep.subr.mxu0 0.0
      %502 = vmatpush1.xpose.msra.mxu0 0.0
      %503 = vmatprep.subr.mxu0 0.0
      %504 = vmatpush1.xpose.msra.mxu0 0.0
      %505 = vmatprep.mubr.f32.mxu0 0.0
      %506 = vmatmul.mubr.f32.gmra.mrb[0].mxu0 %v437
      %v507 = vpop.f32.mrb[0].mxu0
      %v508 = vadd.f32 0.0, %v507
      %v509 = vpop.f32.mrb[0].mxu0
      %510 = vdwg.mxu0
      %v511 = vmul.f32 %v508, 0.5
      %v513 = vlaneseq
      %v514 = vshrl.u32 %v513, 7
      %v515 = vsub.s32 0, %v514
      %v516 = vrot.slane %v430, %v515
      %v518 = vadd.f32 %v511, %v516
      %vm519 = vcmask 18432
      %v520 = vsel %vm519, %v518, -inf
      %521 = vmax.xlane.f32.xlu0 %v520
      %v522 = vpop.xlane.xlu0 %521
      %v523 = vsub.f32 %v518, %v522
      %v524 = vmul.f32 %v523, 1.442695
      %v525 = vpow.pop %v524
      %v526 = vsel %vm519, %v525, 0.0
      %527 = vadd.xlane.f32.xlu0 %v526
      %v528 = vpop.xlane.xlu0 %527
      %v529 = vrcp.pop %v528
      %v530 = vmul.f32 %v525, %v529
      %531 = vrot.lane.b32.xlu0 %v427, 96
      %v532 = vpop.permute.xlu0 %531
      %vm533 = vcmask 23552
      %v535 = vsel %vm533, %v530, 0
      %vm537 = vcmask 1042432
      %v538 = vsel %vm537, %v532, 0
      %540 = vmatprep.subr.mxu0 0.0
      %541 = vmatpush1.msra.mxu0 %v538
      %542 = vmatprep.subr.mxu0 0.0
      %543 = vmatpush1.msra.mxu0 0.0
      %544 = vmatprep.subr.mxu0 0.0
      %545 = vmatpush1.msra.mxu0 0.0
      %546 = vmatprep.subr.mxu0 0.0
      %547 = vmatpush1.msra.mxu0 0.0
      %548 = vmatprep.subr.mxu0 0.0
      %549 = vmatpush1.msra.mxu0 0.0
      %550 = vmatprep.subr.mxu0 0.0
      %551 = vmatpush1.msra.mxu0 0.0
      %552 = vmatprep.subr.mxu0 0.0
      %553 = vmatpush1.msra.mxu0 0.0
      %554 = vmatprep.subr.mxu0 0.0
      %555 = vmatpush1.msra.mxu0 0.0
      %556 = vmatprep.subr.mxu0 0.0
      %557 = vmatpush1.msra.mxu0 0.0
      %558 = vmatprep.subr.mxu0 0.0
      %559 = vmatpush1.msra.mxu0 0.0
      %560 = vmatprep.subr.mxu0 0.0
      %561 = vmatpush1.msra.mxu0 0.0
      %562 = vmatprep.subr.mxu0 0.0
      %563 = vmatpush1.msra.mxu0 0.0
      %564 = vmatprep.subr.mxu0 0.0
      %565 = vmatpush1.msra.mxu0 0.0
      %566 = vmatprep.subr.mxu0 0.0
      %567 = vmatpush1.msra.mxu0 0.0
      %568 = vmatprep.subr.mxu0 0.0
      %569 = vmatpush1.msra.mxu0 0.0
      %570 = vmatprep.subr.mxu0 0.0
      %571 = vmatpush1.msra.mxu0 0.0
      %572 = vmatprep.subr.mxu0 0.0
      %573 = vmatpush1.msra.mxu0 0.0
      %574 = vmatprep.subr.mxu0 0.0
      %575 = vmatpush1.msra.mxu0 0.0
      %576 = vmatprep.subr.mxu0 0.0
      %577 = vmatpush1.msra.mxu0 0.0
      %578 = vmatprep.subr.mxu0 0.0
      %579 = vmatpush1.msra.mxu0 0.0
      %580 = vmatprep.subr.mxu0 0.0
      %581 = vmatpush1.msra.mxu0 0.0
      %582 = vmatprep.subr.mxu0 0.0
      %583 = vmatpush1.msra.mxu0 0.0
      %584 = vmatprep.subr.mxu0 0.0
      %585 = vmatpush1.msra.mxu0 0.0
      %586 = vmatprep.subr.mxu0 0.0
      %587 = vmatpush1.msra.mxu0 0.0
      %588 = vmatprep.subr.mxu0 0.0
      %589 = vmatpush1.msra.mxu0 0.0
      %590 = vmatprep.subr.mxu0 0.0
      %591 = vmatpush1.msra.mxu0 0.0
      %592 = vmatprep.subr.mxu0 0.0
      %593 = vmatpush1.msra.mxu0 0.0
      %594 = vmatprep.subr.mxu0 0.0
      %595 = vmatpush1.msra.mxu0 0.0
      %596 = vmatprep.subr.mxu0 0.0
      %597 = vmatpush1.msra.mxu0 0.0
      %598 = vmatprep.subr.mxu0 0.0
      %599 = vmatpush1.msra.mxu0 0.0
      %600 = vmatprep.subr.mxu0 0.0
      %601 = vmatpush1.msra.mxu0 0.0
      %602 = vmatprep.subr.mxu0 0.0
      %603 = vmatpush1.msra.mxu0 0.0
      %604 = vmatprep.mubr.f32.mxu0 0.0
      %605 = vmatmul.mubr.f32.gmra.mrb[0].mxu0 %v535
      %v606 = vpop.f32.mrb[0].mxu0
      %v607 = vadd.f32 0.0, %v606
      %v608 = vpop.f32.mrb[0].mxu0
      %609 = vdwg.mxu0
      %610 = vrot.lane.b32.xlu0 %v427, 124
      %v611 = vpop.permute.xlu0 %610
      %612 = vrot.lane.b32.xlu0 %v427, 108
      %v613 = vpop.permute.xlu0 %612
      %v614 = vsel %vm436, %v611, 0
      %v616 = vsel %vm436, %v613, 0
      %618 = vmatprep.subr.mxu0 0.0
      %619 = vmatpush1.xpose.msra.mxu0 %v616
      %620 = vmatprep.subr.mxu0 0.0
      %621 = vmatpush1.xpose.msra.mxu0 0.0
      %622 = vmatprep.subr.mxu0 0.0
      %623 = vmatpush1.xpose.msra.mxu0 0.0
      %624 = vmatprep.subr.mxu0 0.0
      %625 = vmatpush1.xpose.msra.mxu0 0.0
      %626 = vmatprep.subr.mxu0 0.0
      %627 = vmatpush1.xpose.msra.mxu0 0.0
      %628 = vmatprep.subr.mxu0 0.0
      %629 = vmatpush1.xpose.msra.mxu0 0.0
      %630 = vmatprep.subr.mxu0 0.0
      %631 = vmatpush1.xpose.msra.mxu0 0.0
      %632 = vmatprep.subr.mxu0 0.0
      %633 = vmatpush1.xpose.msra.mxu0 0.0
      %634 = vmatprep.subr.mxu0 0.0
      %635 = vmatpush1.xpose.msra.mxu0 0.0
      %636 = vmatprep.subr.mxu0 0.0
      %637 = vmatpush1.xpose.msra.mxu0 0.0
      %638 = vmatprep.subr.mxu0 0.0
      %639 = vmatpush1.xpose.msra.mxu0 0.0
      %640 = vmatprep.subr.mxu0 0.0
      %641 = vmatpush1.xpose.msra.mxu0 0.0
      %642 = vmatprep.subr.mxu0 0.0
      %643 = vmatpush1.xpose.msra.mxu0 0.0
      %644 = vmatprep.subr.mxu0 0.0
      %645 = vmatpush1.xpose.msra.mxu0 0.0
      %646 = vmatprep.subr.mxu0 0.0
      %647 = vmatpush1.xpose.msra.mxu0 0.0
      %648 = vmatprep.subr.mxu0 0.0
      %649 = vmatpush1.xpose.msra.mxu0 0.0
      %650 = vmatprep.subr.mxu0 0.0
      %651 = vmatpush1.xpose.msra.mxu0 0.0
      %652 = vmatprep.subr.mxu0 0.0
      %653 = vmatpush1.xpose.msra.mxu0 0.0
      %654 = vmatprep.subr.mxu0 0.0
      %655 = vmatpush1.xpose.msra.mxu0 0.0
      %656 = vmatprep.subr.mxu0 0.0
      %657 = vmatpush1.xpose.msra.mxu0 0.0
      %658 = vmatprep.subr.mxu0 0.0
      %659 = vmatpush1.xpose.msra.mxu0 0.0
      %660 = vmatprep.subr.mxu0 0.0
      %661 = vmatpush1.xpose.msra.mxu0 0.0
      %662 = vmatprep.subr.mxu0 0.0
      %663 = vmatpush1.xpose.msra.mxu0 0.0
      %664 = vmatprep.subr.mxu0 0.0
      %665 = vmatpush1.xpose.msra.mxu0 0.0
      %666 = vmatprep.subr.mxu0 0.0
      %667 = vmatpush1.xpose.msra.mxu0 0.0
      %668 = vmatprep.subr.mxu0 0.0
      %669 = vmatpush1.xpose.msra.mxu0 0.0
      %670 = vmatprep.subr.mxu0 0.0
      %671 = vmatpush1.xpose.msra.mxu0 0.0
      %672 = vmatprep.subr.mxu0 0.0
      %673 = vmatpush1.xpose.msra.mxu0 0.0
      %674 = vmatprep.subr.mxu0 0.0
      %675 = vmatpush1.xpose.msra.mxu0 0.0
      %676 = vmatprep.subr.mxu0 0.0
      %677 = vmatpush1.xpose.msra.mxu0 0.0
      %678 = vmatprep.subr.mxu0 0.0
      %679 = vmatpush1.xpose.msra.mxu0 0.0
      %680 = vmatprep.subr.mxu0 0.0
      %681 = vmatpush1.xpose.msra.mxu0 0.0
      %682 = vmatprep.mubr.f32.mxu0 0.0
      %683 = vmatmul.mubr.f32.gmra.mrb[0].mxu0 %v614
      %v684 = vpop.f32.mrb[0].mxu0
      %v685 = vadd.f32 0.0, %v684
      %v686 = vpop.f32.mrb[0].mxu0
      %687 = vdwg.mxu0
      %v688 = vmul.f32 %v685, 0.5
      %v689 = vadd.f32 %v688, %v516
      %v690 = vsel %vm519, %v689, -inf
      %691 = vmax.xlane.f32.xlu0 %v690
      %v692 = vpop.xlane.xlu0 %691
      %v693 = vsub.f32 %v689, %v692
      %v694 = vmul.f32 %v693, 1.442695
      %v695 = vpow.pop %v694
      %v696 = vsel %vm519, %v695, 0.0
      %697 = vadd.xlane.f32.xlu0 %v696
      %v698 = vpop.xlane.xlu0 %697
      %v699 = vrcp.pop %v698
      %v700 = vmul.f32 %v695, %v699
      %701 = vrot.lane.b32.xlu0 %v427, 92
      %v702 = vpop.permute.xlu0 %701
      %v704 = vsel %vm533, %v700, 0
      %v706 = vsel %vm537, %v702, 0
      %708 = vmatprep.subr.mxu0 0.0
      %709 = vmatpush1.msra.mxu0 %v706
      %710 = vmatprep.subr.mxu0 0.0
      %711 = vmatpush1.msra.mxu0 0.0
      %712 = vmatprep.subr.mxu0 0.0
      %713 = vmatpush1.msra.mxu0 0.0
      %714 = vmatprep.subr.mxu0 0.0
      %715 = vmatpush1.msra.mxu0 0.0
      %716 = vmatprep.subr.mxu0 0.0
      %717 = vmatpush1.msra.mxu0 0.0
      %718 = vmatprep.subr.mxu0 0.0
      %719 = vmatpush1.msra.mxu0 0.0
      %720 = vmatprep.subr.mxu0 0.0
      %721 = vmatpush1.msra.mxu0 0.0
      %722 = vmatprep.subr.mxu0 0.0
      %723 = vmatpush1.msra.mxu0 0.0
      %724 = vmatprep.subr.mxu0 0.0
      %725 = vmatpush1.msra.mxu0 0.0
      %726 = vmatprep.subr.mxu0 0.0
      %727 = vmatpush1.msra.mxu0 0.0
      %728 = vmatprep.subr.mxu0 0.0
      %729 = vmatpush1.msra.mxu0 0.0
      %730 = vmatprep.subr.mxu0 0.0
      %731 = vmatpush1.msra.mxu0 0.0
      %732 = vmatprep.subr.mxu0 0.0
      %733 = vmatpush1.msra.mxu0 0.0
      %734 = vmatprep.subr.mxu0 0.0
      %735 = vmatpush1.msra.mxu0 0.0
      %736 = vmatprep.subr.mxu0 0.0
      %737 = vmatpush1.msra.mxu0 0.0
      %738 = vmatprep.subr.mxu0 0.0
      %739 = vmatpush1.msra.mxu0 0.0
      %740 = vmatprep.subr.mxu0 0.0
      %741 = vmatpush1.msra.mxu0 0.0
      %742 = vmatprep.subr.mxu0 0.0
      %743 = vmatpush1.msra.mxu0 0.0
      %744 = vmatprep.subr.mxu0 0.0
      %745 = vmatpush1.msra.mxu0 0.0
      %746 = vmatprep.subr.mxu0 0.0
      %747 = vmatpush1.msra.mxu0 0.0
      %748 = vmatprep.subr.mxu0 0.0
      %749 = vmatpush1.msra.mxu0 0.0
      %750 = vmatprep.subr.mxu0 0.0
      %751 = vmatpush1.msra.mxu0 0.0
      %752 = vmatprep.subr.mxu0 0.0
      %753 = vmatpush1.msra.mxu0 0.0
      %754 = vmatprep.subr.mxu0 0.0
      %755 = vmatpush1.msra.mxu0 0.0
      %756 = vmatprep.subr.mxu0 0.0
      %757 = vmatpush1.msra.mxu0 0.0
      %758 = vmatprep.subr.mxu0 0.0
      %759 = vmatpush1.msra.mxu0 0.0
      %760 = vmatprep.subr.mxu0 0.0
      %761 = vmatpush1.msra.mxu0 0.0
      %762 = vmatprep.subr.mxu0 0.0
      %763 = vmatpush1.msra.mxu0 0.0
      %764 = vmatprep.subr.mxu0 0.0
      %765 = vmatpush1.msra.mxu0 0.0
      %766 = vmatprep.subr.mxu0 0.0
      %767 = vmatpush1.msra.mxu0 0.0
      %768 = vmatprep.subr.mxu0 0.0
      %769 = vmatpush1.msra.mxu0 0.0
      %770 = vmatprep.subr.mxu0 0.0
      %771 = vmatpush1.msra.mxu0 0.0
      %772 = vmatprep.mubr.f32.mxu0 0.0
      %773 = vmatmul.mubr.f32.gmra.mrb[0].mxu0 %v704
      %v774 = vpop.f32.mrb[0].mxu0
      %v775 = vadd.f32 0.0, %v774
      %v776 = vpop.f32.mrb[0].mxu0
      %777 = vdwg.mxu0
      %v779 = vrot.slane %v431, 4
      %v781 = vsel %vm436, %v775, 0
      %vm783 = vcmask 1043456
      %v784 = vsel %vm783, %v779, 0
      %786 = vmatprep.subr.mxu0 0.0
      %787 = vmatpush1.msra.mxu0 %v784
      %788 = vmatprep.subr.mxu0 0.0
      %789 = vmatpush1.msra.mxu0 0.0
      %790 = vmatprep.subr.mxu0 0.0
      %791 = vmatpush1.msra.mxu0 0.0
      %792 = vmatprep.subr.mxu0 0.0
      %793 = vmatpush1.msra.mxu0 0.0
      %794 = vmatprep.subr.mxu0 0.0
      %795 = vmatpush1.msra.mxu0 0.0
      %796 = vmatprep.subr.mxu0 0.0
      %797 = vmatpush1.msra.mxu0 0.0
      %798 = vmatprep.subr.mxu0 0.0
      %799 = vmatpush1.msra.mxu0 0.0
      %800 = vmatprep.subr.mxu0 0.0
      %801 = vmatpush1.msra.mxu0 0.0
      %802 = vmatprep.subr.mxu0 0.0
      %803 = vmatpush1.msra.mxu0 0.0
      %804 = vmatprep.subr.mxu0 0.0
      %805 = vmatpush1.msra.mxu0 0.0
      %806 = vmatprep.subr.mxu0 0.0
      %807 = vmatpush1.msra.mxu0 0.0
      %808 = vmatprep.subr.mxu0 0.0
      %809 = vmatpush1.msra.mxu0 0.0
      %810 = vmatprep.subr.mxu0 0.0
      %811 = vmatpush1.msra.mxu0 0.0
      %812 = vmatprep.subr.mxu0 0.0
      %813 = vmatpush1.msra.mxu0 0.0
      %814 = vmatprep.subr.mxu0 0.0
      %815 = vmatpush1.msra.mxu0 0.0
      %816 = vmatprep.subr.mxu0 0.0
      %817 = vmatpush1.msra.mxu0 0.0
      %818 = vmatprep.subr.mxu0 0.0
      %819 = vmatpush1.msra.mxu0 0.0
      %820 = vmatprep.subr.mxu0 0.0
      %821 = vmatpush1.msra.mxu0 0.0
      %822 = vmatprep.subr.mxu0 0.0
      %823 = vmatpush1.msra.mxu0 0.0
      %824 = vmatprep.subr.mxu0 0.0
      %825 = vmatpush1.msra.mxu0 0.0
      %826 = vmatprep.subr.mxu0 0.0
      %827 = vmatpush1.msra.mxu0 0.0
      %828 = vmatprep.subr.mxu0 0.0
      %829 = vmatpush1.msra.mxu0 0.0
      %830 = vmatprep.subr.mxu0 0.0
      %831 = vmatpush1.msra.mxu0 0.0
      %832 = vmatprep.subr.mxu0 0.0
      %833 = vmatpush1.msra.mxu0 0.0
      %834 = vmatprep.subr.mxu0 0.0
      %835 = vmatpush1.msra.mxu0 0.0
      %836 = vmatprep.subr.mxu0 0.0
      %837 = vmatpush1.msra.mxu0 0.0
      %838 = vmatprep.subr.mxu0 0.0
      %839 = vmatpush1.msra.mxu0 0.0
      %840 = vmatprep.subr.mxu0 0.0
      %841 = vmatpush1.msra.mxu0 0.0
      %842 = vmatprep.subr.mxu0 0.0
      %843 = vmatpush1.msra.mxu0 0.0
      %844 = vmatprep.subr.mxu0 0.0
      %845 = vmatpush1.msra.mxu0 0.0
      %846 = vmatprep.subr.mxu0 0.0
      %847 = vmatpush1.msra.mxu0 0.0
      %848 = vmatprep.subr.mxu0 0.0
      %849 = vmatpush1.msra.mxu0 0.0
      %850 = vmatprep.mubr.f32.mxu0 0.0
      %851 = vmatmul.mubr.f32.gmra.mrb[0].mxu0 %v781
      %v852 = vpop.f32.mrb[0].mxu0
      %v853 = vadd.f32 0.0, %v852
      %v854 = vpop.f32.mrb[0].mxu0
      %855 = vdwg.mxu0
      %v857 = vsel %vm436, %v607, 0
      %v859 = vsel %vm783, %v431, 0
      %861 = vmatprep.subr.mxu0 0.0
      %862 = vmatpush1.msra.mxu0 %v859
      %863 = vmatprep.subr.mxu0 0.0
      %864 = vmatpush1.msra.mxu0 0.0
      %865 = vmatprep.subr.mxu0 0.0
      %866 = vmatpush1.msra.mxu0 0.0
      %867 = vmatprep.subr.mxu0 0.0
      %868 = vmatpush1.msra.mxu0 0.0
      %869 = vmatprep.subr.mxu0 0.0
      %870 = vmatpush1.msra.mxu0 0.0
      %871 = vmatprep.subr.mxu0 0.0
      %872 = vmatpush1.msra.mxu0 0.0
      %873 = vmatprep.subr.mxu0 0.0
      %874 = vmatpush1.msra.mxu0 0.0
      %875 = vmatprep.subr.mxu0 0.0
      %876 = vmatpush1.msra.mxu0 0.0
      %877 = vmatprep.subr.mxu0 0.0
      %878 = vmatpush1.msra.mxu0 0.0
      %879 = vmatprep.subr.mxu0 0.0
      %880 = vmatpush1.msra.mxu0 0.0
      %881 = vmatprep.subr.mxu0 0.0
      %882 = vmatpush1.msra.mxu0 0.0
      %883 = vmatprep.subr.mxu0 0.0
      %884 = vmatpush1.msra.mxu0 0.0
      %885 = vmatprep.subr.mxu0 0.0
      %886 = vmatpush1.msra.mxu0 0.0
      %887 = vmatprep.subr.mxu0 0.0
      %888 = vmatpush1.msra.mxu0 0.0
      %889 = vmatprep.subr.mxu0 0.0
      %890 = vmatpush1.msra.mxu0 0.0
      %891 = vmatprep.subr.mxu0 0.0
      %892 = vmatpush1.msra.mxu0 0.0
      %893 = vmatprep.subr.mxu0 0.0
      %894 = vmatpush1.msra.mxu0 0.0
      %895 = vmatprep.subr.mxu0 0.0
      %896 = vmatpush1.msra.mxu0 0.0
      %897 = vmatprep.subr.mxu0 0.0
      %898 = vmatpush1.msra.mxu0 0.0
      %899 = vmatprep.subr.mxu0 0.0
      %900 = vmatpush1.msra.mxu0 0.0
      %901 = vmatprep.subr.mxu0 0.0
      %902 = vmatpush1.msra.mxu0 0.0
      %903 = vmatprep.subr.mxu0 0.0
      %904 = vmatpush1.msra.mxu0 0.0
      %905 = vmatprep.subr.mxu0 0.0
      %906 = vmatpush1.msra.mxu0 0.0
      %907 = vmatprep.subr.mxu0 0.0
      %908 = vmatpush1.msra.mxu0 0.0
      %909 = vmatprep.subr.mxu0 0.0
      %910 = vmatpush1.msra.mxu0 0.0
      %911 = vmatprep.subr.mxu0 0.0
      %912 = vmatpush1.msra.mxu0 0.0
      %913 = vmatprep.subr.mxu0 0.0
      %914 = vmatpush1.msra.mxu0 0.0
      %915 = vmatprep.subr.mxu0 0.0
      %916 = vmatpush1.msra.mxu0 0.0
      %917 = vmatprep.subr.mxu0 0.0
      %918 = vmatpush1.msra.mxu0 0.0
      %919 = vmatprep.subr.mxu0 0.0
      %920 = vmatpush1.msra.mxu0 0.0
      %921 = vmatprep.subr.mxu0 0.0
      %922 = vmatpush1.msra.mxu0 0.0
      %923 = vmatprep.subr.mxu0 0.0
      %924 = vmatpush1.msra.mxu0 0.0
      %925 = vmatprep.mubr.f32.mxu0 0.0
      %926 = vmatmul.mubr.f32.gmra.mrb[0].mxu0 %v857
      %v927 = vpop.f32.mrb[0].mxu0
      %v928 = vadd.f32 %v853, %v927
      %v929 = vpop.f32.mrb[0].mxu0
      %930 = vdwg.mxu0
      %931 = vrot.lane.b32.xlu0 %v427, 120
      %v932 = vpop.permute.xlu0 %931
      %933 = vrot.lane.b32.xlu0 %v427, 104
      %v934 = vpop.permute.xlu0 %933
      %v935 = vsel %vm436, %v932, 0
      %v937 = vsel %vm436, %v934, 0
      %939 = vmatprep.subr.mxu0 0.0
      %940 = vmatpush1.xpose.msra.mxu0 %v937
      %941 = vmatprep.subr.mxu0 0.0
      %942 = vmatpush1.xpose.msra.mxu0 0.0
      %943 = vmatprep.subr.mxu0 0.0
      %944 = vmatpush1.xpose.msra.mxu0 0.0
      %945 = vmatprep.subr.mxu0 0.0
      %946 = vmatpush1.xpose.msra.mxu0 0.0
      %947 = vmatprep.subr.mxu0 0.0
      %948 = vmatpush1.xpose.msra.mxu0 0.0
      %949 = vmatprep.subr.mxu0 0.0
      %950 = vmatpush1.xpose.msra.mxu0 0.0
      %951 = vmatprep.subr.mxu0 0.0
      %952 = vmatpush1.xpose.msra.mxu0 0.0
      %953 = vmatprep.subr.mxu0 0.0
      %954 = vmatpush1.xpose.msra.mxu0 0.0
      %955 = vmatprep.subr.mxu0 0.0
      %956 = vmatpush1.xpose.msra.mxu0 0.0
      %957 = vmatprep.subr.mxu0 0.0
      %958 = vmatpush1.xpose.msra.mxu0 0.0
      %959 = vmatprep.subr.mxu0 0.0
      %960 = vmatpush1.xpose.msra.mxu0 0.0
      %961 = vmatprep.subr.mxu0 0.0
      %962 = vmatpush1.xpose.msra.mxu0 0.0
      %963 = vmatprep.subr.mxu0 0.0
      %964 = vmatpush1.xpose.msra.mxu0 0.0
      %965 = vmatprep.subr.mxu0 0.0
      %966 = vmatpush1.xpose.msra.mxu0 0.0
      %967 = vmatprep.subr.mxu0 0.0
      %968 = vmatpush1.xpose.msra.mxu0 0.0
      %969 = vmatprep.subr.mxu0 0.0
      %970 = vmatpush1.xpose.msra.mxu0 0.0
      %971 = vmatprep.subr.mxu0 0.0
      %972 = vmatpush1.xpose.msra.mxu0 0.0
      %973 = vmatprep.subr.mxu0 0.0
      %974 = vmatpush1.xpose.msra.mxu0 0.0
      %975 = vmatprep.subr.mxu0 0.0
      %976 = vmatpush1.xpose.msra.mxu0 0.0
      %977 = vmatprep.subr.mxu0 0.0
      %978 = vmatpush1.xpose.msra.mxu0 0.0
      %979 = vmatprep.subr.mxu0 0.0
      %980 = vmatpush1.xpose.msra.mxu0 0.0
      %981 = vmatprep.subr.mxu0 0.0
      %982 = vmatpush1.xpose.msra.mxu0 0.0
      %983 = vmatprep.subr.mxu0 0.0
      %984 = vmatpush1.xpose.msra.mxu0 0.0
      %985 = vmatprep.subr.mxu0 0.0
      %986 = vmatpush1.xpose.msra.mxu0 0.0
      %987 = vmatprep.subr.mxu0 0.0
      %988 = vmatpush1.xpose.msra.mxu0 0.0
      %989 = vmatprep.subr.mxu0 0.0
      %990 = vmatpush1.xpose.msra.mxu0 0.0
      %991 = vmatprep.subr.mxu0 0.0
      %992 = vmatpush1.xpose.msra.mxu0 0.0
      %993 = vmatprep.subr.mxu0 0.0
      %994 = vmatpush1.xpose.msra.mxu0 0.0
      %995 = vmatprep.subr.mxu0 0.0
      %996 = vmatpush1.xpose.msra.mxu0 0.0
      %997 = vmatprep.subr.mxu0 0.0
      %998 = vmatpush1.xpose.msra.mxu0 0.0
      %999 = vmatprep.subr.mxu0 0.0
      %1000 = vmatpush1.xpose.msra.mxu0 0.0
      %1001 = vmatprep.subr.mxu0 0.0
      %1002 = vmatpush1.xpose.msra.mxu0 0.0
      %1003 = vmatprep.mubr.f32.mxu0 0.0
      %1004 = vmatmul.mubr.f32.gmra.mrb[0].mxu0 %v935
      %v1005 = vpop.f32.mrb[0].mxu0
      %v1006 = vadd.f32 0.0, %v1005
      %v1007 = vpop.f32.mrb[0].mxu0
      %1008 = vdwg.mxu0
      %v1009 = vmul.f32 %v1006, 0.5
      %v1010 = vadd.f32 %v1009, %v516
      %v1011 = vsel %vm519, %v1010, -inf
      %1012 = vmax.xlane.f32.xlu0 %v1011
      %v1013 = vpop.xlane.xlu0 %1012
      %v1014 = vsub.f32 %v1010, %v1013
      %v1015 = vmul.f32 %v1014, 1.442695
      %v1016 = vpow.pop %v1015
      %v1017 = vsel %vm519, %v1016, 0.0
      %1018 = vadd.xlane.f32.xlu0 %v1017
      %v1019 = vpop.xlane.xlu0 %1018
      %v1020 = vrcp.pop %v1019
      %v1021 = vmul.f32 %v1016, %v1020
      %1022 = vrot.lane.b32.xlu0 %v427, 88
      %v1023 = vpop.permute.xlu0 %1022
      %v1025 = vsel %vm533, %v1021, 0
      %v1027 = vsel %vm537, %v1023, 0
      %1029 = vmatprep.subr.mxu0 0.0
      %1030 = vmatpush1.msra.mxu0 %v1027
      %1031 = vmatprep.subr.mxu0 0.0
      %1032 = vmatpush1.msra.mxu0 0.0
      %1033 = vmatprep.subr.mxu0 0.0
      %1034 = vmatpush1.msra.mxu0 0.0
      %1035 = vmatprep.subr.mxu0 0.0
      %1036 = vmatpush1.msra.mxu0 0.0
      %1037 = vmatprep.subr.mxu0 0.0
      %1038 = vmatpush1.msra.mxu0 0.0
      %1039 = vmatprep.subr.mxu0 0.0
      %1040 = vmatpush1.msra.mxu0 0.0
      %1041 = vmatprep.subr.mxu0 0.0
      %1042 = vmatpush1.msra.mxu0 0.0
      %1043 = vmatprep.subr.mxu0 0.0
      %1044 = vmatpush1.msra.mxu0 0.0
      %1045 = vmatprep.subr.mxu0 0.0
      %1046 = vmatpush1.msra.mxu0 0.0
      %1047 = vmatprep.subr.mxu0 0.0
      %1048 = vmatpush1.msra.mxu0 0.0
      %1049 = vmatprep.subr.mxu0 0.0
      %1050 = vmatpush1.msra.mxu0 0.0
      %1051 = vmatprep.subr.mxu0 0.0
      %1052 = vmatpush1.msra.mxu0 0.0
      %1053 = vmatprep.subr.mxu0 0.0
      %1054 = vmatpush1.msra.mxu0 0.0
      %1055 = vmatprep.subr.mxu0 0.0
      %1056 = vmatpush1.msra.mxu0 0.0
      %1057 = vmatprep.subr.mxu0 0.0
      %1058 = vmatpush1.msra.mxu0 0.0
      %1059 = vmatprep.subr.mxu0 0.0
      %1060 = vmatpush1.msra.mxu0 0.0
      %1061 = vmatprep.subr.mxu0 0.0
      %1062 = vmatpush1.msra.mxu0 0.0
      %1063 = vmatprep.subr.mxu0 0.0
      %1064 = vmatpush1.msra.mxu0 0.0
      %1065 = vmatprep.subr.mxu0 0.0
      %1066 = vmatpush1.msra.mxu0 0.0
      %1067 = vmatprep.subr.mxu0 0.0
      %1068 = vmatpush1.msra.mxu0 0.0
      %1069 = vmatprep.subr.mxu0 0.0
      %1070 = vmatpush1.msra.mxu0 0.0
      %1071 = vmatprep.subr.mxu0 0.0
      %1072 = vmatpush1.msra.mxu0 0.0
      %1073 = vmatprep.subr.mxu0 0.0
      %1074 = vmatpush1.msra.mxu0 0.0
      %1075 = vmatprep.subr.mxu0 0.0
      %1076 = vmatpush1.msra.mxu0 0.0
      %1077 = vmatprep.subr.mxu0 0.0
      %1078 = vmatpush1.msra.mxu0 0.0
      %1079 = vmatprep.subr.mxu0 0.0
      %1080 = vmatpush1.msra.mxu0 0.0
      %1081 = vmatprep.subr.mxu0 0.0
      %1082 = vmatpush1.msra.mxu0 0.0
      %1083 = vmatprep.subr.mxu0 0.0
      %1084 = vmatpush1.msra.mxu0 0.0
      %1085 = vmatprep.subr.mxu0 0.0
      %1086 = vmatpush1.msra.mxu0 0.0
      %1087 = vmatprep.subr.mxu0 0.0
      %1088 = vmatpush1.msra.mxu0 0.0
      %1089 = vmatprep.subr.mxu0 0.0
      %1090 = vmatpush1.msra.mxu0 0.0
      %1091 = vmatprep.subr.mxu0 0.0
      %1092 = vmatpush1.msra.mxu0 0.0
      %1093 = vmatprep.mubr.f32.mxu0 0.0
      %1094 = vmatmul.mubr.f32.gmra.mrb[0].mxu0 %v1025
      %v1095 = vpop.f32.mrb[0].mxu0
      %v1096 = vadd.f32 0.0, %v1095
      %v1097 = vpop.f32.mrb[0].mxu0
      %1098 = vdwg.mxu0
      %v1100 = vsel %vm436, %v1096, 0
      %v1103 = vsel %vm783, %v432, 0
      %1105 = vmatprep.subr.mxu0 0.0
      %1106 = vmatpush1.msra.mxu0 %v1103
      %1107 = vmatprep.subr.mxu0 0.0
      %1108 = vmatpush1.msra.mxu0 0.0
      %1109 = vmatprep.subr.mxu0 0.0
      %1110 = vmatpush1.msra.mxu0 0.0
      %1111 = vmatprep.subr.mxu0 0.0
      %1112 = vmatpush1.msra.mxu0 0.0
      %1113 = vmatprep.subr.mxu0 0.0
      %1114 = vmatpush1.msra.mxu0 0.0
      %1115 = vmatprep.subr.mxu0 0.0
      %1116 = vmatpush1.msra.mxu0 0.0
      %1117 = vmatprep.subr.mxu0 0.0
      %1118 = vmatpush1.msra.mxu0 0.0
      %1119 = vmatprep.subr.mxu0 0.0
      %1120 = vmatpush1.msra.mxu0 0.0
      %1121 = vmatprep.subr.mxu0 0.0
      %1122 = vmatpush1.msra.mxu0 0.0
      %1123 = vmatprep.subr.mxu0 0.0
      %1124 = vmatpush1.msra.mxu0 0.0
      %1125 = vmatprep.subr.mxu0 0.0
      %1126 = vmatpush1.msra.mxu0 0.0
      %1127 = vmatprep.subr.mxu0 0.0
      %1128 = vmatpush1.msra.mxu0 0.0
      %1129 = vmatprep.subr.mxu0 0.0
      %1130 = vmatpush1.msra.mxu0 0.0
      %1131 = vmatprep.subr.mxu0 0.0
      %1132 = vmatpush1.msra.mxu0 0.0
      %1133 = vmatprep.subr.mxu0 0.0
      %1134 = vmatpush1.msra.mxu0 0.0
      %1135 = vmatprep.subr.mxu0 0.0
      %1136 = vmatpush1.msra.mxu0 0.0
      %1137 = vmatprep.subr.mxu0 0.0
      %1138 = vmatpush1.msra.mxu0 0.0
      %1139 = vmatprep.subr.mxu0 0.0
      %1140 = vmatpush1.msra.mxu0 0.0
      %1141 = vmatprep.subr.mxu0 0.0
      %1142 = vmatpush1.msra.mxu0 0.0
      %1143 = vmatprep.subr.mxu0 0.0
      %1144 = vmatpush1.msra.mxu0 0.0
      %1145 = vmatprep.subr.mxu0 0.0
      %1146 = vmatpush1.msra.mxu0 0.0
      %1147 = vmatprep.subr.mxu0 0.0
      %1148 = vmatpush1.msra.mxu0 0.0
      %1149 = vmatprep.subr.mxu0 0.0
      %1150 = vmatpush1.msra.mxu0 0.0
      %1151 = vmatprep.subr.mxu0 0.0
      %1152 = vmatpush1.msra.mxu0 0.0
      %1153 = vmatprep.subr.mxu0 0.0
      %1154 = vmatpush1.msra.mxu0 0.0
      %1155 = vmatprep.subr.mxu0 0.0
      %1156 = vmatpush1.msra.mxu0 0.0
      %1157 = vmatprep.subr.mxu0 0.0
      %1158 = vmatpush1.msra.mxu0 0.0
      %1159 = vmatprep.subr.mxu0 0.0
      %1160 = vmatpush1.msra.mxu0 0.0
      %1161 = vmatprep.subr.mxu0 0.0
      %1162 = vmatpush1.msra.mxu0 0.0
      %1163 = vmatprep.subr.mxu0 0.0
      %1164 = vmatpush1.msra.mxu0 0.0
      %1165 = vmatprep.subr.mxu0 0.0
      %1166 = vmatpush1.msra.mxu0 0.0
      %1167 = vmatprep.subr.mxu0 0.0
      %1168 = vmatpush1.msra.mxu0 0.0
      %1169 = vmatprep.mubr.f32.mxu0 0.0
      %1170 = vmatmul.mubr.f32.gmra.mrb[0].mxu0 %v1100
      %v1171 = vpop.f32.mrb[0].mxu0
      %v1172 = vadd.f32 0.0, %v1171
      %v1173 = vpop.f32.mrb[0].mxu0
      %1174 = vdwg.mxu0
      %v1175 = vadd.f32 %v928, %v1172
      %1176 = vrot.lane.b32.xlu0 %v427, 116
      %v1177 = vpop.permute.xlu0 %1176
      %1178 = vrot.lane.b32.xlu0 %v427, 100
      %v1179 = vpop.permute.xlu0 %1178
      %v1180 = vsel %vm436, %v1177, 0
      %v1182 = vsel %vm436, %v1179, 0
      %1184 = vmatprep.subr.mxu0 0.0
      %1185 = vmatpush1.xpose.msra.mxu0 %v1182
      %1186 = vmatprep.subr.mxu0 0.0
      %1187 = vmatpush1.xpose.msra.mxu0 0.0
      %1188 = vmatprep.subr.mxu0 0.0
      %1189 = vmatpush1.xpose.msra.mxu0 0.0
      %1190 = vmatprep.subr.mxu0 0.0
      %1191 = vmatpush1.xpose.msra.mxu0 0.0
      %1192 = vmatprep.subr.mxu0 0.0
      %1193 = vmatpush1.xpose.msra.mxu0 0.0
      %1194 = vmatprep.subr.mxu0 0.0
      %1195 = vmatpush1.xpose.msra.mxu0 0.0
      %1196 = vmatprep.subr.mxu0 0.0
      %1197 = vmatpush1.xpose.msra.mxu0 0.0
      %1198 = vmatprep.subr.mxu0 0.0
      %1199 = vmatpush1.xpose.msra.mxu0 0.0
      %1200 = vmatprep.subr.mxu0 0.0
      %1201 = vmatpush1.xpose.msra.mxu0 0.0
      %1202 = vmatprep.subr.mxu0 0.0
      %1203 = vmatpush1.xpose.msra.mxu0 0.0
      %1204 = vmatprep.subr.mxu0 0.0
      %1205 = vmatpush1.xpose.msra.mxu0 0.0
      %1206 = vmatprep.subr.mxu0 0.0
      %1207 = vmatpush1.xpose.msra.mxu0 0.0
      %1208 = vmatprep.subr.mxu0 0.0
      %1209 = vmatpush1.xpose.msra.mxu0 0.0
      %1210 = vmatprep.subr.mxu0 0.0
      %1211 = vmatpush1.xpose.msra.mxu0 0.0
      %1212 = vmatprep.subr.mxu0 0.0
      %1213 = vmatpush1.xpose.msra.mxu0 0.0
      %1214 = vmatprep.subr.mxu0 0.0
      %1215 = vmatpush1.xpose.msra.mxu0 0.0
      %1216 = vmatprep.subr.mxu0 0.0
      %1217 = vmatpush1.xpose.msra.mxu0 0.0
      %1218 = vmatprep.subr.mxu0 0.0
      %1219 = vmatpush1.xpose.msra.mxu0 0.0
      %1220 = vmatprep.subr.mxu0 0.0
      %1221 = vmatpush1.xpose.msra.mxu0 0.0
      %1222 = vmatprep.subr.mxu0 0.0
      %1223 = vmatpush1.xpose.msra.mxu0 0.0
      %1224 = vmatprep.subr.mxu0 0.0
      %1225 = vmatpush1.xpose.msra.mxu0 0.0
      %1226 = vmatprep.subr.mxu0 0.0
      %1227 = vmatpush1.xpose.msra.mxu0 0.0
      %1228 = vmatprep.subr.mxu0 0.0
      %1229 = vmatpush1.xpose.msra.mxu0 0.0
      %1230 = vmatprep.subr.mxu0 0.0
      %1231 = vmatpush1.xpose.msra.mxu0 0.0
      %1232 = vmatprep.subr.mxu0 0.0
      %1233 = vmatpush1.xpose.msra.mxu0 0.0
      %1234 = vmatprep.subr.mxu0 0.0
      %1235 = vmatpush1.xpose.msra.mxu0 0.0
      %1236 = vmatprep.subr.mxu0 0.0
      %1237 = vmatpush1.xpose.msra.mxu0 0.0
      %1238 = vmatprep.subr.mxu0 0.0
      %1239 = vmatpush1.xpose.msra.mxu0 0.0
      %1240 = vmatprep.subr.mxu0 0.0
      %1241 = vmatpush1.xpose.msra.mxu0 0.0
      %1242 = vmatprep.subr.mxu0 0.0
      %1243 = vmatpush1.xpose.msra.mxu0 0.0
      %1244 = vmatprep.subr.mxu0 0.0
      %1245 = vmatpush1.xpose.msra.mxu0 0.0
      %1246 = vmatprep.subr.mxu0 0.0
      %1247 = vmatpush1.xpose.msra.mxu0 0.0
      %1248 = vmatprep.mubr.f32.mxu0 0.0
      %1249 = vmatmul.mubr.f32.gmra.mrb[0].mxu0 %v1180
      %v1250 = vpop.f32.mrb[0].mxu0
      %v1251 = vadd.f32 0.0, %v1250
      %v1252 = vpop.f32.mrb[0].mxu0
      %1253 = vdwg.mxu0
      %v1254 = vmul.f32 %v1251, 0.5
      %v1255 = vadd.f32 %v1254, %v516
      %v1256 = vsel %vm519, %v1255, -inf
      %1257 = vmax.xlane.f32.xlu0 %v1256
      %v1258 = vpop.xlane.xlu0 %1257
      %v1259 = vsub.f32 %v1255, %v1258
      %v1260 = vmul.f32 %v1259, 1.442695
      %v1261 = vpow.pop %v1260
      %v1262 = vsel %vm519, %v1261, 0.0
      %1263 = vadd.xlane.f32.xlu0 %v1262
      %v1264 = vpop.xlane.xlu0 %1263
      %v1265 = vrcp.pop %v1264
      %v1266 = vmul.f32 %v1261, %v1265
      %1267 = vrot.lane.b32.xlu0 %v427, 84
      %v1268 = vpop.permute.xlu0 %1267
      %v1270 = vsel %vm533, %v1266, 0
      %v1272 = vsel %vm537, %v1268, 0
      %1274 = vmatprep.subr.mxu0 0.0
      %1275 = vmatpush1.msra.mxu0 %v1272
      %1276 = vmatprep.subr.mxu0 0.0
      %1277 = vmatpush1.msra.mxu0 0.0
      %1278 = vmatprep.subr.mxu0 0.0
      %1279 = vmatpush1.msra.mxu0 0.0
      %1280 = vmatprep.subr.mxu0 0.0
      %1281 = vmatpush1.msra.mxu0 0.0
      %1282 = vmatprep.subr.mxu0 0.0
      %1283 = vmatpush1.msra.mxu0 0.0
      %1284 = vmatprep.subr.mxu0 0.0
      %1285 = vmatpush1.msra.mxu0 0.0
      %1286 = vmatprep.subr.mxu0 0.0
      %1287 = vmatpush1.msra.mxu0 0.0
      %1288 = vmatprep.subr.mxu0 0.0
      %1289 = vmatpush1.msra.mxu0 0.0
      %1290 = vmatprep.subr.mxu0 0.0
      %1291 = vmatpush1.msra.mxu0 0.0
      %1292 = vmatprep.subr.mxu0 0.0
      %1293 = vmatpush1.msra.mxu0 0.0
      %1294 = vmatprep.subr.mxu0 0.0
      %1295 = vmatpush1.msra.mxu0 0.0
      %1296 = vmatprep.subr.mxu0 0.0
      %1297 = vmatpush1.msra.mxu0 0.0
      %1298 = vmatprep.subr.mxu0 0.0
      %1299 = vmatpush1.msra.mxu0 0.0
      %1300 = vmatprep.subr.mxu0 0.0
      %1301 = vmatpush1.msra.mxu0 0.0
      %1302 = vmatprep.subr.mxu0 0.0
      %1303 = vmatpush1.msra.mxu0 0.0
      %1304 = vmatprep.subr.mxu0 0.0
      %1305 = vmatpush1.msra.mxu0 0.0
      %1306 = vmatprep.subr.mxu0 0.0
      %1307 = vmatpush1.msra.mxu0 0.0
      %1308 = vmatprep.subr.mxu0 0.0
      %1309 = vmatpush1.msra.mxu0 0.0
      %1310 = vmatprep.subr.mxu0 0.0
      %1311 = vmatpush1.msra.mxu0 0.0
      %1312 = vmatprep.subr.mxu0 0.0
      %1313 = vmatpush1.msra.mxu0 0.0
      %1314 = vmatprep.subr.mxu0 0.0
      %1315 = vmatpush1.msra.mxu0 0.0
      %1316 = vmatprep.subr.mxu0 0.0
      %1317 = vmatpush1.msra.mxu0 0.0
      %1318 = vmatprep.subr.mxu0 0.0
      %1319 = vmatpush1.msra.mxu0 0.0
      %1320 = vmatprep.subr.mxu0 0.0
      %1321 = vmatpush1.msra.mxu0 0.0
      %1322 = vmatprep.subr.mxu0 0.0
      %1323 = vmatpush1.msra.mxu0 0.0
      %1324 = vmatprep.subr.mxu0 0.0
      %1325 = vmatpush1.msra.mxu0 0.0
      %1326 = vmatprep.subr.mxu0 0.0
      %1327 = vmatpush1.msra.mxu0 0.0
      %1328 = vmatprep.subr.mxu0 0.0
      %1329 = vmatpush1.msra.mxu0 0.0
      %1330 = vmatprep.subr.mxu0 0.0
      %1331 = vmatpush1.msra.mxu0 0.0
      %1332 = vmatprep.subr.mxu0 0.0
      %1333 = vmatpush1.msra.mxu0 0.0
      %1334 = vmatprep.subr.mxu0 0.0
      %1335 = vmatpush1.msra.mxu0 0.0
      %1336 = vmatprep.subr.mxu0 0.0
      %1337 = vmatpush1.msra.mxu0 0.0
      %1338 = vmatprep.mubr.f32.mxu0 0.0
      %1339 = vmatmul.mubr.f32.gmra.mrb[0].mxu0 %v1270
      %v1340 = vpop.f32.mrb[0].mxu0
      %v1341 = vadd.f32 0.0, %v1340
      %v1342 = vpop.f32.mrb[0].mxu0
      %1343 = vdwg.mxu0
      %v1344 = vrot.slane %v432, 4
      %v1346 = vsel %vm436, %v1341, 0
      %v1348 = vsel %vm783, %v1344, 0
      %1350 = vmatprep.subr.mxu0 0.0
      %1351 = vmatpush1.msra.mxu0 %v1348
      %1352 = vmatprep.subr.mxu0 0.0
      %1353 = vmatpush1.msra.mxu0 0.0
      %1354 = vmatprep.subr.mxu0 0.0
      %1355 = vmatpush1.msra.mxu0 0.0
      %1356 = vmatprep.subr.mxu0 0.0
      %1357 = vmatpush1.msra.mxu0 0.0
      %1358 = vmatprep.subr.mxu0 0.0
      %1359 = vmatpush1.msra.mxu0 0.0
      %1360 = vmatprep.subr.mxu0 0.0
      %1361 = vmatpush1.msra.mxu0 0.0
      %1362 = vmatprep.subr.mxu0 0.0
      %1363 = vmatpush1.msra.mxu0 0.0
      %1364 = vmatprep.subr.mxu0 0.0
      %1365 = vmatpush1.msra.mxu0 0.0
      %1366 = vmatprep.subr.mxu0 0.0
      %1367 = vmatpush1.msra.mxu0 0.0
      %1368 = vmatprep.subr.mxu0 0.0
      %1369 = vmatpush1.msra.mxu0 0.0
      %1370 = vmatprep.subr.mxu0 0.0
      %1371 = vmatpush1.msra.mxu0 0.0
      %1372 = vmatprep.subr.mxu0 0.0
      %1373 = vmatpush1.msra.mxu0 0.0
      %1374 = vmatprep.subr.mxu0 0.0
      %1375 = vmatpush1.msra.mxu0 0.0
      %1376 = vmatprep.subr.mxu0 0.0
      %1377 = vmatpush1.msra.mxu0 0.0
      %1378 = vmatprep.subr.mxu0 0.0
      %1379 = vmatpush1.msra.mxu0 0.0
      %1380 = vmatprep.subr.mxu0 0.0
      %1381 = vmatpush1.msra.mxu0 0.0
      %1382 = vmatprep.subr.mxu0 0.0
      %1383 = vmatpush1.msra.mxu0 0.0
      %1384 = vmatprep.subr.mxu0 0.0
      %1385 = vmatpush1.msra.mxu0 0.0
      %1386 = vmatprep.subr.mxu0 0.0
      %1387 = vmatpush1.msra.mxu0 0.0
      %1388 = vmatprep.subr.mxu0 0.0
      %1389 = vmatpush1.msra.mxu0 0.0
      %1390 = vmatprep.subr.mxu0 0.0
      %1391 = vmatpush1.msra.mxu0 0.0
      %1392 = vmatprep.subr.mxu0 0.0
      %1393 = vmatpush1.msra.mxu0 0.0
      %1394 = vmatprep.subr.mxu0 0.0
      %1395 = vmatpush1.msra.mxu0 0.0
      %1396 = vmatprep.subr.mxu0 0.0
      %1397 = vmatpush1.msra.mxu0 0.0
      %1398 = vmatprep.subr.mxu0 0.0
      %1399 = vmatpush1.msra.mxu0 0.0
      %1400 = vmatprep.subr.mxu0 0.0
      %1401 = vmatpush1.msra.mxu0 0.0
      %1402 = vmatprep.subr.mxu0 0.0
      %1403 = vmatpush1.msra.mxu0 0.0
      %1404 = vmatprep.subr.mxu0 0.0
      %1405 = vmatpush1.msra.mxu0 0.0
      %1406 = vmatprep.subr.mxu0 0.0
      %1407 = vmatpush1.msra.mxu0 0.0
      %1408 = vmatprep.subr.mxu0 0.0
      %1409 = vmatpush1.msra.mxu0 0.0
      %1410 = vmatprep.subr.mxu0 0.0
      %1411 = vmatpush1.msra.mxu0 0.0
      %1412 = vmatprep.subr.mxu0 0.0
      %1413 = vmatpush1.msra.mxu0 0.0
      %1414 = vmatprep.mubr.f32.mxu0 0.0
      %1415 = vmatmul.mubr.f32.gmra.mrb[0].mxu0 %v1346
      %v1416 = vpop.f32.mrb[0].mxu0
      %v1417 = vadd.f32 0.0, %v1416
      %v1418 = vpop.f32.mrb[0].mxu0
      %1419 = vdwg.mxu0
      %v1420 = vadd.f32 %v1175, %v1417
      %v1421 = vadd.f32 %v315, %v1420
      %v1422 = vld [vmem:[%s6] sm:$0x1]
      %v1424 = vlaneseq
      %v1425 = vshrl.u32 %v1424, 7
      %v1426 = vsub.s32 0, %v1425
      %v1427 = vrot.slane %v1422, %v1426
      %v1429 = vadd.f32 %v1421, %v1427
      %1430 = vst.msk [vmem:[%s314] sm:$0x7] %vm318, %v1429
      %p1431 = scmp.lt.s32.totalorder %s19, 1
      %s1432 = scalar_select %p1431, %s19, 1
      %s1433 = smul.addr %s1432, 4
      %s1434 = scalar_lea.vmem %s8, %s1433
      // Predicated region
      $region53: #{model_forward.18} parent=51 // pred_check
        %p1435 = pneg %p215
      $region54: #{model_forward.18} parent=51 // pred_check_branch
        %1437 = sbr.rel (%p1435) target = $region56
      $region55: #{model_forward.18} parent=51 // pred_region
        _
      $region56: #{model_forward.18} parent=51 // pred_fallthru
        _
    $region52: #{model_forward.18} parent=5 // pred_fallthru
      _
    %p1438 = scmp.le.s32.totalorder 2, %s14
    // Predicated region
    $region57: #{model_forward.18} parent=5 // pred_check
      %p1439 = pneg %p1438
    $region58: #{model_forward.18} parent=5 // pred_check_branch
      %1441 = sbr.rel (%p1439) target = $region60
    $region59: #{model_forward.18} parent=5 // pred_region
      %s1442 = ssub.s32 %s14, 2
      // Predicated region
      $region61: #{model_forward.18} parent=59 // pred_check
        %p1443 = pneg %p221
      $region62: #{model_forward.18} parent=59 // pred_check_branch
        %1445 = sbr.rel (%p1443) target = $region64
      $region63: #{model_forward.18} parent=59 // pred_region
        %p1446 = scmp.lt.s32.totalorder %s20, 1
        %s1447 = scalar_select %p1446, %s20, 1
        %s1448 = smul.addr %s1447, 4
        %s1449 = scalar_lea.vmem %s8, %s1448
      $region64: #{model_forward.18} parent=59 // pred_fallthru
        _
    $region60: #{model_forward.18} parent=5 // pred_fallthru
      _
  $region6: #{model_forward.18} parent=0 // loop_footer
    %s18 = sadd.s32 1, %s14
  $region7: #{model_forward.18} parent=0 // loop_footer_branch
    %13 = sbr.rel target = $region3
  $region8: #{model_forward.18} parent=0 // loop_exit
    _

// kernel: custom-call.5
$region0: #{custom-call.5}
  %s0 = inlined_call_operand.vmem [shape: f32[7,2,16], index: 0, kind: output, shape index: {}]

// kernel: custom-call
$region0: #{custom-call}
  %s0 = inlined_call_operand.vmem [shape: f32[2,16], index: 0, kind: output, shape index: {}]

// kernel: model_forward.25
$region0: #{model_forward.25}
  #allocation0 [shape = 'u32[]', space=smem, size = 0x4, offset = 0x4, fixed_abs, tag = 'smem constant byte address 0x4 - core index']
  #allocation1 [shape = 'u32[144,128]{1,0:T(1,128)}', space=vmem, size = 0x12000, scoped, tag = 'internal scratch']
  %s0 = inlined_call_operand.vmem [shape: f32[16,8], index: 0, kind: input, shape index: {}]
  %s1 = inlined_call_operand.vmem [shape: f32[8,64], index: 1, kind: input, shape index: {}]
  %s2 = inlined_call_operand.vmem [shape: f32[1,64], index: 2, kind: input, shape index: {}]
  %s3 = inlined_call_operand.vmem [shape: f32[16,64], index: 3, kind: output, shape index: {}]
  %s4 = sld [smem:[#allocation0]]
  $region22: #{model_forward.25} parent=0
    _
  %s6 = ssub.s32 1, %s4
  %s7 = scalar_select 0, %s6, %s4
  // Predicated region
  $region2: #{model_forward.25} parent=0 // pred_check
    _
  $region3: #{model_forward.25} parent=0 // pred_check_branch
    %9 = sbr.rel (0) target = $region5
  $region4: #{model_forward.25} parent=0 // pred_region
    _
  $region5: #{model_forward.25} parent=0 // pred_fallthru
    _
  // Predicated region
  $region6: #{model_forward.25} parent=0 // pred_check
    _
  $region7: #{model_forward.25} parent=0 // pred_check_branch
    %11 = sbr.rel (0) target = $region9
  $region8: #{model_forward.25} parent=0 // pred_region
    _
  $region9: #{model_forward.25} parent=0 // pred_fallthru
    _
  // Predicated region
  $region10: #{model_forward.25} parent=0 // pred_check
    _
  $region11: #{model_forward.25} parent=0 // pred_check_branch
    %13 = sbr.rel (0) target = $region13
  $region12: #{model_forward.25} parent=0 // pred_region
    _
  $region13: #{model_forward.25} parent=0 // pred_fallthru
    _
  %v14 = vld [vmem:[%s0] sm:$0xff]
  %v15 = vld [vmem:[%s0 + $0x8] sm:$0xff]
  %v16 = vld [vmem:[%s1] sm:$0xff]
  %v17 = vld [vmem:[%s2] sm:$0x1]
  %v19 = vlaneseq
  %v20 = vshrl.u32 %v19, 7
  %v21 = vsub.s32 0, %v20
  %v22 = vrot.slane %v17, %v21
  %vm24 = vcmask 64512
  %v26 = vsel %vm24, %v14, 0
  %v29 = vsel %vm24, %v15, 0
  %31 = vmatprep.subr.mxu0 0.0
  %32 = vmatpush1.msra.mxu0 %v16
  %33 = vmatprep.subr.mxu0 0.0
  %34 = vmatpush1.msra.mxu0 0.0
  %35 = vmatprep.subr.mxu0 0.0
  %36 = vmatpush1.msra.mxu0 0.0
  %37 = vmatprep.subr.mxu0 0.0
  %38 = vmatpush1.msra.mxu0 0.0
  %39 = vmatprep.subr.mxu0 0.0
  %40 = vmatpush1.msra.mxu0 0.0
  %41 = vmatprep.subr.mxu0 0.0
  %42 = vmatpush1.msra.mxu0 0.0
  %43 = vmatprep.subr.mxu0 0.0
  %44 = vmatpush1.msra.mxu0 0.0
  %45 = vmatprep.subr.mxu0 0.0
  %46 = vmatpush1.msra.mxu0 0.0
  %47 = vmatprep.subr.mxu0 0.0
  %48 = vmatpush1.msra.mxu0 0.0
  %49 = vmatprep.subr.mxu0 0.0
  %50 = vmatpush1.msra.mxu0 0.0
  %51 = vmatprep.subr.mxu0 0.0
  %52 = vmatpush1.msra.mxu0 0.0
  %53 = vmatprep.subr.mxu0 0.0
  %54 = vmatpush1.msra.mxu0 0.0
  %55 = vmatprep.subr.mxu0 0.0
  %56 = vmatpush1.msra.mxu0 0.0
  %57 = vmatprep.subr.mxu0 0.0
  %58 = vmatpush1.msra.mxu0 0.0
  %59 = vmatprep.subr.mxu0 0.0
  %60 = vmatpush1.msra.mxu0 0.0
  %61 = vmatprep.subr.mxu0 0.0
  %62 = vmatpush1.msra.mxu0 0.0
  %63 = vmatprep.subr.mxu0 0.0
  %64 = vmatpush1.msra.mxu0 0.0
  %65 = vmatprep.subr.mxu0 0.0
  %66 = vmatpush1.msra.mxu0 0.0
  %67 = vmatprep.subr.mxu0 0.0
  %68 = vmatpush1.msra.mxu0 0.0
  %69 = vmatprep.subr.mxu0 0.0
  %70 = vmatpush1.msra.mxu0 0.0
  %71 = vmatprep.subr.mxu0 0.0
  %72 = vmatpush1.msra.mxu0 0.0
  %73 = vmatprep.subr.mxu0 0.0
  %74 = vmatpush1.msra.mxu0 0.0
  %75 = vmatprep.subr.mxu0 0.0
  %76 = vmatpush1.msra.mxu0 0.0
  %77 = vmatprep.subr.mxu0 0.0
  %78 = vmatpush1.msra.mxu0 0.0
  %79 = vmatprep.subr.mxu0 0.0
  %80 = vmatpush1.msra.mxu0 0.0
  %81 = vmatprep.subr.mxu0 0.0
  %82 = vmatpush1.msra.mxu0 0.0
  %83 = vmatprep.subr.mxu0 0.0
  %84 = vmatpush1.msra.mxu0 0.0
  %85 = vmatprep.subr.mxu0 0.0
  %86 = vmatpush1.msra.mxu0 0.0
  %87 = vmatprep.subr.mxu0 0.0
  %88 = vmatpush1.msra.mxu0 0.0
  %89 = vmatprep.subr.mxu0 0.0
  %90 = vmatpush1.msra.mxu0 0.0
  %91 = vmatprep.subr.mxu0 0.0
  %92 = vmatpush1.msra.mxu0 0.0
  %93 = vmatprep.subr.mxu0 0.0
  %94 = vmatpush1.msra.mxu0 0.0
  %95 = vmatprep.mubr.f32.mxu0 0.0
  %96 = vmatmul.mubr.f32.gmra.mrb[0].mxu0 %v26
  %v97 = vpop.f32.mrb[0].mxu0
  %v98 = vadd.f32 %v22, %v97
  %v99 = vpop.f32.mrb[0].mxu0
  %100 = vmatprep.mubr.f32.mxu0 0.0
  %101 = vmatmul.mubr.f32.gmra.mrb[0].mxu0 %v29
  %v102 = vpop.f32.mrb[0].mxu0
  %v103 = vadd.f32 %v22, %v102
  %v104 = vpop.f32.mrb[0].mxu0
  %105 = vdwg.mxu0
  %vm106 = vcmask 523264
  %107 = vst.msk [vmem:[%s3] sm:$0xff] %vm106, %v98
  %108 = vst.msk [vmem:[%s3 + $0x8] sm:$0xff] %vm106, %v103
  // Predicated region
  $region14: #{model_forward.25} parent=0 // pred_check
    _
  $region15: #{model_forward.25} parent=0 // pred_check_branch
    %110 = sbr.rel (0) target = $region17
  $region16: #{model_forward.25} parent=0 // pred_region
    _
  $region17: #{model_forward.25} parent=0 // pred_fallthru
    _
  // Predicated region
  $region18: #{model_forward.25} parent=0 // pred_check
    _
  $region19: #{model_forward.25} parent=0 // pred_check_branch
    %112 = sbr.rel (0) target = $region21
  $region20: #{model_forward.25} parent=0 // pred_region
    _
  $region21: #{model_forward.25} parent=0 // pred_fallthru
    _

// kernel: model_forward.27
$region0: #{model_forward.27}
  #allocation0 [shape = 'u32[]', space=smem, size = 0x4, offset = 0x4, fixed_abs, tag = 'smem constant byte address 0x4 - core index']
  #allocation1 [shape = 'u32[144,128]{1,0:T(1,128)}', space=vmem, size = 0x12000, scoped, tag = 'internal scratch']
  %s0 = inlined_call_operand.vmem [shape: f32[8,16], index: 0, kind: input, shape index: {}]
  %s1 = inlined_call_operand.vmem [shape: f32[16,11], index: 1, kind: input, shape index: {}]
  %s2 = inlined_call_operand.vmem [shape: f32[1,11], index: 2, kind: input, shape index: {}]
  %s3 = inlined_call_operand.vmem [shape: f32[8,11], index: 3, kind: output, shape index: {}]
  %s4 = sld [smem:[#allocation0]]
  $region22: #{model_forward.27} parent=0
    _
  %s6 = ssub.s32 1, %s4
  %s7 = scalar_select 0, %s6, %s4
  // Predicated region
  $region2: #{model_forward.27} parent=0 // pred_check
    _
  $region3: #{model_forward.27} parent=0 // pred_check_branch
    %9 = sbr.rel (0) target = $region5
  $region4: #{model_forward.27} parent=0 // pred_region
    _
  $region5: #{model_forward.27} parent=0 // pred_fallthru
    _
  // Predicated region
  $region6: #{model_forward.27} parent=0 // pred_check
    _
  $region7: #{model_forward.27} parent=0 // pred_check_branch
    %11 = sbr.rel (0) target = $region9
  $region8: #{model_forward.27} parent=0 // pred_region
    _
  $region9: #{model_forward.27} parent=0 // pred_fallthru
    _
  // Predicated region
  $region10: #{model_forward.27} parent=0 // pred_check
    _
  $region11: #{model_forward.27} parent=0 // pred_check_branch
    %13 = sbr.rel (0) target = $region13
  $region12: #{model_forward.27} parent=0 // pred_region
    _
  $region13: #{model_forward.27} parent=0 // pred_fallthru
    _
  %v14 = vld [vmem:[%s0] sm:$0xff]
  %v15 = vld [vmem:[%s1] sm:$0xff]
  %v16 = vld [vmem:[%s1 + $0x8] sm:$0xff]
  %v17 = vld [vmem:[%s2] sm:$0x1]
  %v19 = vlaneseq
  %v20 = vshrl.u32 %v19, 7
  %v21 = vsub.s32 0, %v20
  %v22 = vrot.slane %v17, %v21
  %vm24 = vcmask 130048
  %v26 = vsel %vm24, %v14, 0
  %28 = vmatprep.subr.mxu0 0.0
  %29 = vmatpush1.msra.mxu0 %v15
  %30 = vmatprep.subr.mxu0 0.0
  %31 = vmatpush1.msra.mxu0 %v16
  %32 = vmatprep.subr.mxu0 0.0
  %33 = vmatpush1.msra.mxu0 0.0
  %34 = vmatprep.subr.mxu0 0.0
  %35 = vmatpush1.msra.mxu0 0.0
  %36 = vmatprep.subr.mxu0 0.0
  %37 = vmatpush1.msra.mxu0 0.0
  %38 = vmatprep.subr.mxu0 0.0
  %39 = vmatpush1.msra.mxu0 0.0
  %40 = vmatprep.subr.mxu0 0.0
  %41 = vmatpush1.msra.mxu0 0.0
  %42 = vmatprep.subr.mxu0 0.0
  %43 = vmatpush1.msra.mxu0 0.0
  %44 = vmatprep.subr.mxu0 0.0
  %45 = vmatpush1.msra.mxu0 0.0
  %46 = vmatprep.subr.mxu0 0.0
  %47 = vmatpush1.msra.mxu0 0.0
  %48 = vmatprep.subr.mxu0 0.0
  %49 = vmatpush1.msra.mxu0 0.0
  %50 = vmatprep.subr.mxu0 0.0
  %51 = vmatpush1.msra.mxu0 0.0
  %52 = vmatprep.subr.mxu0 0.0
  %53 = vmatpush1.msra.mxu0 0.0
  %54 = vmatprep.subr.mxu0 0.0
  %55 = vmatpush1.msra.mxu0 0.0
  %56 = vmatprep.subr.mxu0 0.0
  %57 = vmatpush1.msra.mxu0 0.0
  %58 = vmatprep.subr.mxu0 0.0
  %59 = vmatpush1.msra.mxu0 0.0
  %60 = vmatprep.subr.mxu0 0.0
  %61 = vmatpush1.msra.mxu0 0.0
  %62 = vmatprep.subr.mxu0 0.0
  %63 = vmatpush1.msra.mxu0 0.0
  %64 = vmatprep.subr.mxu0 0.0
  %65 = vmatpush1.msra.mxu0 0.0
  %66 = vmatprep.subr.mxu0 0.0
  %67 = vmatpush1.msra.mxu0 0.0
  %68 = vmatprep.subr.mxu0 0.0
  %69 = vmatpush1.msra.mxu0 0.0
  %70 = vmatprep.subr.mxu0 0.0
  %71 = vmatpush1.msra.mxu0 0.0
  %72 = vmatprep.subr.mxu0 0.0
  %73 = vmatpush1.msra.mxu0 0.0
  %74 = vmatprep.subr.mxu0 0.0
  %75 = vmatpush1.msra.mxu0 0.0
  %76 = vmatprep.subr.mxu0 0.0
  %77 = vmatpush1.msra.mxu0 0.0
  %78 = vmatprep.subr.mxu0 0.0
  %79 = vmatpush1.msra.mxu0 0.0
  %80 = vmatprep.subr.mxu0 0.0
  %81 = vmatpush1.msra.mxu0 0.0
  %82 = vmatprep.subr.mxu0 0.0
  %83 = vmatpush1.msra.mxu0 0.0
  %84 = vmatprep.subr.mxu0 0.0
  %85 = vmatpush1.msra.mxu0 0.0
  %86 = vmatprep.subr.mxu0 0.0
  %87 = vmatpush1.msra.mxu0 0.0
  %88 = vmatprep.subr.mxu0 0.0
  %89 = vmatpush1.msra.mxu0 0.0
  %90 = vmatprep.subr.mxu0 0.0
  %91 = vmatpush1.msra.mxu0 0.0
  %92 = vmatprep.mubr.f32.mxu0 0.0
  %93 = vmatmul.mubr.f32.gmra.mrb[0].mxu0 %v26
  %v94 = vpop.f32.mrb[0].mxu0
  %v95 = vadd.f32 %v22, %v94
  %v96 = vpop.f32.mrb[0].mxu0
  %97 = vdwg.mxu0
  %vm98 = vcmask 89088
  %v99 = vsel %vm98, %v95, -inf
  %100 = vmax.xlane.f32.xlu0 %v99
  %v101 = vpop.xlane.xlu0 %100
  %v102 = vsub.f32 %v95, %v101
  %v103 = vmul.f32 %v102, 1.442695
  %v104 = vpow.pop %v103
  %v105 = vsel %vm98, %v104, 0.0
  %106 = vadd.xlane.f32.xlu0 %v105
  %v107 = vpop.xlane.xlu0 %106
  %v108 = vlog2.pop %v107
  %v109 = vmul.f32 %v108, 0.6931472
  %v110 = vsub.f32 %v102, %v109
  %111 = vst.msk [vmem:[%s3] sm:$0xff] %vm98, %v110
  // Predicated region
  $region14: #{model_forward.27} parent=0 // pred_check
    _
  $region15: #{model_forward.27} parent=0 // pred_check_branch
    %113 = sbr.rel (0) target = $region17
  $region16: #{model_forward.27} parent=0 // pred_region
    _
  $region17: #{model_forward.27} parent=0 // pred_fallthru
    _
  // Predicated region
  $region18: #{model_forward.27} parent=0 // pred_check
    _
  $region19: #{model_forward.27} parent=0 // pred_check_branch
    %115 = sbr.rel (0) target = $region21
  $region20: #{model_forward.27} parent=0 // pred_region
    _
  $region21: #{model_forward.27} parent=0 // pred_fallthru
    _

// kernel: model_forward.26
$region0: #{model_forward.26}
  #allocation0 [shape = 'u32[]', space=smem, size = 0x4, offset = 0x4, fixed_abs, tag = 'smem constant byte address 0x4 - core index']
  #allocation1 [shape = 'u32[144,128]{1,0:T(1,128)}', space=vmem, size = 0x12000, scoped, tag = 'internal scratch']
  %s0 = inlined_call_operand.vmem [shape: f32[2,3,16], index: 0, kind: input, shape index: {}]
  %s1 = inlined_call_operand.vmem [shape: f32[2,7,16], index: 1, kind: input, shape index: {}]
  %s2 = inlined_call_operand.vmem [shape: f32[16,16], index: 2, kind: input, shape index: {}]
  %s3 = inlined_call_operand.vmem [shape: f32[1,16], index: 3, kind: input, shape index: {}]
  %s4 = inlined_call_operand.vmem [shape: f32[16,16], index: 4, kind: input, shape index: {}]
  %s5 = inlined_call_operand.vmem [shape: f32[1,16], index: 5, kind: input, shape index: {}]
  %s6 = inlined_call_operand.vmem [shape: f32[16,11], index: 6, kind: input, shape index: {}]
  %s7 = inlined_call_operand.vmem [shape: f32[1,11], index: 7, kind: input, shape index: {}]
  %s8 = inlined_call_operand.vmem [shape: f32[2,3,7,11], index: 8, kind: output, shape index: {}]
  %s9 = sld [smem:[#allocation0]]
  $region65: #{model_forward.26} parent=0
    _
  %s11 = ssub.s32 1, %s9
  %s12 = scalar_select 0, %s11, %s9
  loop: start=0, step=1, limit=4
  $region2: #{model_forward.26} parent=0 // loop_pre_header
    _
  $region3: #{model_forward.26} parent=0 // loop_header
    %s14 = sphi 0, %s18
    %p15 = scmp.ge.s32.totalorder %s14, 4
    %s24 = sphi 0, %s26
    %s27 = sphi 0, %s24
    %s28 = sphi 0, %s27
    %s44 = sphi 0, %s28
    %s50 = sphi 0, %s52
    %s53 = sphi 0, %s50
    %s54 = sphi 0, %s53
    %s70 = sphi 0, %s54
    %s74 = sphi 0, %s74
    %s76 = sphi 0, %s74
    %s77 = sphi 0, %s76
    %s91 = sphi 0, %s77
    %s95 = sphi 0, %s95
    %s97 = sphi 0, %s95
    %s98 = sphi 0, %s97
    %s112 = sphi 0, %s98
    %s116 = sphi 0, %s116
    %s118 = sphi 0, %s116
    %s119 = sphi 0, %s118
    %s133 = sphi 0, %s119
    %s137 = sphi 0, %s137
    %s139 = sphi 0, %s137
    %s140 = sphi 0, %s139
    %s154 = sphi 0, %s140
    %s158 = sphi 0, %s158
    %s160 = sphi 0, %s158
    %s161 = sphi 0, %s160
    %s175 = sphi 0, %s161
    %s179 = sphi 0, %s179
    %s181 = sphi 0, %s179
    %s182 = sphi 0, %s181
    %s196 = sphi 0, %s182
    %s202 = sphi 0, %s204
    %s205 = sphi 0, %s202
    %s206 = sphi 0, %s205
    %s222 = sphi 0, %s206
  $region4: #{model_forward.26} parent=0 // loop_header_branch
    %17 = sbr.rel (%p15) target = $region8
  $region5: #{model_forward.26} parent=0 // loop_body
    %s19 = ssub.s32 %s14, 1
    %s20 = ssub.s32 %s14, 2
    %s21 = sadd.s32 %s14, 1
    %s22 = ssub.s32 %s14, %s21
    %p23 = scmp.eq.s32.totalorder %s22, 0
    %s25 = sadd.s32 %s24, 1
    %s26 = scalar_select %p23, %s24, %s25
    %p29 = pneg %p23
    %p30 = scmp.eq.s32.totalorder %s14, 1
    %p31 = por %p29, %p30
    %p32 = scmp.ne.s32.totalorder %s24, %s27
    %p33 = scmp.eq.s32.totalorder %s14, 0
    %p34 = por %p32, %p33
    %p35 = scmp.ne.s32.totalorder %s24, %s27
    %p36 = scmp.eq.s32.totalorder %s19, 1
    %p37 = por %p35, %p36
    %p38 = scmp.ne.s32.totalorder %s27, %s28
    %p39 = scmp.eq.s32.totalorder %s19, 0
    %p40 = por %p38, %p39
    %p41 = scmp.ne.s32.totalorder %s27, %s28
    %p42 = scmp.eq.s32.totalorder %s20, 1
    %p43 = por %p41, %p42
    %p45 = scmp.ne.s32.totalorder %s28, %s44
    %p46 = scmp.eq.s32.totalorder %s20, 0
    %p47 = por %p45, %p46
    %s48 = ssub.s32 %s14, %s21
    %p49 = scmp.eq.s32.totalorder %s48, 0
    %s51 = sadd.s32 %s50, 1
    %s52 = scalar_select %p49, %s50, %s51
    %p55 = pneg %p49
    %p56 = scmp.eq.s32.totalorder %s14, 1
    %p57 = por %p55, %p56
    %p58 = scmp.ne.s32.totalorder %s50, %s53
    %p59 = scmp.eq.s32.totalorder %s14, 0
    %p60 = por %p58, %p59
    %p61 = scmp.ne.s32.totalorder %s50, %s53
    %p62 = scmp.eq.s32.totalorder %s19, 1
    %p63 = por %p61, %p62
    %p64 = scmp.ne.s32.totalorder %s53, %s54
    %p65 = scmp.eq.s32.totalorder %s19, 0
    %p66 = por %p64, %p65
    %p67 = scmp.ne.s32.totalorder %s53, %s54
    %p68 = scmp.eq.s32.totalorder %s20, 1
    %p69 = por %p67, %p68
    %p71 = scmp.ne.s32.totalorder %s54, %s70
    %p72 = scmp.eq.s32.totalorder %s20, 0
    %p73 = por %p71, %p72
    %s75 = sadd.s32 %s74, 1
    %p78 = scmp.eq.s32.totalorder %s14, 1
    %p79 = scmp.ne.s32.totalorder %s74, %s76
    %p80 = scmp.eq.s32.totalorder %s14, 0
    %p81 = por %p79, %p80
    %p82 = scmp.ne.s32.totalorder %s74, %s76
    %p83 = scmp.eq.s32.totalorder %s19, 1
    %p84 = por %p82, %p83
    %p85 = scmp.ne.s32.totalorder %s76, %s77
    %p86 = scmp.eq.s32.totalorder %s19, 0
    %p87 = por %p85, %p86
    %p88 = scmp.ne.s32.totalorder %s76, %s77
    %p89 = scmp.eq.s32.totalorder %s20, 1
    %p90 = por %p88, %p89
    %p92 = scmp.ne.s32.totalorder %s77, %s91
    %p93 = scmp.eq.s32.totalorder %s20, 0
    %p94 = por %p92, %p93
    %s96 = sadd.s32 %s95, 1
    %p99 = scmp.eq.s32.totalorder %s14, 1
    %p100 = scmp.ne.s32.totalorder %s95, %s97
    %p101 = scmp.eq.s32.totalorder %s14, 0
    %p102 = por %p100, %p101
    %p103 = scmp.ne.s32.totalorder %s95, %s97
    %p104 = scmp.eq.s32.totalorder %s19, 1
    %p105 = por %p103, %p104
    %p106 = scmp.ne.s32.totalorder %s97, %s98
    %p107 = scmp.eq.s32.totalorder %s19, 0
    %p108 = por %p106, %p107
    %p109 = scmp.ne.s32.totalorder %s97, %s98
    %p110 = scmp.eq.s32.totalorder %s20, 1
    %p111 = por %p109, %p110
    %p113 = scmp.ne.s32.totalorder %s98, %s112
    %p114 = scmp.eq.s32.totalorder %s20, 0
    %p115 = por %p113, %p114
    %s117 = sadd.s32 %s116, 1
    %p120 = scmp.eq.s32.totalorder %s14, 1
    %p121 = scmp.ne.s32.totalorder %s116, %s118
    %p122 = scmp.eq.s32.totalorder %s14, 0
    %p123 = por %p121, %p122
    %p124 = scmp.ne.s32.totalorder %s116, %s118
    %p125 = scmp.eq.s32.totalorder %s19, 1
    %p126 = por %p124, %p125
    %p127 = scmp.ne.s32.totalorder %s118, %s119
    %p128 = scmp.eq.s32.totalorder %s19, 0
    %p129 = por %p127, %p128
    %p130 = scmp.ne.s32.totalorder %s118, %s119
    %p131 = scmp.eq.s32.totalorder %s20, 1
    %p132 = por %p130, %p131
    %p134 = scmp.ne.s32.totalorder %s119, %s133
    %p135 = scmp.eq.s32.totalorder %s20, 0
    %p136 = por %p134, %p135
    %s138 = sadd.s32 %s137, 1
    %p141 = scmp.eq.s32.totalorder %s14, 1
    %p142 = scmp.ne.s32.totalorder %s137, %s139
    %p143 = scmp.eq.s32.totalorder %s14, 0
    %p144 = por %p142, %p143
    %p145 = scmp.ne.s32.totalorder %s137, %s139
    %p146 = scmp.eq.s32.totalorder %s19, 1
    %p147 = por %p145, %p146
    %p148 = scmp.ne.s32.totalorder %s139, %s140
    %p149 = scmp.eq.s32.totalorder %s19, 0
    %p150 = por %p148, %p149
    %p151 = scmp.ne.s32.totalorder %s139, %s140
    %p152 = scmp.eq.s32.totalorder %s20, 1
    %p153 = por %p151, %p152
    %p155 = scmp.ne.s32.totalorder %s140, %s154
    %p156 = scmp.eq.s32.totalorder %s20, 0
    %p157 = por %p155, %p156
    %s159 = sadd.s32 %s158, 1
    %p162 = scmp.eq.s32.totalorder %s14, 1
    %p163 = scmp.ne.s32.totalorder %s158, %s160
    %p164 = scmp.eq.s32.totalorder %s14, 0
    %p165 = por %p163, %p164
    %p166 = scmp.ne.s32.totalorder %s158, %s160
    %p167 = scmp.eq.s32.totalorder %s19, 1
    %p168 = por %p166, %p167
    %p169 = scmp.ne.s32.totalorder %s160, %s161
    %p170 = scmp.eq.s32.totalorder %s19, 0
    %p171 = por %p169, %p170
    %p172 = scmp.ne.s32.totalorder %s160, %s161
    %p173 = scmp.eq.s32.totalorder %s20, 1
    %p174 = por %p172, %p173
    %p176 = scmp.ne.s32.totalorder %s161, %s175
    %p177 = scmp.eq.s32.totalorder %s20, 0
    %p178 = por %p176, %p177
    %s180 = sadd.s32 %s179, 1
    %p183 = scmp.eq.s32.totalorder %s14, 1
    %p184 = scmp.ne.s32.totalorder %s179, %s181
    %p185 = scmp.eq.s32.totalorder %s14, 0
    %p186 = por %p184, %p185
    %p187 = scmp.ne.s32.totalorder %s179, %s181
    %p188 = scmp.eq.s32.totalorder %s19, 1
    %p189 = por %p187, %p188
    %p190 = scmp.ne.s32.totalorder %s181, %s182
    %p191 = scmp.eq.s32.totalorder %s19, 0
    %p192 = por %p190, %p191
    %p193 = scmp.ne.s32.totalorder %s181, %s182
    %p194 = scmp.eq.s32.totalorder %s20, 1
    %p195 = por %p193, %p194
    %p197 = scmp.ne.s32.totalorder %s182, %s196
    %p198 = scmp.eq.s32.totalorder %s20, 0
    %p199 = por %p197, %p198
    %s200 = ssub.s32 %s14, %s21
    %p201 = scmp.eq.s32.totalorder %s200, 0
    %s203 = sadd.s32 %s202, 1
    %s204 = scalar_select %p201, %s202, %s203
    %p207 = pneg %p201
    %p208 = scmp.eq.s32.totalorder %s14, 1
    %p209 = por %p207, %p208
    %p210 = scmp.ne.s32.totalorder %s202, %s205
    %p211 = scmp.eq.s32.totalorder %s14, 0
    %p212 = por %p210, %p211
    %p213 = scmp.ne.s32.totalorder %s202, %s205
    %p214 = scmp.eq.s32.totalorder %s19, 1
    %p215 = por %p213, %p214
    %p216 = scmp.ne.s32.totalorder %s205, %s206
    %p217 = scmp.eq.s32.totalorder %s19, 0
    %p218 = por %p216, %p217
    %p219 = scmp.ne.s32.totalorder %s205, %s206
    %p220 = scmp.eq.s32.totalorder %s20, 1
    %p221 = por %p219, %p220
    %p223 = scmp.ne.s32.totalorder %s206, %s222
    %p224 = scmp.eq.s32.totalorder %s20, 0
    %p225 = por %p223, %p224
    %p226 = scmp.le.s32.totalorder 1, %s14
    %p227 = scmp.lt.s32.totalorder %s14, 3
    %p228 = pnand %p226, %p227
    %p229 = pneg %p228
    // Predicated region
    $region9: #{model_forward.26} parent=5 // pred_check
      _
    $region10: #{model_forward.26} parent=5 // pred_check_branch
      %231 = sbr.rel (%p228) target = $region12
    $region11: #{model_forward.26} parent=5 // pred_region
      %s232 = ssub.s32 %s14, 1
      // Predicated region
      $region13: #{model_forward.26} parent=11 // pred_check
        %p233 = pneg %p87
      $region14: #{model_forward.26} parent=11 // pred_check_branch
        %235 = sbr.rel (%p233) target = $region16
      $region15: #{model_forward.26} parent=11 // pred_region
        _
      $region16: #{model_forward.26} parent=11 // pred_fallthru
        _
      // Predicated region
      $region17: #{model_forward.26} parent=11 // pred_check
        %p236 = pneg %p108
      $region18: #{model_forward.26} parent=11 // pred_check_branch
        %238 = sbr.rel (%p236) target = $region20
      $region19: #{model_forward.26} parent=11 // pred_region
        _
      $region20: #{model_forward.26} parent=11 // pred_fallthru
        _
      // Predicated region
      $region21: #{model_forward.26} parent=11 // pred_check
        %p239 = pneg %p129
      $region22: #{model_forward.26} parent=11 // pred_check_branch
        %241 = sbr.rel (%p239) target = $region24
      $region23: #{model_forward.26} parent=11 // pred_region
        _
      $region24: #{model_forward.26} parent=11 // pred_fallthru
        _
      // Predicated region
      $region25: #{model_forward.26} parent=11 // pred_check
        %p242 = pneg %p150
      $region26: #{model_forward.26} parent=11 // pred_check_branch
        %244 = sbr.rel (%p242) target = $region28
      $region27: #{model_forward.26} parent=11 // pred_region
        _
      $region28: #{model_forward.26} parent=11 // pred_fallthru
        _
      // Predicated region
      $region29: #{model_forward.26} parent=11 // pred_check
        %p245 = pneg %p171
      $region30: #{model_forward.26} parent=11 // pred_check_branch
        %247 = sbr.rel (%p245) target = $region32
      $region31: #{model_forward.26} parent=11 // pred_region
        _
      $region32: #{model_forward.26} parent=11 // pred_fallthru
        _
      // Predicated region
      $region33: #{model_forward.26} parent=11 // pred_check
        %p248 = pneg %p192
      $region34: #{model_forward.26} parent=11 // pred_check_branch
        %250 = sbr.rel (%p248) target = $region36
      $region35: #{model_forward.26} parent=11 // pred_region
        _
      $region36: #{model_forward.26} parent=11 // pred_fallthru
        _
    $region12: #{model_forward.26} parent=5 // pred_fallthru
      _
    %p251 = scmp.lt.s32.totalorder %s14, 2
    // Predicated region
    $region37: #{model_forward.26} parent=5 // pred_check
      %p252 = pneg %p251
    $region38: #{model_forward.26} parent=5 // pred_check_branch
      %254 = sbr.rel (%p252) target = $region40
    $region39: #{model_forward.26} parent=5 // pred_region
      // Predicated region
      $region41: #{model_forward.26} parent=39 // pred_check
        %p255 = pneg %p34
      $region42: #{model_forward.26} parent=39 // pred_check_branch
        %257 = sbr.rel (%p255) target = $region44
      $region43: #{model_forward.26} parent=39 // pred_region
        %p258 = scmp.lt.s32.totalorder %s14, 1
        %s259 = scalar_select %p258, %s14, 1
        %s260 = smul.addr %s259, 4
        %s261 = scalar_lea.vmem %s0, %s260
      $region44: #{model_forward.26} parent=39 // pred_fallthru
        _
      // Predicated region
      $region45: #{model_forward.26} parent=39 // pred_check
        %p262 = pneg %p60
      $region46: #{model_forward.26} parent=39 // pred_check_branch
        %264 = sbr.rel (%p262) target = $region48
      $region47: #{model_forward.26} parent=39 // pred_region
        %p265 = scmp.lt.s32.totalorder %s14, 1
        %s266 = scalar_select %p265, %s14, 1
        %s267 = smul.addr %s266, 8
        %s268 = scalar_lea.vmem %s1, %s267
      $region48: #{model_forward.26} parent=39 // pred_fallthru
        _
    $region40: #{model_forward.26} parent=5 // pred_fallthru
      _
    %p269 = scmp.le.s32.totalorder 1, %s14
    %p270 = scmp.lt.s32.totalorder %s14, 3
    %p271 = pnand %p269, %p270
    %p272 = pneg %p271
    // Predicated region
    $region49: #{model_forward.26} parent=5 // pred_check
      _
    $region50: #{model_forward.26} parent=5 // pred_check_branch
      %274 = sbr.rel (%p271) target = $region52
    $region51: #{model_forward.26} parent=5 // pred_region
      %s275 = ssub.s32 %s14, 1
      %p276 = scmp.lt.s32.totalorder %s19, 1
      %s277 = scalar_select %p276, %s19, 1
      %s278 = smul.addr %s277, 4
      %s279 = scalar_lea.vmem %s0, %s278
      %p280 = pneg %p40
      %p281 = pneg %p37
      %p282 = scmp.lt.s32.totalorder %s19, 1
      %s283 = scalar_select %p282, %s19, 1
      %s284 = smul.addr %s283, 8
      %s285 = scalar_lea.vmem %s1, %s284
      %p286 = pneg %p66
      %p287 = pneg %p63
      %p288 = pneg %p87
      %p289 = pneg %p84
      %p290 = pneg %p108
      %p291 = pneg %p105
      %p292 = pneg %p129
      %p293 = pneg %p126
      %p294 = pneg %p150
      %p295 = pneg %p147
      %p296 = pneg %p171
      %p297 = pneg %p168
      %p298 = pneg %p192
      %p299 = pneg %p189
      %p300 = pneg %p218
      %p301 = pneg %p215
      %p302 = scmp.lt.s32.totalorder %s19, 1
      %s303 = scalar_select %p302, %s19, 1
      %s304 = smul.addr %s303, 3
      %s305 = smul.addr %s304, 8
      %s306 = scalar_lea.vmem %s8, %s305
      %p307 = scmp.lt.s32.totalorder %s19, 1
      %s308 = scalar_select %p307, %s19, 1
      %s309 = smul.addr %s308, 4
      %s310 = scalar_lea.vmem %s0, %s309
      %p311 = scmp.lt.s32.totalorder %s19, 1
      %s312 = scalar_select %p311, %s19, 1
      %s313 = smul.addr %s312, 8
      %s314 = scalar_lea.vmem %s1, %s313
      %p315 = scmp.lt.s32.totalorder %s19, 1
      %s316 = scalar_select %p315, %s19, 1
      %s317 = smul.addr %s316, 3
      %s318 = smul.addr %s317, 8
      %s319 = scalar_lea.vmem %s8, %s318
      %v320 = vld [vmem:[%s310] sm:$0x7]
      %v321 = vld [vmem:[%s314] sm:$0x7f]
      %v322 = vld [vmem:[%s2] sm:$0xff]
      %v323 = vld [vmem:[%s2 + $0x8] sm:$0xff]
      %v324 = vld [vmem:[%s3] sm:$0x1]
      %v326 = vlaneseq
      %v327 = vshrl.u32 %v326, 7
      %v328 = vsub.s32 0, %v327
      %v329 = vrot.slane %v324, %v328
      %vm331 = vcmask 130048
      %v333 = vsel %vm331, %v320, 0
      %335 = vmatprep.subr.mxu0 0.0
      %336 = vmatpush1.msra.mxu0 %v322
      %337 = vmatprep.subr.mxu0 0.0
      %338 = vmatpush1.msra.mxu0 %v323
      %339 = vmatprep.subr.mxu0 0.0
      %340 = vmatpush1.msra.mxu0 0.0
      %341 = vmatprep.subr.mxu0 0.0
      %342 = vmatpush1.msra.mxu0 0.0
      %343 = vmatprep.subr.mxu0 0.0
      %344 = vmatpush1.msra.mxu0 0.0
      %345 = vmatprep.subr.mxu0 0.0
      %346 = vmatpush1.msra.mxu0 0.0
      %347 = vmatprep.subr.mxu0 0.0
      %348 = vmatpush1.msra.mxu0 0.0
      %349 = vmatprep.subr.mxu0 0.0
      %350 = vmatpush1.msra.mxu0 0.0
      %351 = vmatprep.subr.mxu0 0.0
      %352 = vmatpush1.msra.mxu0 0.0
      %353 = vmatprep.subr.mxu0 0.0
      %354 = vmatpush1.msra.mxu0 0.0
      %355 = vmatprep.subr.mxu0 0.0
      %356 = vmatpush1.msra.mxu0 0.0
      %357 = vmatprep.subr.mxu0 0.0
      %358 = vmatpush1.msra.mxu0 0.0
      %359 = vmatprep.subr.mxu0 0.0
      %360 = vmatpush1.msra.mxu0 0.0
      %361 = vmatprep.subr.mxu0 0.0
      %362 = vmatpush1.msra.mxu0 0.0
      %363 = vmatprep.subr.mxu0 0.0
      %364 = vmatpush1.msra.mxu0 0.0
      %365 = vmatprep.subr.mxu0 0.0
      %366 = vmatpush1.msra.mxu0 0.0
      %367 = vmatprep.subr.mxu0 0.0
      %368 = vmatpush1.msra.mxu0 0.0
      %369 = vmatprep.subr.mxu0 0.0
      %370 = vmatpush1.msra.mxu0 0.0
      %371 = vmatprep.subr.mxu0 0.0
      %372 = vmatpush1.msra.mxu0 0.0
      %373 = vmatprep.subr.mxu0 0.0
      %374 = vmatpush1.msra.mxu0 0.0
      %375 = vmatprep.subr.mxu0 0.0
      %376 = vmatpush1.msra.mxu0 0.0
      %377 = vmatprep.subr.mxu0 0.0
      %378 = vmatpush1.msra.mxu0 0.0
      %379 = vmatprep.subr.mxu0 0.0
      %380 = vmatpush1.msra.mxu0 0.0
      %381 = vmatprep.subr.mxu0 0.0
      %382 = vmatpush1.msra.mxu0 0.0
      %383 = vmatprep.subr.mxu0 0.0
      %384 = vmatpush1.msra.mxu0 0.0
      %385 = vmatprep.subr.mxu0 0.0
      %386 = vmatpush1.msra.mxu0 0.0
      %387 = vmatprep.subr.mxu0 0.0
      %388 = vmatpush1.msra.mxu0 0.0
      %389 = vmatprep.subr.mxu0 0.0
      %390 = vmatpush1.msra.mxu0 0.0
      %391 = vmatprep.subr.mxu0 0.0
      %392 = vmatpush1.msra.mxu0 0.0
      %393 = vmatprep.subr.mxu0 0.0
      %394 = vmatpush1.msra.mxu0 0.0
      %395 = vmatprep.subr.mxu0 0.0
      %396 = vmatpush1.msra.mxu0 0.0
      %397 = vmatprep.subr.mxu0 0.0
      %398 = vmatpush1.msra.mxu0 0.0
      %399 = vmatprep.mubr.f32.mxu0 0.0
      %400 = vmatmul.mubr.f32.gmra.mrb[0].mxu0 %v333
      %v401 = vpop.f32.mrb[0].mxu0
      %v402 = vadd.f32 %v329, %v401
      %v403 = vpop.f32.mrb[0].mxu0
      %404 = vdwg.mxu0
      %v405 = vld [vmem:[%s4] sm:$0xff]
      %v406 = vld [vmem:[%s4 + $0x8] sm:$0xff]
      %v407 = vld [vmem:[%s5] sm:$0x1]
      %v409 = vlaneseq
      %v410 = vshrl.u32 %v409, 7
      %v411 = vsub.s32 0, %v410
      %v412 = vrot.slane %v407, %v411
      %v415 = vsel %vm331, %v321, 0
      %417 = vmatprep.subr.mxu0 0.0
      %418 = vmatpush1.msra.mxu0 %v405
      %419 = vmatprep.subr.mxu0 0.0
      %420 = vmatpush1.msra.mxu0 %v406
      %421 = vmatprep.subr.mxu0 0.0
      %422 = vmatpush1.msra.mxu0 0.0
      %423 = vmatprep.subr.mxu0 0.0
      %424 = vmatpush1.msra.mxu0 0.0
      %425 = vmatprep.subr.mxu0 0.0
      %426 = vmatpush1.msra.mxu0 0.0
      %427 = vmatprep.subr.mxu0 0.0
      %428 = vmatpush1.msra.mxu0 0.0
      %429 = vmatprep.subr.mxu0 0.0
      %430 = vmatpush1.msra.mxu0 0.0
      %431 = vmatprep.subr.mxu0 0.0
      %432 = vmatpush1.msra.mxu0 0.0
      %433 = vmatprep.subr.mxu0 0.0
      %434 = vmatpush1.msra.mxu0 0.0
      %435 = vmatprep.subr.mxu0 0.0
      %436 = vmatpush1.msra.mxu0 0.0
      %437 = vmatprep.subr.mxu0 0.0
      %438 = vmatpush1.msra.mxu0 0.0
      %439 = vmatprep.subr.mxu0 0.0
      %440 = vmatpush1.msra.mxu0 0.0
      %441 = vmatprep.subr.mxu0 0.0
      %442 = vmatpush1.msra.mxu0 0.0
      %443 = vmatprep.subr.mxu0 0.0
      %444 = vmatpush1.msra.mxu0 0.0
      %445 = vmatprep.subr.mxu0 0.0
      %446 = vmatpush1.msra.mxu0 0.0
      %447 = vmatprep.subr.mxu0 0.0
      %448 = vmatpush1.msra.mxu0 0.0
      %449 = vmatprep.subr.mxu0 0.0
      %450 = vmatpush1.msra.mxu0 0.0
      %451 = vmatprep.subr.mxu0 0.0
      %452 = vmatpush1.msra.mxu0 0.0
      %453 = vmatprep.subr.mxu0 0.0
      %454 = vmatpush1.msra.mxu0 0.0
      %455 = vmatprep.subr.mxu0 0.0
      %456 = vmatpush1.msra.mxu0 0.0
      %457 = vmatprep.subr.mxu0 0.0
      %458 = vmatpush1.msra.mxu0 0.0
      %459 = vmatprep.subr.mxu0 0.0
      %460 = vmatpush1.msra.mxu0 0.0
      %461 = vmatprep.subr.mxu0 0.0
      %462 = vmatpush1.msra.mxu0 0.0
      %463 = vmatprep.subr.mxu0 0.0
      %464 = vmatpush1.msra.mxu0 0.0
      %465 = vmatprep.subr.mxu0 0.0
      %466 = vmatpush1.msra.mxu0 0.0
      %467 = vmatprep.subr.mxu0 0.0
      %468 = vmatpush1.msra.mxu0 0.0
      %469 = vmatprep.subr.mxu0 0.0
      %470 = vmatpush1.msra.mxu0 0.0
      %471 = vmatprep.subr.mxu0 0.0
      %472 = vmatpush1.msra.mxu0 0.0
      %473 = vmatprep.subr.mxu0 0.0
      %474 = vmatpush1.msra.mxu0 0.0
      %475 = vmatprep.subr.mxu0 0.0
      %476 = vmatpush1.msra.mxu0 0.0
      %477 = vmatprep.subr.mxu0 0.0
      %478 = vmatpush1.msra.mxu0 0.0
      %479 = vmatprep.subr.mxu0 0.0
      %480 = vmatpush1.msra.mxu0 0.0
      %481 = vmatprep.mubr.f32.mxu0 0.0
      %482 = vmatmul.mubr.f32.gmra.mrb[0].mxu0 %v415
      %v483 = vpop.f32.mrb[0].mxu0
      %v484 = vadd.f32 %v412, %v483
      %v485 = vpop.f32.mrb[0].mxu0
      %486 = vdwg.mxu0
      %v489 = vunpack.c.l.s4 1966171168
      %v490 = vunpack.c.0.s8 %v489
      %v491 = vlaneseq
      %v492 = vshrl.u32 %v491, 7
      %v493 = vsub.s32 %v490, %v492
      %v494 = vrot.slane %v402, %v493
      %v495 = vcombine.high %v494, %v494
      %v497 = vunpack.c.l.s4 1966171168
      %v498 = vunpack.c.0.s8 %v497
      %v499 = vlaneseq
      %v500 = vshrl.u32 %v499, 7
      %v501 = vsub.s32 %v498, %v500
      %v502 = vrot.slane %v494, %v501
      %v504 = vunpack.c.l.s4 1966171168
      %v505 = vunpack.c.0.s8 %v504
      %v506 = vlaneseq
      %v507 = vshrl.u32 %v506, 7
      %v508 = vsub.s32 %v505, %v507
      %v509 = vrot.slane %v495, %v508
      %v510 = vcombine.high %v502, %v502
      %v511 = vlaneseq
      %v512 = vshrl.u32 %v511, 7
      %v513 = vsub.s32 0, %v512
      %v514 = vrot.slane %v502, %v513
      %v515 = vlaneseq
      %v516 = vshrl.u32 %v515, 7
      %v517 = vsub.s32 0, %v516
      %v518 = vrot.slane %v509, %v517
      %v519 = vlaneseq
      %v520 = vshrl.u32 %v519, 7
      %v521 = vsub.s32 0, %v520
      %v522 = vrot.slane %v510, %v521
      %v526 = vadd.f32 %v514, %v484
      %v527 = vadd.f32 %v518, %v484
      %v528 = vadd.f32 %v522, %v484
      %v529 = vtanh.pop %v526
      %v530 = vtanh.pop %v527
      %v531 = vtanh.pop %v528
      %v535 = vcombine.high %v529, %v529
      %v537 = vunpack.c.l.s4 1966171168
      %v538 = vunpack.c.0.s8 %v537
      %v539 = vlaneseq
      %v540 = vshrl.u32 %v539, 7
      %v541 = vsub.s32 %v538, %v540
      %v542 = vrot.slane %v529, %v541
      %v544 = vunpack.c.l.s4 1966171168
      %v545 = vunpack.c.0.s8 %v544
      %v546 = vlaneseq
      %v547 = vshrl.u32 %v546, 7
      %v548 = vsub.s32 %v545, %v547
      %v549 = vrot.slane %v535, %v548
      %v550 = vcombine.high %v542, %v542
      %v551 = vcombine.high %v549, %v549
      %v553 = vunpack.c.l.s4 1966171168
      %v554 = vunpack.c.0.s8 %v553
      %v555 = vlaneseq
      %v556 = vshrl.u32 %v555, 7
      %v557 = vsub.s32 %v554, %v556
      %v558 = vrot.slane %v542, %v557
      %v560 = vunpack.c.l.s4 1966171168
      %v561 = vunpack.c.0.s8 %v560
      %v562 = vlaneseq
      %v563 = vshrl.u32 %v562, 7
      %v564 = vsub.s32 %v561, %v563
      %v565 = vrot.slane %v549, %v564
      %v567 = vunpack.c.l.s4 1966171168
      %v568 = vunpack.c.0.s8 %v567
      %v569 = vlaneseq
      %v570 = vshrl.u32 %v569, 7
      %v571 = vsub.s32 %v568, %v570
      %v572 = vrot.slane %v550, %v571
      %v574 = vunpack.c.l.s4 1966171168
      %v575 = vunpack.c.0.s8 %v574
      %v576 = vlaneseq
      %v577 = vshrl.u32 %v576, 7
      %v578 = vsub.s32 %v575, %v577
      %v579 = vrot.slane %v551, %v578
      %v580 = vcombine.high %v558, %v558
      %v581 = vcombine.high %v565, %v565
      %v582 = vcombine.high %v572, %v572
      %v583 = vcombine.high %v530, %v530
      %v585 = vunpack.c.l.s4 1966171168
      %v586 = vunpack.c.0.s8 %v585
      %v587 = vlaneseq
      %v588 = vshrl.u32 %v587, 7
      %v589 = vsub.s32 %v586, %v588
      %v590 = vrot.slane %v530, %v589
      %v592 = vunpack.c.l.s4 1966171168
      %v593 = vunpack.c.0.s8 %v592
      %v594 = vlaneseq
      %v595 = vshrl.u32 %v594, 7
      %v596 = vsub.s32 %v593, %v595
      %v597 = vrot.slane %v583, %v596
      %v598 = vcombine.high %v590, %v590
      %v599 = vcombine.high %v597, %v597
      %v601 = vunpack.c.l.s4 1966171168
      %v602 = vunpack.c.0.s8 %v601
      %v603 = vlaneseq
      %v604 = vshrl.u32 %v603, 7
      %v605 = vsub.s32 %v602, %v604
      %v606 = vrot.slane %v590, %v605
      %v608 = vunpack.c.l.s4 1966171168
      %v609 = vunpack.c.0.s8 %v608
      %v610 = vlaneseq
      %v611 = vshrl.u32 %v610, 7
      %v612 = vsub.s32 %v609, %v611
      %v613 = vrot.slane %v597, %v612
      %v615 = vunpack.c.l.s4 1966171168
      %v616 = vunpack.c.0.s8 %v615
      %v617 = vlaneseq
      %v618 = vshrl.u32 %v617, 7
      %v619 = vsub.s32 %v616, %v618
      %v620 = vrot.slane %v598, %v619
      %v622 = vunpack.c.l.s4 1966171168
      %v623 = vunpack.c.0.s8 %v622
      %v624 = vlaneseq
      %v625 = vshrl.u32 %v624, 7
      %v626 = vsub.s32 %v623, %v625
      %v627 = vrot.slane %v599, %v626
      %v628 = vcombine.high %v606, %v606
      %v629 = vcombine.high %v613, %v613
      %v630 = vcombine.high %v620, %v620
      %v631 = vcombine.high %v531, %v531
      %v633 = vunpack.c.l.s4 1966171168
      %v634 = vunpack.c.0.s8 %v633
      %v635 = vlaneseq
      %v636 = vshrl.u32 %v635, 7
      %v637 = vsub.s32 %v634, %v636
      %v638 = vrot.slane %v531, %v637
      %v640 = vunpack.c.l.s4 1966171168
      %v641 = vunpack.c.0.s8 %v640
      %v642 = vlaneseq
      %v643 = vshrl.u32 %v642, 7
      %v644 = vsub.s32 %v641, %v643
      %v645 = vrot.slane %v631, %v644
      %v646 = vcombine.high %v638, %v638
      %v647 = vcombine.high %v645, %v645
      %v649 = vunpack.c.l.s4 1966171168
      %v650 = vunpack.c.0.s8 %v649
      %v651 = vlaneseq
      %v652 = vshrl.u32 %v651, 7
      %v653 = vsub.s32 %v650, %v652
      %v654 = vrot.slane %v638, %v653
      %v656 = vunpack.c.l.s4 1966171168
      %v657 = vunpack.c.0.s8 %v656
      %v658 = vlaneseq
      %v659 = vshrl.u32 %v658, 7
      %v660 = vsub.s32 %v657, %v659
      %v661 = vrot.slane %v645, %v660
      %v663 = vunpack.c.l.s4 1966171168
      %v664 = vunpack.c.0.s8 %v663
      %v665 = vlaneseq
      %v666 = vshrl.u32 %v665, 7
      %v667 = vsub.s32 %v664, %v666
      %v668 = vrot.slane %v646, %v667
      %v670 = vunpack.c.l.s4 1966171168
      %v671 = vunpack.c.0.s8 %v670
      %v672 = vlaneseq
      %v673 = vshrl.u32 %v672, 7
      %v674 = vsub.s32 %v671, %v673
      %v675 = vrot.slane %v647, %v674
      %v676 = vcombine.high %v654, %v654
      %v677 = vcombine.high %v661, %v661
      %v678 = vcombine.high %v668, %v668
      %v679 = vld [vmem:[%s6] sm:$0xff]
      %v680 = vld [vmem:[%s6 + $0x8] sm:$0xff]
      %v681 = vld [vmem:[%s7] sm:$0x1]
      %v683 = vlaneseq
      %v684 = vshrl.u32 %v683, 7
      %v685 = vsub.s32 0, %v684
      %v686 = vrot.slane %v681, %v685
      %v688 = vcombine.low %v558, %v572
      %v689 = vcombine.low %v580, %v582
      %v690 = vcombine.low %v565, %v579
      %v691 = vcombine.low %v581, %v606
      %v693 = vunpack.c.l.s4 1966171168
      %v694 = vunpack.c.0.s8 %v693
      %v695 = vlaneseq
      %v696 = vshrl.u32 %v695, 7
      %v697 = vsub.s32 %v694, %v696
      %v698 = vrot.slane %v688, %v697
      %v700 = vunpack.c.l.s4 1966171168
      %v701 = vunpack.c.0.s8 %v700
      %v702 = vlaneseq
      %v703 = vshrl.u32 %v702, 7
      %v704 = vsub.s32 %v701, %v703
      %v705 = vrot.slane %v689, %v704
      %v707 = vunpack.c.l.s4 1966171168
      %v708 = vunpack.c.0.s8 %v707
      %v709 = vlaneseq
      %v710 = vshrl.u32 %v709, 7
      %v711 = vsub.s32 %v708, %v710
      %v712 = vrot.slane %v690, %v711
      %v714 = vunpack.c.l.s4 1966171168
      %v715 = vunpack.c.0.s8 %v714
      %v716 = vlaneseq
      %v717 = vshrl.u32 %v716, 7
      %v718 = vsub.s32 %v715, %v717
      %v719 = vrot.slane %v691, %v718
      %v720 = vcombine.low %v698, %v705
      %v721 = vcombine.low %v712, %v719
      %v723 = vunpack.c.l.s4 1966171168
      %v724 = vunpack.c.0.s8 %v723
      %v725 = vlaneseq
      %v726 = vshrl.u32 %v725, 7
      %v727 = vsub.s32 %v724, %v726
      %v728 = vrot.slane %v720, %v727
      %v730 = vunpack.c.l.s4 1966171168
      %v731 = vunpack.c.0.s8 %v730
      %v732 = vlaneseq
      %v733 = vshrl.u32 %v732, 7
      %v734 = vsub.s32 %v731, %v733
      %v735 = vrot.slane %v721, %v734
      %v736 = vcombine.low %v728, %v735
      %v737 = vcombine.low %v620, %v628
      %v738 = vcombine.low %v630, %v613
      %v739 = vcombine.low %v627, %v629
      %v740 = vcombine.low %v654, %v668
      %v742 = vunpack.c.l.s4 1966171168
      %v743 = vunpack.c.0.s8 %v742
      %v744 = vlaneseq
      %v745 = vshrl.u32 %v744, 7
      %v746 = vsub.s32 %v743, %v745
      %v747 = vrot.slane %v737, %v746
      %v749 = vunpack.c.l.s4 1966171168
      %v750 = vunpack.c.0.s8 %v749
      %v751 = vlaneseq
      %v752 = vshrl.u32 %v751, 7
      %v753 = vsub.s32 %v750, %v752
      %v754 = vrot.slane %v738, %v753
      %v756 = vunpack.c.l.s4 1966171168
      %v757 = vunpack.c.0.s8 %v756
      %v758 = vlaneseq
      %v759 = vshrl.u32 %v758, 7
      %v760 = vsub.s32 %v757, %v759
      %v761 = vrot.slane %v739, %v760
      %v763 = vunpack.c.l.s4 1966171168
      %v764 = vunpack.c.0.s8 %v763
      %v765 = vlaneseq
      %v766 = vshrl.u32 %v765, 7
      %v767 = vsub.s32 %v764, %v766
      %v768 = vrot.slane %v740, %v767
      %v769 = vcombine.low %v747, %v754
      %v770 = vcombine.low %v761, %v768
      %v772 = vunpack.c.l.s4 1966171168
      %v773 = vunpack.c.0.s8 %v772
      %v774 = vlaneseq
      %v775 = vshrl.u32 %v774, 7
      %v776 = vsub.s32 %v773, %v775
      %v777 = vrot.slane %v769, %v776
      %v779 = vunpack.c.l.s4 1966171168
      %v780 = vunpack.c.0.s8 %v779
      %v781 = vlaneseq
      %v782 = vshrl.u32 %v781, 7
      %v783 = vsub.s32 %v780, %v782
      %v784 = vrot.slane %v770, %v783
      %v785 = vcombine.low %v777, %v784
      %v786 = vcombine.low %v676, %v678
      %v787 = vcombine.low %v661, %v675
      %v789 = vunpack.c.l.s4 1966171168
      %v790 = vunpack.c.0.s8 %v789
      %v791 = vlaneseq
      %v792 = vshrl.u32 %v791, 7
      %v793 = vsub.s32 %v790, %v792
      %v794 = vrot.slane %v786, %v793
      %v796 = vunpack.c.l.s4 1966171168
      %v797 = vunpack.c.0.s8 %v796
      %v798 = vlaneseq
      %v799 = vshrl.u32 %v798, 7
      %v800 = vsub.s32 %v797, %v799
      %v801 = vrot.slane %v787, %v800
      %v803 = vunpack.c.l.s4 1966171168
      %v804 = vunpack.c.0.s8 %v803
      %v805 = vlaneseq
      %v806 = vshrl.u32 %v805, 7
      %v807 = vsub.s32 %v804, %v806
      %v808 = vrot.slane %v677, %v807
      %v809 = vcombine.low %v794, %v801
      %v811 = vunpack.c.l.s4 1966171168
      %v812 = vunpack.c.0.s8 %v811
      %v813 = vlaneseq
      %v814 = vshrl.u32 %v813, 7
      %v815 = vsub.s32 %v812, %v814
      %v816 = vrot.slane %v809, %v815
      %v818 = vunpack.c.l.s4 1966171168
      %v819 = vunpack.c.0.s8 %v818
      %v820 = vlaneseq
      %v821 = vshrl.u32 %v820, 7
      %v822 = vsub.s32 %v819, %v821
      %v823 = vrot.slane %v808, %v822
      %v824 = vcombine.low %v816, %v823
      %v825 = vsel %vm331, %v736, 0
      %v827 = vsel %vm331, %v785, 0
      %v829 = vsel %vm331, %v824, 0
      %831 = vmatprep.subr.mxu0 0.0
      %832 = vmatpush1.msra.mxu0 %v679
      %833 = vmatprep.subr.mxu0 0.0
      %834 = vmatpush1.msra.mxu0 %v680
      %835 = vmatprep.subr.mxu0 0.0
      %836 = vmatpush1.msra.mxu0 0.0
      %837 = vmatprep.subr.mxu0 0.0
      %838 = vmatpush1.msra.mxu0 0.0
      %839 = vmatprep.subr.mxu0 0.0
      %840 = vmatpush1.msra.mxu0 0.0
      %841 = vmatprep.subr.mxu0 0.0
      %842 = vmatpush1.msra.mxu0 0.0
      %843 = vmatprep.subr.mxu0 0.0
      %844 = vmatpush1.msra.mxu0 0.0
      %845 = vmatprep.subr.mxu0 0.0
      %846 = vmatpush1.msra.mxu0 0.0
      %847 = vmatprep.subr.mxu0 0.0
      %848 = vmatpush1.msra.mxu0 0.0
      %849 = vmatprep.subr.mxu0 0.0
      %850 = vmatpush1.msra.mxu0 0.0
      %851 = vmatprep.subr.mxu0 0.0
      %852 = vmatpush1.msra.mxu0 0.0
      %853 = vmatprep.subr.mxu0 0.0
      %854 = vmatpush1.msra.mxu0 0.0
      %855 = vmatprep.subr.mxu0 0.0
      %856 = vmatpush1.msra.mxu0 0.0
      %857 = vmatprep.subr.mxu0 0.0
      %858 = vmatpush1.msra.mxu0 0.0
      %859 = vmatprep.subr.mxu0 0.0
      %860 = vmatpush1.msra.mxu0 0.0
      %861 = vmatprep.subr.mxu0 0.0
      %862 = vmatpush1.msra.mxu0 0.0
      %863 = vmatprep.subr.mxu0 0.0
      %864 = vmatpush1.msra.mxu0 0.0
      %865 = vmatprep.subr.mxu0 0.0
      %866 = vmatpush1.msra.mxu0 0.0
      %867 = vmatprep.subr.mxu0 0.0
      %868 = vmatpush1.msra.mxu0 0.0
      %869 = vmatprep.subr.mxu0 0.0
      %870 = vmatpush1.msra.mxu0 0.0
      %871 = vmatprep.subr.mxu0 0.0
      %872 = vmatpush1.msra.mxu0 0.0
      %873 = vmatprep.subr.mxu0 0.0
      %874 = vmatpush1.msra.mxu0 0.0
      %875 = vmatprep.subr.mxu0 0.0
      %876 = vmatpush1.msra.mxu0 0.0
      %877 = vmatprep.subr.mxu0 0.0
      %878 = vmatpush1.msra.mxu0 0.0
      %879 = vmatprep.subr.mxu0 0.0
      %880 = vmatpush1.msra.mxu0 0.0
      %881 = vmatprep.subr.mxu0 0.0
      %882 = vmatpush1.msra.mxu0 0.0
      %883 = vmatprep.subr.mxu0 0.0
      %884 = vmatpush1.msra.mxu0 0.0
      %885 = vmatprep.subr.mxu0 0.0
      %886 = vmatpush1.msra.mxu0 0.0
      %887 = vmatprep.subr.mxu0 0.0
      %888 = vmatpush1.msra.mxu0 0.0
      %889 = vmatprep.subr.mxu0 0.0
      %890 = vmatpush1.msra.mxu0 0.0
      %891 = vmatprep.subr.mxu0 0.0
      %892 = vmatpush1.msra.mxu0 0.0
      %893 = vmatprep.subr.mxu0 0.0
      %894 = vmatpush1.msra.mxu0 0.0
      %895 = vmatprep.mubr.f32.mxu0 0.0
      %896 = vmatmul.mubr.f32.gmra.mrb[0].mxu0 %v825
      %v897 = vpop.f32.mrb[0].mxu0
      %v898 = vadd.f32 %v686, %v897
      %v899 = vpop.f32.mrb[0].mxu0
      %900 = vmatprep.mubr.f32.mxu0 0.0
      %901 = vmatmul.mubr.f32.gmra.mrb[0].mxu0 %v827
      %v902 = vpop.f32.mrb[0].mxu0
      %v903 = vadd.f32 %v686, %v902
      %v904 = vpop.f32.mrb[0].mxu0
      %905 = vmatprep.mubr.f32.mxu0 0.0
      %906 = vmatmul.mubr.f32.gmra.mrb[0].mxu0 %v829
      %v907 = vpop.f32.mrb[0].mxu0
      %v908 = vadd.f32 %v686, %v907
      %v909 = vpop.f32.mrb[0].mxu0
      %910 = vdwg.mxu0
      %v914 = vcombine.high %v898, %v898
      %v916 = vunpack.c.l.s4 1966171168
      %v917 = vunpack.c.0.s8 %v916
      %v918 = vlaneseq
      %v919 = vshrl.u32 %v918, 7
      %v920 = vsub.s32 %v917, %v919
      %v921 = vrot.slane %v898, %v920
      %v923 = vunpack.c.l.s4 1966171168
      %v924 = vunpack.c.0.s8 %v923
      %v925 = vlaneseq
      %v926 = vshrl.u32 %v925, 7
      %v927 = vsub.s32 %v924, %v926
      %v928 = vrot.slane %v914, %v927
      %v929 = vcombine.high %v921, %v921
      %v930 = vcombine.high %v928, %v928
      %v932 = vunpack.c.l.s4 1966171168
      %v933 = vunpack.c.0.s8 %v932
      %v934 = vlaneseq
      %v935 = vshrl.u32 %v934, 7
      %v936 = vsub.s32 %v933, %v935
      %v937 = vrot.slane %v921, %v936
      %v939 = vunpack.c.l.s4 1966171168
      %v940 = vunpack.c.0.s8 %v939
      %v941 = vlaneseq
      %v942 = vshrl.u32 %v941, 7
      %v943 = vsub.s32 %v940, %v942
      %v944 = vrot.slane %v928, %v943
      %v946 = vunpack.c.l.s4 1966171168
      %v947 = vunpack.c.0.s8 %v946
      %v948 = vlaneseq
      %v949 = vshrl.u32 %v948, 7
      %v950 = vsub.s32 %v947, %v949
      %v951 = vrot.slane %v929, %v950
      %v953 = vunpack.c.l.s4 1966171168
      %v954 = vunpack.c.0.s8 %v953
      %v955 = vlaneseq
      %v956 = vshrl.u32 %v955, 7
      %v957 = vsub.s32 %v954, %v956
      %v958 = vrot.slane %v930, %v957
      %v959 = vcombine.high %v937, %v937
      %v960 = vcombine.high %v944, %v944
      %v961 = vcombine.high %v951, %v951
      %v962 = vcombine.high %v958, %v958
      %v963 = vcombine.high %v903, %v903
      %v965 = vunpack.c.l.s4 1966171168
      %v966 = vunpack.c.0.s8 %v965
      %v967 = vlaneseq
      %v968 = vshrl.u32 %v967, 7
      %v969 = vsub.s32 %v966, %v968
      %v970 = vrot.slane %v903, %v969
      %v972 = vunpack.c.l.s4 1966171168
      %v973 = vunpack.c.0.s8 %v972
      %v974 = vlaneseq
      %v975 = vshrl.u32 %v974, 7
      %v976 = vsub.s32 %v973, %v975
      %v977 = vrot.slane %v963, %v976
      %v978 = vcombine.high %v970, %v970
      %v979 = vcombine.high %v977, %v977
      %v981 = vunpack.c.l.s4 1966171168
      %v982 = vunpack.c.0.s8 %v981
      %v983 = vlaneseq
      %v984 = vshrl.u32 %v983, 7
      %v985 = vsub.s32 %v982, %v984
      %v986 = vrot.slane %v970, %v985
      %v988 = vunpack.c.l.s4 1966171168
      %v989 = vunpack.c.0.s8 %v988
      %v990 = vlaneseq
      %v991 = vshrl.u32 %v990, 7
      %v992 = vsub.s32 %v989, %v991
      %v993 = vrot.slane %v977, %v992
      %v995 = vunpack.c.l.s4 1966171168
      %v996 = vunpack.c.0.s8 %v995
      %v997 = vlaneseq
      %v998 = vshrl.u32 %v997, 7
      %v999 = vsub.s32 %v996, %v998
      %v1000 = vrot.slane %v978, %v999
      %v1002 = vunpack.c.l.s4 1966171168
      %v1003 = vunpack.c.0.s8 %v1002
      %v1004 = vlaneseq
      %v1005 = vshrl.u32 %v1004, 7
      %v1006 = vsub.s32 %v1003, %v1005
      %v1007 = vrot.slane %v979, %v1006
      %v1008 = vcombine.high %v986, %v986
      %v1009 = vcombine.high %v993, %v993
      %v1010 = vcombine.high %v1000, %v1000
      %v1011 = vcombine.high %v1007, %v1007
      %v1012 = vcombine.high %v908, %v908
      %v1014 = vunpack.c.l.s4 1966171168
      %v1015 = vunpack.c.0.s8 %v1014
      %v1016 = vlaneseq
      %v1017 = vshrl.u32 %v1016, 7
      %v1018 = vsub.s32 %v1015, %v1017
      %v1019 = vrot.slane %v908, %v1018
      %v1021 = vunpack.c.l.s4 1966171168
      %v1022 = vunpack.c.0.s8 %v1021
      %v1023 = vlaneseq
      %v1024 = vshrl.u32 %v1023, 7
      %v1025 = vsub.s32 %v1022, %v1024
      %v1026 = vrot.slane %v1012, %v1025
      %v1027 = vcombine.high %v1019, %v1019
      %v1029 = vunpack.c.l.s4 1966171168
      %v1030 = vunpack.c.0.s8 %v1029
      %v1031 = vlaneseq
      %v1032 = vshrl.u32 %v1031, 7
      %v1033 = vsub.s32 %v1030, %v1032
      %v1034 = vrot.slane %v1019, %v1033
      %v1036 = vunpack.c.l.s4 1966171168
      %v1037 = vunpack.c.0.s8 %v1036
      %v1038 = vlaneseq
      %v1039 = vshrl.u32 %v1038, 7
      %v1040 = vsub.s32 %v1037, %v1039
      %v1041 = vrot.slane %v1026, %v1040
      %v1043 = vunpack.c.l.s4 1966171168
      %v1044 = vunpack.c.0.s8 %v1043
      %v1045 = vlaneseq
      %v1046 = vshrl.u32 %v1045, 7
      %v1047 = vsub.s32 %v1044, %v1046
      %v1048 = vrot.slane %v1027, %v1047
      %v1049 = vcombine.high %v1034, %v1034
      %v1050 = vcombine.high %v1048, %v1048
      %v1051 = vcombine.low %v937, %v951
      %v1052 = vcombine.low %v959, %v961
      %v1053 = vcombine.low %v944, %v958
      %v1055 = vunpack.c.l.s4 1966171168
      %v1056 = vunpack.c.0.s8 %v1055
      %v1057 = vlaneseq
      %v1058 = vshrl.u32 %v1057, 7
      %v1059 = vsub.s32 %v1056, %v1058
      %v1060 = vrot.slane %v1051, %v1059
      %v1062 = vunpack.c.l.s4 1966171168
      %v1063 = vunpack.c.0.s8 %v1062
      %v1064 = vlaneseq
      %v1065 = vshrl.u32 %v1064, 7
      %v1066 = vsub.s32 %v1063, %v1065
      %v1067 = vrot.slane %v1052, %v1066
      %v1069 = vunpack.c.l.s4 1966171168
      %v1070 = vunpack.c.0.s8 %v1069
      %v1071 = vlaneseq
      %v1072 = vshrl.u32 %v1071, 7
      %v1073 = vsub.s32 %v1070, %v1072
      %v1074 = vrot.slane %v1053, %v1073
      %v1076 = vunpack.c.l.s4 1966171168
      %v1077 = vunpack.c.0.s8 %v1076
      %v1078 = vlaneseq
      %v1079 = vshrl.u32 %v1078, 7
      %v1080 = vsub.s32 %v1077, %v1079
      %v1081 = vrot.slane %v960, %v1080
      %v1082 = vcombine.low %v1060, %v1067
      %v1083 = vcombine.low %v1074, %v1081
      %v1085 = vunpack.c.l.s4 1966171168
      %v1086 = vunpack.c.0.s8 %v1085
      %v1087 = vlaneseq
      %v1088 = vshrl.u32 %v1087, 7
      %v1089 = vsub.s32 %v1086, %v1088
      %v1090 = vrot.slane %v1082, %v1089
      %v1092 = vunpack.c.l.s4 1966171168
      %v1093 = vunpack.c.0.s8 %v1092
      %v1094 = vlaneseq
      %v1095 = vshrl.u32 %v1094, 7
      %v1096 = vsub.s32 %v1093, %v1095
      %v1097 = vrot.slane %v1083, %v1096
      %v1098 = vcombine.low %v1090, %v1097
      %v1099 = vcombine.low %v962, %v986
      %v1100 = vcombine.low %v1000, %v1008
      %v1101 = vcombine.low %v1010, %v993
      %v1103 = vunpack.c.l.s4 1966171168
      %v1104 = vunpack.c.0.s8 %v1103
      %v1105 = vlaneseq
      %v1106 = vshrl.u32 %v1105, 7
      %v1107 = vsub.s32 %v1104, %v1106
      %v1108 = vrot.slane %v1099, %v1107
      %v1110 = vunpack.c.l.s4 1966171168
      %v1111 = vunpack.c.0.s8 %v1110
      %v1112 = vlaneseq
      %v1113 = vshrl.u32 %v1112, 7
      %v1114 = vsub.s32 %v1111, %v1113
      %v1115 = vrot.slane %v1100, %v1114
      %v1117 = vunpack.c.l.s4 1966171168
      %v1118 = vunpack.c.0.s8 %v1117
      %v1119 = vlaneseq
      %v1120 = vshrl.u32 %v1119, 7
      %v1121 = vsub.s32 %v1118, %v1120
      %v1122 = vrot.slane %v1101, %v1121
      %v1124 = vunpack.c.l.s4 1966171168
      %v1125 = vunpack.c.0.s8 %v1124
      %v1126 = vlaneseq
      %v1127 = vshrl.u32 %v1126, 7
      %v1128 = vsub.s32 %v1125, %v1127
      %v1129 = vrot.slane %v1007, %v1128
      %v1130 = vcombine.low %v1108, %v1115
      %v1131 = vcombine.low %v1122, %v1129
      %v1133 = vunpack.c.l.s4 1966171168
      %v1134 = vunpack.c.0.s8 %v1133
      %v1135 = vlaneseq
      %v1136 = vshrl.u32 %v1135, 7
      %v1137 = vsub.s32 %v1134, %v1136
      %v1138 = vrot.slane %v1130, %v1137
      %v1140 = vunpack.c.l.s4 1966171168
      %v1141 = vunpack.c.0.s8 %v1140
      %v1142 = vlaneseq
      %v1143 = vshrl.u32 %v1142, 7
      %v1144 = vsub.s32 %v1141, %v1143
      %v1145 = vrot.slane %v1131, %v1144
      %v1146 = vcombine.low %v1138, %v1145
      %v1147 = vcombine.low %v1009, %v1011
      %v1148 = vcombine.low %v1034, %v1048
      %v1149 = vcombine.low %v1049, %v1050
      %v1151 = vunpack.c.l.s4 1966171168
      %v1152 = vunpack.c.0.s8 %v1151
      %v1153 = vlaneseq
      %v1154 = vshrl.u32 %v1153, 7
      %v1155 = vsub.s32 %v1152, %v1154
      %v1156 = vrot.slane %v1147, %v1155
      %v1158 = vunpack.c.l.s4 1966171168
      %v1159 = vunpack.c.0.s8 %v1158
      %v1160 = vlaneseq
      %v1161 = vshrl.u32 %v1160, 7
      %v1162 = vsub.s32 %v1159, %v1161
      %v1163 = vrot.slane %v1148, %v1162
      %v1165 = vunpack.c.l.s4 1966171168
      %v1166 = vunpack.c.0.s8 %v1165
      %v1167 = vlaneseq
      %v1168 = vshrl.u32 %v1167, 7
      %v1169 = vsub.s32 %v1166, %v1168
      %v1170 = vrot.slane %v1149, %v1169
      %v1172 = vunpack.c.l.s4 1966171168
      %v1173 = vunpack.c.0.s8 %v1172
      %v1174 = vlaneseq
      %v1175 = vshrl.u32 %v1174, 7
      %v1176 = vsub.s32 %v1173, %v1175
      %v1177 = vrot.slane %v1041, %v1176
      %v1178 = vcombine.low %v1156, %v1163
      %v1179 = vcombine.low %v1170, %v1177
      %v1181 = vunpack.c.l.s4 1966171168
      %v1182 = vunpack.c.0.s8 %v1181
      %v1183 = vlaneseq
      %v1184 = vshrl.u32 %v1183, 7
      %v1185 = vsub.s32 %v1182, %v1184
      %v1186 = vrot.slane %v1178, %v1185
      %v1188 = vunpack.c.l.s4 1966171168
      %v1189 = vunpack.c.0.s8 %v1188
      %v1190 = vlaneseq
      %v1191 = vshrl.u32 %v1190, 7
      %v1192 = vsub.s32 %v1189, %v1191
      %v1193 = vrot.slane %v1179, %v1192
      %v1194 = vcombine.low %v1186, %v1193
      %vm1198 = vcmask 88064
      %1199 = vst.msk [vmem:[%s319] sm:$0x7f] %vm1198, %v1098
      %1200 = vst.msk [vmem:[%s319 + $0x8] sm:$0x7f] %vm1198, %v1146
      %1201 = vst.msk [vmem:[%s319 + $0x10] sm:$0x7f] %vm1198, %v1194
      %p1202 = scmp.lt.s32.totalorder %s19, 1
      %s1203 = scalar_select %p1202, %s19, 1
      %s1204 = smul.addr %s1203, 3
      %s1205 = smul.addr %s1204, 8
      %s1206 = scalar_lea.vmem %s8, %s1205
      // Predicated region
      $region53: #{model_forward.26} parent=51 // pred_check
        %p1207 = pneg %p215
      $region54: #{model_forward.26} parent=51 // pred_check_branch
        %1209 = sbr.rel (%p1207) target = $region56
      $region55: #{model_forward.26} parent=51 // pred_region
        _
      $region56: #{model_forward.26} parent=51 // pred_fallthru
        _
    $region52: #{model_forward.26} parent=5 // pred_fallthru
      _
    %p1210 = scmp.le.s32.totalorder 2, %s14
    // Predicated region
    $region57: #{model_forward.26} parent=5 // pred_check
      %p1211 = pneg %p1210
    $region58: #{model_forward.26} parent=5 // pred_check_branch
      %1213 = sbr.rel (%p1211) target = $region60
    $region59: #{model_forward.26} parent=5 // pred_region
      %s1214 = ssub.s32 %s14, 2
      // Predicated region
      $region61: #{model_forward.26} parent=59 // pred_check
        %p1215 = pneg %p221
      $region62: #{model_forward.26} parent=59 // pred_check_branch
        %1217 = sbr.rel (%p1215) target = $region64
      $region63: #{model_forward.26} parent=59 // pred_region
        %p1218 = scmp.lt.s32.totalorder %s20, 1
        %s1219 = scalar_select %p1218, %s20, 1
        %s1220 = smul.addr %s1219, 3
        %s1221 = smul.addr %s1220, 8
        %s1222 = scalar_lea.vmem %s8, %s1221
      $region64: #{model_forward.26} parent=59 // pred_fallthru
        _
    $region60: #{model_forward.26} parent=5 // pred_fallthru
      _
  $region6: #{model_forward.26} parent=0 // loop_footer
    %s18 = sadd.s32 1, %s14
  $region7: #{model_forward.26} parent=0 // loop_footer_branch
    %13 = sbr.rel target = $region3
  $region8: #{model_forward.26} parent=0 // loop_exit
    _

</llo_original>
